<compile_context>
chip_gen: v5e
topology: v5e:2x2
jax: 0.10.0
libtpu: 0.0.40
codegen_flags: <defaults>
</compile_context>

<pallas_src>
import jax
import jax.numpy as jnp
from jax.experimental import pallas as pl
from jax.experimental.pallas import tpu as pltpu

# ----------------------------- sizes -----------------------------------------
B = 2                         # query batch
B_REF = 2                     # reference images
GRID = 4                      # heatmap grid side (module: 16)
KER = 2                       # sliding-window kernel (module: 2)
P = (GRID - KER + 1) ** 2     # patch tokens / windows per image (module: 225)
D_PATCH = 32                  # width of the hooked resblock outputs
D_EMB = 32                    # CLIP image-embedding dim (module: 640)
RED = 4                       # adapter reduction
L = 3                         # number of hooked resblocks
H_IMG = W_IMG = (GRID - 1) * 2  # 6x6 image, patch size 2 -> 3x3 = 9 tokens
R = B_REF * P                 # reference patch pool size
H1, H2 = 128, 64              # TransformerBasicHead hidden dims (as in module)
BN_EPS = 1e-5
EPS = 1e-12                   # F.normalize-style zero guard

# ------------------------ lane-dense padding ---------------------------------
LANE = 128


def _ceil_to(x, m):
    return (x + m - 1) // m * m


P_PAD = _ceil_to(P, LANE)          # padded patch count (query + hmap lane width)
R_PAD = _ceil_to(R, LANE)          # padded reference pool (sim matmul N)
D_PAD = _ceil_to(D_EMB, LANE)      # padded image-embedding width

# The single 128-lane parameter slab assumes every padded feature width == LANE.
# (Holds for these toy sizes; at the real D_EMB=640 the slab would use a wider lane
#  layout or multiple row-blocks.)
assert D_PAD == LANE and H1 == LANE and P_PAD == LANE and H2 <= LANE

# slab row layout: (name, rows); every piece is zero-padded to LANE columns.
_SLAB_LAYOUT = (
    ("TDIFF", 1),        # t_neg - t_pos
    ("IREF", 1),         # adapted reference image embedding (mean)
    ("AW1", D_PAD),      # adapter linear 1 (no bias)
    ("AW2", LANE),       # adapter linear 2 (no bias)
    ("RW1", D_PAD), ("RB1", 1),      # diff_head_ref, BN folded
    ("RW2", H1), ("RB2", 1),
    ("RW3", LANE), ("RB3", 1),
    ("HW1", P_PAD), ("HB1", 1),      # diff_head (holistic map), BN folded
    ("HW2", H1), ("HB2", 1),
    ("HW3", LANE), ("HB3", 1),
)
OFF = {}
_r = 0
for _name, _n in _SLAB_LAYOUT:
    OFF[_name] = _r
    _r += _n
N_SLAB_ROWS = _r
SLAB_ROWS = _ceil_to(N_SLAB_ROWS, 8)


# =============================================================================
# Fused InCTRL kernel (single grid step)
#   * unrolled per-layer accumulation of the patch similarity map (in vregs)
#   * text score, adapter, BN-folded heads, score fusion in the same launch
# =============================================================================
def _head_folded(x, w1, b1, w2, b2, w3, b3):
    """TransformerBasicHead (eval) with BN folded into the linears.

    All operands are LANE wide (zero padded); padded rows/cols contribute 0, and
    the real scalar output sits in column 0.
    """
    h = jnp.maximum(jnp.dot(x, w1, preferred_element_type=jnp.float32) + b1, 0.0)
    h = jnp.maximum(jnp.dot(h, w2, preferred_element_type=jnp.float32) + b2, 0.0)
    out = jnp.dot(h, w3, preferred_element_type=jnp.float32) + b3
    return jax.nn.sigmoid(out)[:, :1]                              # (B, 1)


def _inctrl_kernel(pq_ref, pr_ref, img_ref, slab_ref, final_ref, hmap_ref):
    nl = pq_ref.shape[0]
    b, ppad = hmap_ref.shape

    # ---- patch similarity map, accumulated over the L hooked layers (unrolled) ----
    prm = jnp.zeros((b, ppad), jnp.float32)
    for l in range(nl):                                # static unroll, L is tiny
        pe = pq_ref[l]                                 # (B*P_PAD, Dp), zero-padded rows
        pe = pe * jax.lax.rsqrt(jnp.sum(pe * pe, axis=-1, keepdims=True) + EPS)
        sim = jax.lax.dot_general(                     # (B*P_PAD, R_PAD)
            pe, pr_ref[l],
            dimension_numbers=(((1,), (1,)), ((), ())),
            preferred_element_type=jnp.float32)
        # mean_L min_R (1 - sim)/2  ==  sum_L (1 - max_R sim) * (0.5 / L)
        part = (1.0 - jnp.max(sim, axis=-1)) * (0.5 / nl)          # (B*P_PAD,)
        prm = prm + part.reshape(b, ppad)

    # ---- rest of the InCTRL forward, fused in the same launch ----
    x = img_ref[...]                                   # (B, D_PAD), zero-padded cols
    nx = x * jax.lax.rsqrt(jnp.sum(x * x, axis=-1, keepdims=True) + EPS)

    # softmax(100 * nx @ T.T)[:, 1]  ==  sigmoid(100 * nx @ (t_neg - t_pos))
    tdiff = slab_ref[pl.ds(OFF["TDIFF"], 1), :]                    # (1, LANE)
    text_score = jax.nn.sigmoid(
        100.0 * jnp.sum(nx * tdiff, axis=-1, keepdims=True))       # (B, 1)

    # adapter (2x linear-no-bias + relu) and reference-diff head
    aw1 = slab_ref[pl.ds(OFF["AW1"], D_PAD), :]
    aw2 = slab_ref[pl.ds(OFF["AW2"], LANE), :]
    a = jnp.maximum(jnp.dot(x, aw1, preferred_element_type=jnp.float32), 0.0)
    a = jnp.maximum(jnp.dot(a, aw2, preferred_element_type=jnp.float32), 0.0)
    diff = slab_ref[pl.ds(OFF["IREF"], 1), :] - a                  # (B, D_PAD)
    img_ref_score = _head_folded(
        diff,
        slab_ref[pl.ds(OFF["RW1"], D_PAD), :],
        slab_ref[pl.ds(OFF["RB1"], 1), :],
        slab_ref[pl.ds(OFF["RW2"], H1), :],
        slab_ref[pl.ds(OFF["RB2"], 1), :],
        slab_ref[pl.ds(OFF["RW3"], LANE), :],
        slab_ref[pl.ds(OFF["RB3"], 1), :])                         # (B, 1)

    # holistic map, hl score, fg score, fusion
    hmap = (text_score + img_ref_score) + prm                      # (B, P_PAD)
    hmap_ref[...] = hmap
    hl_score = _head_folded(
        hmap,
        slab_ref[pl.ds(OFF["HW1"], P_PAD), :],
        slab_ref[pl.ds(OFF["HB1"], 1), :],
        slab_ref[pl.ds(OFF["HW2"], H1), :],
        slab_ref[pl.ds(OFF["HB2"], 1), :],
        slab_ref[pl.ds(OFF["HW3"], LANE), :],
        slab_ref[pl.ds(OFF["HB3"], 1), :])                         # (B, 1)

    col = jax.lax.broadcasted_iota(jnp.int32, prm.shape, 1)
    fg_score = jnp.max(jnp.where(col < P, prm, -1e30),
                       axis=-1, keepdims=True)                     # (B, 1)
    final = (hl_score + fg_score) * 0.5                            # (B, 1)
    # lane-dense (unmasked) store; wrapper reads column 0
    final_ref[...] = jnp.broadcast_to(final, final_ref.shape)


def inctrl_core_pallas(patch_q, patch_ref, image_embeds_pad, slab):
    """patch_q: (L, B*P_PAD, Dp), patch_ref: (L, R_PAD, Dp) L2-normed,
    image_embeds_pad: (B, D_PAD), slab: (SLAB_ROWS, LANE)."""
    lh, bp, dp = patch_q.shape
    _, rp, _ = patch_ref.shape
    b, dpad = image_embeds_pad.shape
    return pl.pallas_call(
        _inctrl_kernel,
        out_shape=(jax.ShapeDtypeStruct((b, LANE), jnp.float32),    # final, lane-bcast
                   jax.ShapeDtypeStruct((b, P_PAD), jnp.float32)),  # padded holistic map
        grid=(1,),
        in_specs=[
            pl.BlockSpec((lh, bp, dp), lambda i: (0, 0, 0)),   # all-layer query patches
            pl.BlockSpec((lh, rp, dp), lambda i: (0, 0, 0)),   # all-layer ref pool
            pl.BlockSpec((b, dpad), lambda i: (0, 0)),         # image embeds
            pl.BlockSpec((SLAB_ROWS, LANE), lambda i: (0, 0)),  # packed params
        ],
        out_specs=(pl.BlockSpec((b, LANE), lambda i: (0, 0)),
                   pl.BlockSpec((b, P_PAD), lambda i: (0, 0))),
        compiler_params=pltpu.CompilerParams(
            dimension_semantics=("arbitrary",)),
    )(patch_q, patch_ref, image_embeds_pad, slab)


# =============================================================================
# Plain-JAX glue: CLIP stub, BN folding, slab packing, harmonic aggregation,
# bilinear upsampling, setup.
# =============================================================================
def stub_encode_image(image, patch_proj, layer_projs, embed_proj):
    """Deterministic stand-in for clip.visual + the 3 resblock hooks."""
    # TODO(synk): the pretrained CLIP ViT backbone has no clean Pallas equivalent
    # here; it is replaced by a deterministic patch-embedding stub.
    b, c, h, w = image.shape
    ph = pw = 2
    gh, gw = h // ph, w // pw
    patches = image.reshape(b, c, gh, ph, gw, pw)
    patches = patches.transpose(0, 2, 4, 1, 3, 5).reshape(b, gh * gw, c * ph * pw)
    tokens = jnp.tanh(patches @ patch_proj)                        # (B, P, D_PATCH)
    patch_embeds = jnp.stack([tokens @ lp for lp in layer_projs])  # (L, B, P, Dp)
    image_embeds = jnp.mean(tokens, axis=1) @ embed_proj           # (B, D_EMB)
    return image_embeds, patch_embeds


def _fold_bn_into_linear(bn, w, b):
    """Eval-mode BatchNorm1d applied BEFORE linear(w, b), folded into (w, b)."""
    s = bn[0] / jnp.sqrt(bn[3] + BN_EPS)          # gamma / sqrt(var + eps)
    t = bn[1] - bn[2] * s                          # beta - mean * s
    return s[:, None] * w, t @ w + b


def _fold_head(head_params):
    w1, b1, bn2, w2, b2, bn3, w3, b3 = head_params
    w2f, b2f = _fold_bn_into_linear(bn2, w2, b2)
    w3f, b3f = _fold_bn_into_linear(bn3, w3, b3)
    return w1, b1, w2f, b2f, w3f, b3f


def pack_param_slab(params, text_embeds, image_embeds_ref):
    """Pack every small weight/bias into one (SLAB_ROWS, LANE) f32 slab."""
    rw1, rb1, rw2, rb2, rw3, rb3 = _fold_head(params["head_ref"])
    hw1, hb1, hw2, hb2, hw3, hb3 = _fold_head(params["head"])
    pieces = {
        "TDIFF": (text_embeds[1] - text_embeds[0])[None, :],
        "IREF": image_embeds_ref,
        "AW1": params["adapter_w1"], "AW2": params["adapter_w2"],
        "RW1": rw1, "RB1": rb1, "RW2": rw2, "RB2": rb2, "RW3": rw3, "RB3": rb3,
        "HW1": hw1, "HB1": hb1, "HW2": hw2, "HB2": hb2, "HW3": hw3, "HB3": hb3,
    }
    blocks = []
    for name, nrows in _SLAB_LAYOUT:
        a = jnp.asarray(pieces[name], jnp.float32)
        blocks.append(jnp.pad(a, ((0, nrows - a.shape[0]), (0, LANE - a.shape[1]))))
    slab = jnp.concatenate(blocks, axis=0)
    return jnp.pad(slab, ((0, SLAB_ROWS - slab.shape[0]), (0, 0)))


def harmonic_aggregation(window_scores, grid_size):
    """WinCLIP-style harmonic aggregation of 2x2 sliding-window scores."""
    b = window_scores.shape[0]
    gh, gw = grid_size
    wh, ww = gh - KER + 1, gw - KER + 1
    inv = 1.0 / window_scores.reshape(b, wh, ww)
    sum_inv = jnp.zeros((b, gh, gw), jnp.float32)
    count = jnp.zeros((gh, gw), jnp.float32)
    for di in range(KER):
        for dj in range(KER):
            sum_inv = sum_inv.at[:, di:di + wh, dj:dj + ww].add(inv)
            count = count.at[di:di + wh, dj:dj + ww].add(1.0)
    heat = count[None, :, :] / sum_inv
    return jnp.nan_to_num(heat, nan=0.0, posinf=0.0)


def init_head_params(key, dim_in):
    ks = jax.random.split(key, 14)

    def n(k, shape, s=0.05):
        return s * jax.random.normal(k, shape, jnp.float32)

    bn = lambda k1, k2, k3, k4, c: jnp.stack([
        1.0 + 0.1 * jax.random.normal(k1, (c,), jnp.float32),            # gamma
        0.1 * jax.random.normal(k2, (c,), jnp.float32),                  # beta
        0.1 * jax.random.normal(k3, (c,), jnp.float32),                  # running mean
        1.0 + 0.1 * jnp.abs(jax.random.normal(k4, (c,), jnp.float32)),   # running var
    ])
    return (n(ks[0], (dim_in, H1)), n(ks[1], (1, H1)),
            bn(ks[2], ks[3], ks[4], ks[5], H1),
            n(ks[6], (H1, H2)), n(ks[7], (1, H2)),
            bn(ks[8], ks[9], ks[10], ks[11], H2),
            n(ks[12], (H2, 1)), n(ks[13], (1, 1)))


def init_params(key):
    ks = jax.random.split(key, 8)
    params = {
        "patch_proj": 0.2 * jax.random.normal(ks[0], (3 * 2 * 2, D_PATCH), jnp.float32),
        "layer_projs": [0.2 * jax.random.normal(k, (D_PATCH, D_PATCH), jnp.float32)
                        for k in jax.random.split(ks[1], L)],
        "embed_proj": 0.2 * jax.random.normal(ks[2], (D_PATCH, D_EMB), jnp.float32),
        "adapter_w1": 0.1 * jax.random.normal(ks[3], (D_EMB, D_EMB // RED), jnp.float32),
        "adapter_w2": 0.1 * jax.random.normal(ks[4], (D_EMB // RED, D_EMB), jnp.float32),
        "head_ref": init_head_params(ks[5], D_EMB),   # diff_head_ref
        "head": init_head_params(ks[6], P),           # diff_head
    }
    return params, ks[7]


def setup_state(params, ref_images, key):
    # setup_prompts: deterministic unit text embeddings (pos / neg)
    t = jax.random.normal(key, (2, D_EMB), jnp.float32)
    text_embeds = t / jnp.linalg.norm(t, axis=-1, keepdims=True)
    # setup_images
    image_embeds, patch_embeds = stub_encode_image(
        ref_images, params["patch_proj"], params["layer_projs"], params["embed_proj"])
    pe = patch_embeds.reshape(L, B_REF * P, D_PATCH)              # flatten(1, 2)
    pe = pe / jnp.linalg.norm(pe, axis=-1, keepdims=True)
    if R_PAD > R:   # pad the ref pool with copies of row 0 (duplicates don't change max)
        pe = jnp.concatenate(
            [pe, jnp.broadcast_to(pe[:, :1, :], (L, R_PAD - R, D_PATCH))], axis=1)
    a = jnp.maximum(image_embeds @ params["adapter_w1"], 0.0)
    a = jnp.maximum(a @ params["adapter_w2"], 0.0)
    image_embeds_ref = jnp.mean(a, axis=0, keepdims=True)         # (1, D_EMB)
    slab = pack_param_slab(params, text_embeds, image_embeds_ref)
    return {"patch_embeds_ref": pe, "param_slab": slab}


@jax.jit
def inctrl_forward(image, params, state):
    image_embeds, patch_embeds = stub_encode_image(
        image, params["patch_proj"], params["layer_projs"], params["embed_proj"])
    b = image.shape[0]
    # layout plumbing in the wrapper: pad P -> P_PAD, flatten (L, B*P_PAD, Dp),
    # pad the embedding width to D_PAD (all zero-padded; zeros are inert in-kernel).
    pq = jnp.pad(patch_embeds, ((0, 0), (0, 0), (0, P_PAD - P), (0, 0)))
    pq = pq.reshape(L, b * P_PAD, D_PATCH)
    x_pad = jnp.pad(image_embeds, ((0, 0), (0, D_PAD - D_EMB)))

    final, hmap_pad = inctrl_core_pallas(
        pq, state["patch_embeds_ref"], x_pad, state["param_slab"])

    hmap = hmap_pad[:, :P]                                        # holistic_map (B, P)
    heat = harmonic_aggregation(hmap, (GRID, GRID))               # (B, GRID, GRID)
    # F.interpolate(..., mode='bilinear', align_corners=False) equivalent
    holistic_map = jax.image.resize(
        heat, (heat.shape[0], image.shape[2], image.shape[3]), method="bilinear")
    return final[:, 0], holistic_map


if __name__ == "__main__":
    root = jax.random.PRNGKey(0)
    k_param, k_rest = jax.random.split(root)
    params, k_setup = init_params(k_param)

    k_ref, k_img, k_txt = jax.random.split(k_rest, 3)
    reference_images = jax.random.normal(k_ref, (B_REF, 3, H_IMG, W_IMG), jnp.float32)
    image = jax.random.normal(k_img, (B, 3, H_IMG, W_IMG), jnp.float32)

    state = setup_state(params, reference_images, k_txt)

    final_score, holistic_map = inctrl_forward(image, params, state)
    jax.block_until_ready((final_score, holistic_map))

    assert final_score.shape == (B,)
    assert holistic_map.shape == (B, H_IMG, W_IMG)
    assert bool(jnp.all(jnp.isfinite(final_score)))
    assert bool(jnp.all(jnp.isfinite(holistic_map)))
    print("KERNEL_OK")
</pallas_src>

<mosaic_0001>
module attributes {stable_mosaic.version = 11 : i64} {
  func.func @_inctrl_kernel(%arg0: i32, %arg1: memref<3x256x32xf32, #tpu.memory_space<vmem>>, %arg2: memref<3x128x32xf32, #tpu.memory_space<vmem>>, %arg3: memref<2x128xf32, #tpu.memory_space<vmem>>, %arg4: memref<1032x128xf32, #tpu.memory_space<vmem>>, %arg5: memref<2x128xf32, #tpu.memory_space<vmem>>, %arg6: memref<2x128xf32, #tpu.memory_space<vmem>>) attributes {dimension_semantics = [#tpu.dimension_semantics<arbitrary>], iteration_bounds = array<i64: 1>, scalar_prefetch = 0 : i64, scratch_operands = 0 : i64, tpu.core_type = #tpu.core_type<tc>, window_params = [{pipeline_mode = #tpu.pipeline_mode<synchronous>, transform_indices = @transform_0, window_bounds = array<i64: 3, 256, 32>}, {pipeline_mode = #tpu.pipeline_mode<synchronous>, transform_indices = @transform_1, window_bounds = array<i64: 3, 128, 32>}, {pipeline_mode = #tpu.pipeline_mode<synchronous>, transform_indices = @transform_2, window_bounds = array<i64: 2, 128>}, {pipeline_mode = #tpu.pipeline_mode<synchronous>, transform_indices = @transform_3, window_bounds = array<i64: 1032, 128>}, {pipeline_mode = #tpu.pipeline_mode<synchronous>, transform_indices = @transform_4, window_bounds = array<i64: 2, 128>}, {pipeline_mode = #tpu.pipeline_mode<synchronous>, transform_indices = @transform_5, window_bounds = array<i64: 2, 128>}]} {
    %cst = arith.constant 0.000000e+00 : f32
    %0 = vector.broadcast %cst : f32 to vector<2x128xf32>
    %c0 = arith.constant 0 : index
    %c0_0 = arith.constant 0 : index
    %c0_1 = arith.constant 0 : index
    %1 = vector.load %arg1[%c0, %c0_0, %c0_1] : memref<3x256x32xf32, #tpu.memory_space<vmem>>, vector<1x256x32xf32>
    %2 = vector.shape_cast %1 : vector<1x256x32xf32> to vector<256x32xf32>
    %3 = arith.mulf %2, %2 : vector<256x32xf32>
    %cst_2 = arith.constant dense<0.000000e+00> : vector<256xf32>
    %4 = vector.multi_reduction <add>, %3, %cst_2 [1] : vector<256x32xf32> to vector<256xf32>
    %5 = vector.shape_cast %4 : vector<256xf32> to vector<256x1xf32>
    %cst_3 = arith.constant 9.99999996E-13 : f32
    %6 = vector.broadcast %cst_3 : f32 to vector<256x1xf32>
    %7 = arith.addf %5, %6 : vector<256x1xf32>
    %8 = math.rsqrt %7 : vector<256x1xf32>
    %9 = vector.broadcast %8 : vector<256x1xf32> to vector<256x32xf32>
    %10 = arith.mulf %2, %9 : vector<256x32xf32>
    %c0_4 = arith.constant 0 : index
    %c0_5 = arith.constant 0 : index
    %c0_6 = arith.constant 0 : index
    %11 = vector.load %arg2[%c0_4, %c0_5, %c0_6] : memref<3x128x32xf32, #tpu.memory_space<vmem>>, vector<1x128x32xf32>
    %12 = vector.shape_cast %11 : vector<1x128x32xf32> to vector<128x32xf32>
    %cst_7 = arith.constant dense<0.000000e+00> : vector<256x128xf32>
    %13 = tpu.matmul %10, %12, %cst_7 {dimension_numbers = #tpu.dot_dimension_numbers<[1], [1], [0], [0], [0, 0, 1, 0], [], []>} : vector<256x32xf32>, vector<128x32xf32>, vector<256x128xf32> -> vector<256x128xf32>
    %cst_8 = arith.constant dense<0xFF800000> : vector<256xf32>
    %14 = vector.multi_reduction <maximumf>, %13, %cst_8 [1] : vector<256x128xf32> to vector<256xf32>
    %cst_9 = arith.constant 1.000000e+00 : f32
    %15 = vector.broadcast %cst_9 : f32 to vector<256xf32>
    %16 = arith.subf %15, %14 : vector<256xf32>
    %cst_10 = arith.constant 0.166666672 : f32
    %17 = vector.broadcast %cst_10 : f32 to vector<256xf32>
    %18 = arith.mulf %16, %17 : vector<256xf32>
    %19 = vector.shape_cast %18 : vector<256xf32> to vector<2x128xf32>
    %20 = arith.addf %0, %19 : vector<2x128xf32>
    %c1 = arith.constant 1 : index
    %c0_11 = arith.constant 0 : index
    %c0_12 = arith.constant 0 : index
    %21 = vector.load %arg1[%c1, %c0_11, %c0_12] : memref<3x256x32xf32, #tpu.memory_space<vmem>>, vector<1x256x32xf32>
    %22 = vector.shape_cast %21 : vector<1x256x32xf32> to vector<256x32xf32>
    %23 = arith.mulf %22, %22 : vector<256x32xf32>
    %cst_13 = arith.constant dense<0.000000e+00> : vector<256xf32>
    %24 = vector.multi_reduction <add>, %23, %cst_13 [1] : vector<256x32xf32> to vector<256xf32>
    %25 = vector.shape_cast %24 : vector<256xf32> to vector<256x1xf32>
    %cst_14 = arith.constant 9.99999996E-13 : f32
    %26 = vector.broadcast %cst_14 : f32 to vector<256x1xf32>
    %27 = arith.addf %25, %26 : vector<256x1xf32>
    %28 = math.rsqrt %27 : vector<256x1xf32>
    %29 = vector.broadcast %28 : vector<256x1xf32> to vector<256x32xf32>
    %30 = arith.mulf %22, %29 : vector<256x32xf32>
    %c1_15 = arith.constant 1 : index
    %c0_16 = arith.constant 0 : index
    %c0_17 = arith.constant 0 : index
    %31 = vector.load %arg2[%c1_15, %c0_16, %c0_17] : memref<3x128x32xf32, #tpu.memory_space<vmem>>, vector<1x128x32xf32>
    %32 = vector.shape_cast %31 : vector<1x128x32xf32> to vector<128x32xf32>
    %cst_18 = arith.constant dense<0.000000e+00> : vector<256x128xf32>
    %33 = tpu.matmul %30, %32, %cst_18 {dimension_numbers = #tpu.dot_dimension_numbers<[1], [1], [0], [0], [0, 0, 1, 0], [], []>} : vector<256x32xf32>, vector<128x32xf32>, vector<256x128xf32> -> vector<256x128xf32>
    %cst_19 = arith.constant dense<0xFF800000> : vector<256xf32>
    %34 = vector.multi_reduction <maximumf>, %33, %cst_19 [1] : vector<256x128xf32> to vector<256xf32>
    %cst_20 = arith.constant 1.000000e+00 : f32
    %35 = vector.broadcast %cst_20 : f32 to vector<256xf32>
    %36 = arith.subf %35, %34 : vector<256xf32>
    %cst_21 = arith.constant 0.166666672 : f32
    %37 = vector.broadcast %cst_21 : f32 to vector<256xf32>
    %38 = arith.mulf %36, %37 : vector<256xf32>
    %39 = vector.shape_cast %38 : vector<256xf32> to vector<2x128xf32>
    %40 = arith.addf %20, %39 : vector<2x128xf32>
    %c2 = arith.constant 2 : index
    %c0_22 = arith.constant 0 : index
    %c0_23 = arith.constant 0 : index
    %41 = vector.load %arg1[%c2, %c0_22, %c0_23] : memref<3x256x32xf32, #tpu.memory_space<vmem>>, vector<1x256x32xf32>
    %42 = vector.shape_cast %41 : vector<1x256x32xf32> to vector<256x32xf32>
    %43 = arith.mulf %42, %42 : vector<256x32xf32>
    %cst_24 = arith.constant dense<0.000000e+00> : vector<256xf32>
    %44 = vector.multi_reduction <add>, %43, %cst_24 [1] : vector<256x32xf32> to vector<256xf32>
    %45 = vector.shape_cast %44 : vector<256xf32> to vector<256x1xf32>
    %cst_25 = arith.constant 9.99999996E-13 : f32
    %46 = vector.broadcast %cst_25 : f32 to vector<256x1xf32>
    %47 = arith.addf %45, %46 : vector<256x1xf32>
    %48 = math.rsqrt %47 : vector<256x1xf32>
    %49 = vector.broadcast %48 : vector<256x1xf32> to vector<256x32xf32>
    %50 = arith.mulf %42, %49 : vector<256x32xf32>
    %c2_26 = arith.constant 2 : index
    %c0_27 = arith.constant 0 : index
    %c0_28 = arith.constant 0 : index
    %51 = vector.load %arg2[%c2_26, %c0_27, %c0_28] : memref<3x128x32xf32, #tpu.memory_space<vmem>>, vector<1x128x32xf32>
    %52 = vector.shape_cast %51 : vector<1x128x32xf32> to vector<128x32xf32>
    %cst_29 = arith.constant dense<0.000000e+00> : vector<256x128xf32>
    %53 = tpu.matmul %50, %52, %cst_29 {dimension_numbers = #tpu.dot_dimension_numbers<[1], [1], [0], [0], [0, 0, 1, 0], [], []>} : vector<256x32xf32>, vector<128x32xf32>, vector<256x128xf32> -> vector<256x128xf32>
    %cst_30 = arith.constant dense<0xFF800000> : vector<256xf32>
    %54 = vector.multi_reduction <maximumf>, %53, %cst_30 [1] : vector<256x128xf32> to vector<256xf32>
    %cst_31 = arith.constant 1.000000e+00 : f32
    %55 = vector.broadcast %cst_31 : f32 to vector<256xf32>
    %56 = arith.subf %55, %54 : vector<256xf32>
    %cst_32 = arith.constant 0.166666672 : f32
    %57 = vector.broadcast %cst_32 : f32 to vector<256xf32>
    %58 = arith.mulf %56, %57 : vector<256xf32>
    %59 = vector.shape_cast %58 : vector<256xf32> to vector<2x128xf32>
    %60 = arith.addf %40, %59 : vector<2x128xf32>
    %c0_33 = arith.constant 0 : index
    %c0_34 = arith.constant 0 : index
    %61 = vector.load %arg3[%c0_33, %c0_34] : memref<2x128xf32, #tpu.memory_space<vmem>>, vector<2x128xf32>
    %62 = arith.mulf %61, %61 : vector<2x128xf32>
    %cst_35 = arith.constant dense<0.000000e+00> : vector<2xf32>
    %63 = vector.multi_reduction <add>, %62, %cst_35 [1] : vector<2x128xf32> to vector<2xf32>
    %64 = vector.shape_cast %63 : vector<2xf32> to vector<2x1xf32>
    %cst_36 = arith.constant 9.99999996E-13 : f32
    %65 = vector.broadcast %cst_36 : f32 to vector<2x1xf32>
    %66 = arith.addf %64, %65 : vector<2x1xf32>
    %67 = math.rsqrt %66 : vector<2x1xf32>
    %68 = vector.broadcast %67 : vector<2x1xf32> to vector<2x128xf32>
    %69 = arith.mulf %61, %68 : vector<2x128xf32>
    %c0_37 = arith.constant 0 : index
    %c0_38 = arith.constant 0 : index
    %70 = vector.load %arg4[%c0_37, %c0_38] : memref<1032x128xf32, #tpu.memory_space<vmem>>, vector<1x128xf32>
    %71 = vector.broadcast %70 : vector<1x128xf32> to vector<2x128xf32>
    %72 = arith.mulf %69, %71 : vector<2x128xf32>
    %cst_39 = arith.constant dense<0.000000e+00> : vector<2xf32>
    %73 = vector.multi_reduction <add>, %72, %cst_39 [1] : vector<2x128xf32> to vector<2xf32>
    %74 = vector.shape_cast %73 : vector<2xf32> to vector<2x1xf32>
    %cst_40 = arith.constant 1.000000e+02 : f32
    %75 = vector.broadcast %cst_40 : f32 to vector<2x1xf32>
    %76 = arith.mulf %75, %74 : vector<2x1xf32>
    %77 = arith.negf %76 : vector<2x1xf32>
    %78 = math.exp %77 : vector<2x1xf32>
    %cst_41 = arith.constant 1.000000e+00 : f32
    %79 = vector.broadcast %cst_41 : f32 to vector<2x1xf32>
    %80 = arith.addf %79, %78 : vector<2x1xf32>
    %81 = arith.divf %79, %80 : vector<2x1xf32>
    %c2_42 = arith.constant 2 : index
    %c0_43 = arith.constant 0 : index
    %82 = vector.load %arg4[%c2_42, %c0_43] : memref<1032x128xf32, #tpu.memory_space<vmem>>, vector<128x128xf32>
    %c130 = arith.constant 130 : index
    %c0_44 = arith.constant 0 : index
    %83 = vector.load %arg4[%c130, %c0_44] : memref<1032x128xf32, #tpu.memory_space<vmem>>, vector<128x128xf32>
    %cst_45 = arith.constant dense<0.000000e+00> : vector<2x128xf32>
    %84 = tpu.matmul %61, %82, %cst_45 {dimension_numbers = #tpu.dot_dimension_numbers<[1], [0], [0], [1], [0, 0, 1, 1], [], []>} : vector<2x128xf32>, vector<128x128xf32>, vector<2x128xf32> -> vector<2x128xf32>
    %cst_46 = arith.constant 0.000000e+00 : f32
    %85 = vector.broadcast %cst_46 : f32 to vector<2x128xf32>
    %86 = arith.maximumf %84, %85 : vector<2x128xf32>
    %cst_47 = arith.constant dense<0.000000e+00> : vector<2x128xf32>
    %87 = tpu.matmul %86, %83, %cst_47 {dimension_numbers = #tpu.dot_dimension_numbers<[1], [0], [0], [1], [0, 0, 1, 1], [], []>} : vector<2x128xf32>, vector<128x128xf32>, vector<2x128xf32> -> vector<2x128xf32>
    %cst_48 = arith.constant 0.000000e+00 : f32
    %88 = vector.broadcast %cst_48 : f32 to vector<2x128xf32>
    %89 = arith.maximumf %87, %88 : vector<2x128xf32>
    %c1_49 = arith.constant 1 : index
    %c0_50 = arith.constant 0 : index
    %90 = vector.load %arg4[%c1_49, %c0_50] : memref<1032x128xf32, #tpu.memory_space<vmem>>, vector<1x128xf32>
    %91 = vector.broadcast %90 : vector<1x128xf32> to vector<2x128xf32>
    %92 = arith.subf %91, %89 : vector<2x128xf32>
    %c258 = arith.constant 258 : index
    %c0_51 = arith.constant 0 : index
    %93 = vector.load %arg4[%c258, %c0_51] : memref<1032x128xf32, #tpu.memory_space<vmem>>, vector<128x128xf32>
    %c386 = arith.constant 386 : index
    %c0_52 = arith.constant 0 : index
    %94 = vector.load %arg4[%c386, %c0_52] : memref<1032x128xf32, #tpu.memory_space<vmem>>, vector<1x128xf32>
    %c387 = arith.constant 387 : index
    %c0_53 = arith.constant 0 : index
    %95 = vector.load %arg4[%c387, %c0_53] : memref<1032x128xf32, #tpu.memory_space<vmem>>, vector<128x128xf32>
    %c515 = arith.constant 515 : index
    %c0_54 = arith.constant 0 : index
    %96 = vector.load %arg4[%c515, %c0_54] : memref<1032x128xf32, #tpu.memory_space<vmem>>, vector<1x128xf32>
    %c516 = arith.constant 516 : index
    %c0_55 = arith.constant 0 : index
    %97 = vector.load %arg4[%c516, %c0_55] : memref<1032x128xf32, #tpu.memory_space<vmem>>, vector<128x128xf32>
    %c644 = arith.constant 644 : index
    %c0_56 = arith.constant 0 : index
    %98 = vector.load %arg4[%c644, %c0_56] : memref<1032x128xf32, #tpu.memory_space<vmem>>, vector<1x128xf32>
    %cst_57 = arith.constant dense<0.000000e+00> : vector<2x128xf32>
    %99 = tpu.matmul %92, %93, %cst_57 {dimension_numbers = #tpu.dot_dimension_numbers<[1], [0], [0], [1], [0, 0, 1, 1], [], []>} : vector<2x128xf32>, vector<128x128xf32>, vector<2x128xf32> -> vector<2x128xf32>
    %100 = vector.broadcast %94 : vector<1x128xf32> to vector<2x128xf32>
    %101 = arith.addf %99, %100 : vector<2x128xf32>
    %cst_58 = arith.constant 0.000000e+00 : f32
    %102 = vector.broadcast %cst_58 : f32 to vector<2x128xf32>
    %103 = arith.maximumf %101, %102 : vector<2x128xf32>
    %cst_59 = arith.constant dense<0.000000e+00> : vector<2x128xf32>
    %104 = tpu.matmul %103, %95, %cst_59 {dimension_numbers = #tpu.dot_dimension_numbers<[1], [0], [0], [1], [0, 0, 1, 1], [], []>} : vector<2x128xf32>, vector<128x128xf32>, vector<2x128xf32> -> vector<2x128xf32>
    %105 = vector.broadcast %96 : vector<1x128xf32> to vector<2x128xf32>
    %106 = arith.addf %104, %105 : vector<2x128xf32>
    %cst_60 = arith.constant 0.000000e+00 : f32
    %107 = vector.broadcast %cst_60 : f32 to vector<2x128xf32>
    %108 = arith.maximumf %106, %107 : vector<2x128xf32>
    %cst_61 = arith.constant dense<0.000000e+00> : vector<2x128xf32>
    %109 = tpu.matmul %108, %97, %cst_61 {dimension_numbers = #tpu.dot_dimension_numbers<[1], [0], [0], [1], [0, 0, 1, 1], [], []>} : vector<2x128xf32>, vector<128x128xf32>, vector<2x128xf32> -> vector<2x128xf32>
    %110 = vector.broadcast %98 : vector<1x128xf32> to vector<2x128xf32>
    %111 = arith.addf %109, %110 : vector<2x128xf32>
    %112 = arith.negf %111 : vector<2x128xf32>
    %113 = math.exp %112 : vector<2x128xf32>
    %cst_62 = arith.constant 1.000000e+00 : f32
    %114 = vector.broadcast %cst_62 : f32 to vector<2x128xf32>
    %115 = arith.addf %114, %113 : vector<2x128xf32>
    %116 = arith.divf %114, %115 : vector<2x128xf32>
    %117 = vector.extract_strided_slice %116 {offsets = [0, 0], sizes = [2, 1], strides = [1, 1]} : vector<2x128xf32> to vector<2x1xf32>
    %118 = arith.addf %81, %117 : vector<2x1xf32>
    %119 = vector.broadcast %118 : vector<2x1xf32> to vector<2x128xf32>
    %120 = arith.addf %119, %60 : vector<2x128xf32>
    %c0_63 = arith.constant 0 : index
    %c0_64 = arith.constant 0 : index
    %121 = vector.load %arg6[%c0_63, %c0_64] : memref<2x128xf32, #tpu.memory_space<vmem>>, vector<2x128xf32>
    tpu.vector_store %arg6[%c0_63, %c0_64], %120 {strides = array<i32>} : memref<2x128xf32, #tpu.memory_space<vmem>>, vector<2x128xf32>,
    %c645 = arith.constant 645 : index
    %c0_65 = arith.constant 0 : index
    %122 = vector.load %arg4[%c645, %c0_65] : memref<1032x128xf32, #tpu.memory_space<vmem>>, vector<128x128xf32>
    %c773 = arith.constant 773 : index
    %c0_66 = arith.constant 0 : index
    %123 = vector.load %arg4[%c773, %c0_66] : memref<1032x128xf32, #tpu.memory_space<vmem>>, vector<1x128xf32>
    %c774 = arith.constant 774 : index
    %c0_67 = arith.constant 0 : index
    %124 = vector.load %arg4[%c774, %c0_67] : memref<1032x128xf32, #tpu.memory_space<vmem>>, vector<128x128xf32>
    %c902 = arith.constant 902 : index
    %c0_68 = arith.constant 0 : index
    %125 = vector.load %arg4[%c902, %c0_68] : memref<1032x128xf32, #tpu.memory_space<vmem>>, vector<1x128xf32>
    %c903 = arith.constant 903 : index
    %c0_69 = arith.constant 0 : index
    %126 = vector.load %arg4[%c903, %c0_69] : memref<1032x128xf32, #tpu.memory_space<vmem>>, vector<128x128xf32>
    %c1031 = arith.constant 1031 : index
    %c0_70 = arith.constant 0 : index
    %127 = vector.load %arg4[%c1031, %c0_70] : memref<1032x128xf32, #tpu.memory_space<vmem>>, vector<1x128xf32>
    %cst_71 = arith.constant dense<0.000000e+00> : vector<2x128xf32>
    %128 = tpu.matmul %120, %122, %cst_71 {dimension_numbers = #tpu.dot_dimension_numbers<[1], [0], [0], [1], [0, 0, 1, 1], [], []>} : vector<2x128xf32>, vector<128x128xf32>, vector<2x128xf32> -> vector<2x128xf32>
    %129 = vector.broadcast %123 : vector<1x128xf32> to vector<2x128xf32>
    %130 = arith.addf %128, %129 : vector<2x128xf32>
    %cst_72 = arith.constant 0.000000e+00 : f32
    %131 = vector.broadcast %cst_72 : f32 to vector<2x128xf32>
    %132 = arith.maximumf %130, %131 : vector<2x128xf32>
    %cst_73 = arith.constant dense<0.000000e+00> : vector<2x128xf32>
    %133 = tpu.matmul %132, %124, %cst_73 {dimension_numbers = #tpu.dot_dimension_numbers<[1], [0], [0], [1], [0, 0, 1, 1], [], []>} : vector<2x128xf32>, vector<128x128xf32>, vector<2x128xf32> -> vector<2x128xf32>
    %134 = vector.broadcast %125 : vector<1x128xf32> to vector<2x128xf32>
    %135 = arith.addf %133, %134 : vector<2x128xf32>
    %cst_74 = arith.constant 0.000000e+00 : f32
    %136 = vector.broadcast %cst_74 : f32 to vector<2x128xf32>
    %137 = arith.maximumf %135, %136 : vector<2x128xf32>
    %cst_75 = arith.constant dense<0.000000e+00> : vector<2x128xf32>
    %138 = tpu.matmul %137, %126, %cst_75 {dimension_numbers = #tpu.dot_dimension_numbers<[1], [0], [0], [1], [0, 0, 1, 1], [], []>} : vector<2x128xf32>, vector<128x128xf32>, vector<2x128xf32> -> vector<2x128xf32>
    %139 = vector.broadcast %127 : vector<1x128xf32> to vector<2x128xf32>
    %140 = arith.addf %138, %139 : vector<2x128xf32>
    %141 = arith.negf %140 : vector<2x128xf32>
    %142 = math.exp %141 : vector<2x128xf32>
    %cst_76 = arith.constant 1.000000e+00 : f32
    %143 = vector.broadcast %cst_76 : f32 to vector<2x128xf32>
    %144 = arith.addf %143, %142 : vector<2x128xf32>
    %145 = arith.divf %143, %144 : vector<2x128xf32>
    %146 = vector.extract_strided_slice %145 {offsets = [0, 0], sizes = [2, 1], strides = [1, 1]} : vector<2x128xf32> to vector<2x1xf32>
    %147 = tpu.iota {dimensions = array<i32: 1>} : vector<2x128xi32>
    %c9_i32 = arith.constant 9 : i32
    %148 = vector.broadcast %c9_i32 : i32 to vector<2x128xi32>
    %149 = arith.cmpi slt, %147, %148 : vector<2x128xi32>
    %cst_77 = arith.constant -1.000000e+30 : f32
    %150 = vector.broadcast %cst_77 : f32 to vector<2x128xf32>
    %151 = arith.select %149, %60, %150 : vector<2x128xi1>, vector<2x128xf32>
    %cst_78 = arith.constant dense<0xFF800000> : vector<2xf32>
    %152 = vector.multi_reduction <maximumf>, %151, %cst_78 [1] : vector<2x128xf32> to vector<2xf32>
    %153 = vector.shape_cast %152 : vector<2xf32> to vector<2x1xf32>
    %154 = arith.addf %146, %153 : vector<2x1xf32>
    %cst_79 = arith.constant 5.000000e-01 : f32
    %155 = vector.broadcast %cst_79 : f32 to vector<2x1xf32>
    %156 = arith.mulf %154, %155 : vector<2x1xf32>
    %157 = vector.shape_cast %156 : vector<2x1xf32> to vector<2x1xf32>
    %158 = vector.broadcast %157 : vector<2x1xf32> to vector<2x128xf32>
    %c0_80 = arith.constant 0 : index
    %c0_81 = arith.constant 0 : index
    %159 = vector.load %arg5[%c0_80, %c0_81] : memref<2x128xf32, #tpu.memory_space<vmem>>, vector<2x128xf32>
    tpu.vector_store %arg5[%c0_80, %c0_81], %158 {strides = array<i32>} : memref<2x128xf32, #tpu.memory_space<vmem>>, vector<2x128xf32>,
    return
  }
  func.func @transform_0(%arg0: i32) -> (i32, i32, i32) {
    %c0_i32 = arith.constant 0 : i32
    %c0_i32_0 = arith.constant 0 : i32
    %c0_i32_1 = arith.constant 0 : i32
    %c0_i32_2 = arith.constant 0 : i32
    return %c0_i32, %c0_i32_0, %c0_i32_1 : i32, i32, i32
  }
  func.func @transform_1(%arg0: i32) -> (i32, i32, i32) {
    %c0_i32 = arith.constant 0 : i32
    %c0_i32_0 = arith.constant 0 : i32
    %c0_i32_1 = arith.constant 0 : i32
    %c0_i32_2 = arith.constant 0 : i32
    return %c0_i32, %c0_i32_0, %c0_i32_1 : i32, i32, i32
  }
  func.func @transform_2(%arg0: i32) -> (i32, i32) {
    %c0_i32 = arith.constant 0 : i32
    %c0_i32_0 = arith.constant 0 : i32
    %c0_i32_1 = arith.constant 0 : i32
    return %c0_i32, %c0_i32_0 : i32, i32
  }
  func.func @transform_3(%arg0: i32) -> (i32, i32) {
    %c0_i32 = arith.constant 0 : i32
    %c0_i32_0 = arith.constant 0 : i32
    %c0_i32_1 = arith.constant 0 : i32
    return %c0_i32, %c0_i32_0 : i32, i32
  }
  func.func @transform_4(%arg0: i32) -> (i32, i32) {
    %c0_i32 = arith.constant 0 : i32
    %c0_i32_0 = arith.constant 0 : i32
    %c0_i32_1 = arith.constant 0 : i32
    return %c0_i32, %c0_i32_0 : i32, i32
  }
  func.func @transform_5(%arg0: i32) -> (i32, i32) {
    %c0_i32 = arith.constant 0 : i32
    %c0_i32_0 = arith.constant 0 : i32
    %c0_i32_1 = arith.constant 0 : i32
    return %c0_i32, %c0_i32_0 : i32, i32
  }
}

</mosaic_0001>

<llo_original>
// kernel: inctrl_forward.1
$region0: #{inctrl_forward.1}
  #allocation0 [shape = 'u32[]', space=smem, size = 0x4, offset = 0x4, fixed_abs, tag = 'smem constant byte address 0x4 - core index']
  #allocation1 [shape = 'u32[72,128]{1,0:T(1,128)}', space=vmem, size = 0x9000, scoped, tag = 'internal scratch']
  %s0 = inlined_call_operand.vmem [shape: f32[3,256,32], index: 0, kind: input, shape index: {}]
  %s1 = inlined_call_operand.vmem [shape: f32[3,128,32], index: 1, kind: input, shape index: {}]
  %s2 = inlined_call_operand.vmem [shape: f32[2,128], index: 2, kind: input, shape index: {}]
  %s3 = inlined_call_operand.vmem [shape: f32[1032,128], index: 3, kind: input, shape index: {}]
  %s4 = inlined_call_operand.vmem [shape: f32[2,128], index: 4, kind: output, shape index: {0}]
  %s5 = inlined_call_operand.vmem [shape: f32[2,128], index: 5, kind: output, shape index: {1}]
  %6 = xla_tuple %s4, %s5
  %s7 = sld [smem:[#allocation0]]
  $region34: #{inctrl_forward.1} parent=0
    _
  %s9 = ssub.s32 1, %s7
  %s10 = scalar_select 0, %s9, %s7
  // Predicated region
  $region2: #{inctrl_forward.1} parent=0 // pred_check
    _
  $region3: #{inctrl_forward.1} parent=0 // pred_check_branch
    %12 = sbr.rel (0) target = $region5
  $region4: #{inctrl_forward.1} parent=0 // pred_region
    _
  $region5: #{inctrl_forward.1} parent=0 // pred_fallthru
    _
  // Predicated region
  $region6: #{inctrl_forward.1} parent=0 // pred_check
    _
  $region7: #{inctrl_forward.1} parent=0 // pred_check_branch
    %14 = sbr.rel (0) target = $region9
  $region8: #{inctrl_forward.1} parent=0 // pred_region
    _
  $region9: #{inctrl_forward.1} parent=0 // pred_fallthru
    _
  // Predicated region
  $region10: #{inctrl_forward.1} parent=0 // pred_check
    _
  $region11: #{inctrl_forward.1} parent=0 // pred_check_branch
    %16 = sbr.rel (0) target = $region13
  $region12: #{inctrl_forward.1} parent=0 // pred_region
    _
  $region13: #{inctrl_forward.1} parent=0 // pred_fallthru
    _
  // Predicated region
  $region14: #{inctrl_forward.1} parent=0 // pred_check
    _
  $region15: #{inctrl_forward.1} parent=0 // pred_check_branch
    %18 = sbr.rel (0) target = $region17
  $region16: #{inctrl_forward.1} parent=0 // pred_region
    _
  $region17: #{inctrl_forward.1} parent=0 // pred_fallthru
    _
  %v19 = vld [vmem:[%s0] sm:$0xff]
  %v20 = vld [vmem:[%s0 + $0x8] sm:$0xff]
  %v21 = vld [vmem:[%s0 + $0x10] sm:$0xff]
  %v22 = vld [vmem:[%s0 + $0x18] sm:$0xff]
  %v23 = vld [vmem:[%s0 + $0x20] sm:$0xff]
  %v24 = vld [vmem:[%s0 + $0x28] sm:$0xff]
  %v25 = vld [vmem:[%s0 + $0x30] sm:$0xff]
  %v26 = vld [vmem:[%s0 + $0x38] sm:$0xff]
  %v27 = vld [vmem:[%s0 + $0x40] sm:$0xff]
  %v28 = vld [vmem:[%s0 + $0x48] sm:$0xff]
  %v29 = vld [vmem:[%s0 + $0x50] sm:$0xff]
  %v30 = vld [vmem:[%s0 + $0x58] sm:$0xff]
  %v31 = vld [vmem:[%s0 + $0x60] sm:$0xff]
  %v32 = vld [vmem:[%s0 + $0x68] sm:$0xff]
  %v33 = vld [vmem:[%s0 + $0x70] sm:$0xff]
  %v34 = vld [vmem:[%s0 + $0x78] sm:$0xff]
  %v35 = vld [vmem:[%s0 + $0x80] sm:$0xff]
  %v36 = vld [vmem:[%s0 + $0x88] sm:$0xff]
  %v37 = vld [vmem:[%s0 + $0x90] sm:$0xff]
  %v38 = vld [vmem:[%s0 + $0x98] sm:$0xff]
  %v39 = vld [vmem:[%s0 + $0xa0] sm:$0xff]
  %v40 = vld [vmem:[%s0 + $0xa8] sm:$0xff]
  %v41 = vld [vmem:[%s0 + $0xb0] sm:$0xff]
  %v42 = vld [vmem:[%s0 + $0xb8] sm:$0xff]
  %v43 = vld [vmem:[%s0 + $0xc0] sm:$0xff]
  %v44 = vld [vmem:[%s0 + $0xc8] sm:$0xff]
  %v45 = vld [vmem:[%s0 + $0xd0] sm:$0xff]
  %v46 = vld [vmem:[%s0 + $0xd8] sm:$0xff]
  %v47 = vld [vmem:[%s0 + $0xe0] sm:$0xff]
  %v48 = vld [vmem:[%s0 + $0xe8] sm:$0xff]
  %v49 = vld [vmem:[%s0 + $0xf0] sm:$0xff]
  %v50 = vld [vmem:[%s0 + $0xf8] sm:$0xff]
  %v51 = vmul.f32 %v19, %v19
  %v52 = vmul.f32 %v20, %v20
  %v53 = vmul.f32 %v21, %v21
  %v54 = vmul.f32 %v22, %v22
  %v55 = vmul.f32 %v23, %v23
  %v56 = vmul.f32 %v24, %v24
  %v57 = vmul.f32 %v25, %v25
  %v58 = vmul.f32 %v26, %v26
  %v59 = vmul.f32 %v27, %v27
  %v60 = vmul.f32 %v28, %v28
  %v61 = vmul.f32 %v29, %v29
  %v62 = vmul.f32 %v30, %v30
  %v63 = vmul.f32 %v31, %v31
  %v64 = vmul.f32 %v32, %v32
  %v65 = vmul.f32 %v33, %v33
  %v66 = vmul.f32 %v34, %v34
  %v67 = vmul.f32 %v35, %v35
  %v68 = vmul.f32 %v36, %v36
  %v69 = vmul.f32 %v37, %v37
  %v70 = vmul.f32 %v38, %v38
  %v71 = vmul.f32 %v39, %v39
  %v72 = vmul.f32 %v40, %v40
  %v73 = vmul.f32 %v41, %v41
  %v74 = vmul.f32 %v42, %v42
  %v75 = vmul.f32 %v43, %v43
  %v76 = vmul.f32 %v44, %v44
  %v77 = vmul.f32 %v45, %v45
  %v78 = vmul.f32 %v46, %v46
  %v79 = vmul.f32 %v47, %v47
  %v80 = vmul.f32 %v48, %v48
  %v81 = vmul.f32 %v49, %v49
  %v82 = vmul.f32 %v50, %v50
  %vm83 = vcmask 261120
  %v84 = vsel %vm83, %v51, 0.0
  %85 = vadd.xlane.f32.xlu0 %v84
  %v86 = vpop.xlane.xlu0 %85
  %v87 = vsel %vm83, %v52, 0.0
  %88 = vadd.xlane.f32.xlu0 %v87
  %v89 = vpop.xlane.xlu0 %88
  %v90 = vsel %vm83, %v53, 0.0
  %91 = vadd.xlane.f32.xlu0 %v90
  %v92 = vpop.xlane.xlu0 %91
  %v93 = vsel %vm83, %v54, 0.0
  %94 = vadd.xlane.f32.xlu0 %v93
  %v95 = vpop.xlane.xlu0 %94
  %v96 = vsel %vm83, %v55, 0.0
  %97 = vadd.xlane.f32.xlu0 %v96
  %v98 = vpop.xlane.xlu0 %97
  %v99 = vsel %vm83, %v56, 0.0
  %100 = vadd.xlane.f32.xlu0 %v99
  %v101 = vpop.xlane.xlu0 %100
  %v102 = vsel %vm83, %v57, 0.0
  %103 = vadd.xlane.f32.xlu0 %v102
  %v104 = vpop.xlane.xlu0 %103
  %v105 = vsel %vm83, %v58, 0.0
  %106 = vadd.xlane.f32.xlu0 %v105
  %v107 = vpop.xlane.xlu0 %106
  %v108 = vsel %vm83, %v59, 0.0
  %109 = vadd.xlane.f32.xlu0 %v108
  %v110 = vpop.xlane.xlu0 %109
  %v111 = vsel %vm83, %v60, 0.0
  %112 = vadd.xlane.f32.xlu0 %v111
  %v113 = vpop.xlane.xlu0 %112
  %v114 = vsel %vm83, %v61, 0.0
  %115 = vadd.xlane.f32.xlu0 %v114
  %v116 = vpop.xlane.xlu0 %115
  %v117 = vsel %vm83, %v62, 0.0
  %118 = vadd.xlane.f32.xlu0 %v117
  %v119 = vpop.xlane.xlu0 %118
  %v120 = vsel %vm83, %v63, 0.0
  %121 = vadd.xlane.f32.xlu0 %v120
  %v122 = vpop.xlane.xlu0 %121
  %v123 = vsel %vm83, %v64, 0.0
  %124 = vadd.xlane.f32.xlu0 %v123
  %v125 = vpop.xlane.xlu0 %124
  %v126 = vsel %vm83, %v65, 0.0
  %127 = vadd.xlane.f32.xlu0 %v126
  %v128 = vpop.xlane.xlu0 %127
  %v129 = vsel %vm83, %v66, 0.0
  %130 = vadd.xlane.f32.xlu0 %v129
  %v131 = vpop.xlane.xlu0 %130
  %v132 = vsel %vm83, %v67, 0.0
  %133 = vadd.xlane.f32.xlu0 %v132
  %v134 = vpop.xlane.xlu0 %133
  %v135 = vsel %vm83, %v68, 0.0
  %136 = vadd.xlane.f32.xlu0 %v135
  %v137 = vpop.xlane.xlu0 %136
  %v138 = vsel %vm83, %v69, 0.0
  %139 = vadd.xlane.f32.xlu0 %v138
  %v140 = vpop.xlane.xlu0 %139
  %v141 = vsel %vm83, %v70, 0.0
  %142 = vadd.xlane.f32.xlu0 %v141
  %v143 = vpop.xlane.xlu0 %142
  %v144 = vsel %vm83, %v71, 0.0
  %145 = vadd.xlane.f32.xlu0 %v144
  %v146 = vpop.xlane.xlu0 %145
  %v147 = vsel %vm83, %v72, 0.0
  %148 = vadd.xlane.f32.xlu0 %v147
  %v149 = vpop.xlane.xlu0 %148
  %v150 = vsel %vm83, %v73, 0.0
  %151 = vadd.xlane.f32.xlu0 %v150
  %v152 = vpop.xlane.xlu0 %151
  %v153 = vsel %vm83, %v74, 0.0
  %154 = vadd.xlane.f32.xlu0 %v153
  %v155 = vpop.xlane.xlu0 %154
  %v156 = vsel %vm83, %v75, 0.0
  %157 = vadd.xlane.f32.xlu0 %v156
  %v158 = vpop.xlane.xlu0 %157
  %v159 = vsel %vm83, %v76, 0.0
  %160 = vadd.xlane.f32.xlu0 %v159
  %v161 = vpop.xlane.xlu0 %160
  %v162 = vsel %vm83, %v77, 0.0
  %163 = vadd.xlane.f32.xlu0 %v162
  %v164 = vpop.xlane.xlu0 %163
  %v165 = vsel %vm83, %v78, 0.0
  %166 = vadd.xlane.f32.xlu0 %v165
  %v167 = vpop.xlane.xlu0 %166
  %v168 = vsel %vm83, %v79, 0.0
  %169 = vadd.xlane.f32.xlu0 %v168
  %v170 = vpop.xlane.xlu0 %169
  %v171 = vsel %vm83, %v80, 0.0
  %172 = vadd.xlane.f32.xlu0 %v171
  %v173 = vpop.xlane.xlu0 %172
  %v174 = vsel %vm83, %v81, 0.0
  %175 = vadd.xlane.f32.xlu0 %v174
  %v176 = vpop.xlane.xlu0 %175
  %v177 = vsel %vm83, %v82, 0.0
  %178 = vadd.xlane.f32.xlu0 %v177
  %v179 = vpop.xlane.xlu0 %178
  %v180 = vadd.f32 %v86, 1e-12
  %v181 = vadd.f32 %v89, 1e-12
  %v182 = vadd.f32 %v92, 1e-12
  %v183 = vadd.f32 %v95, 1e-12
  %v184 = vadd.f32 %v98, 1e-12
  %v185 = vadd.f32 %v101, 1e-12
  %v186 = vadd.f32 %v104, 1e-12
  %v187 = vadd.f32 %v107, 1e-12
  %v188 = vadd.f32 %v110, 1e-12
  %v189 = vadd.f32 %v113, 1e-12
  %v190 = vadd.f32 %v116, 1e-12
  %v191 = vadd.f32 %v119, 1e-12
  %v192 = vadd.f32 %v122, 1e-12
  %v193 = vadd.f32 %v125, 1e-12
  %v194 = vadd.f32 %v128, 1e-12
  %v195 = vadd.f32 %v131, 1e-12
  %v196 = vadd.f32 %v134, 1e-12
  %v197 = vadd.f32 %v137, 1e-12
  %v198 = vadd.f32 %v140, 1e-12
  %v199 = vadd.f32 %v143, 1e-12
  %v200 = vadd.f32 %v146, 1e-12
  %v201 = vadd.f32 %v149, 1e-12
  %v202 = vadd.f32 %v152, 1e-12
  %v203 = vadd.f32 %v155, 1e-12
  %v204 = vadd.f32 %v158, 1e-12
  %v205 = vadd.f32 %v161, 1e-12
  %v206 = vadd.f32 %v164, 1e-12
  %v207 = vadd.f32 %v167, 1e-12
  %v208 = vadd.f32 %v170, 1e-12
  %v209 = vadd.f32 %v173, 1e-12
  %v210 = vadd.f32 %v176, 1e-12
  %v211 = vadd.f32 %v179, 1e-12
  %v212 = vrsqrt.pop %v180
  %v213 = vmul.f32 %v212, %v180
  %v214 = vmul.f32 %v213, %v212
  %v215 = vmul.f32 0.5, %v214
  %v216 = vsub.f32 1.5, %v215
  %v217 = vmul.f32 %v212, %v216
  %vm218 = vweird.f32 %v180
  %vm219 = vweird.f32 %v212
  %vm220 = vmor %vm218, %vm219
  %v221 = vsel %vm220, %v212, %v217
  %v222 = vrsqrt.pop %v181
  %v223 = vmul.f32 %v222, %v181
  %v224 = vmul.f32 %v223, %v222
  %v225 = vmul.f32 0.5, %v224
  %v226 = vsub.f32 1.5, %v225
  %v227 = vmul.f32 %v222, %v226
  %vm228 = vweird.f32 %v181
  %vm229 = vweird.f32 %v222
  %vm230 = vmor %vm228, %vm229
  %v231 = vsel %vm230, %v222, %v227
  %v232 = vrsqrt.pop %v182
  %v233 = vmul.f32 %v232, %v182
  %v234 = vmul.f32 %v233, %v232
  %v235 = vmul.f32 0.5, %v234
  %v236 = vsub.f32 1.5, %v235
  %v237 = vmul.f32 %v232, %v236
  %vm238 = vweird.f32 %v182
  %vm239 = vweird.f32 %v232
  %vm240 = vmor %vm238, %vm239
  %v241 = vsel %vm240, %v232, %v237
  %v242 = vrsqrt.pop %v183
  %v243 = vmul.f32 %v242, %v183
  %v244 = vmul.f32 %v243, %v242
  %v245 = vmul.f32 0.5, %v244
  %v246 = vsub.f32 1.5, %v245
  %v247 = vmul.f32 %v242, %v246
  %vm248 = vweird.f32 %v183
  %vm249 = vweird.f32 %v242
  %vm250 = vmor %vm248, %vm249
  %v251 = vsel %vm250, %v242, %v247
  %v252 = vrsqrt.pop %v184
  %v253 = vmul.f32 %v252, %v184
  %v254 = vmul.f32 %v253, %v252
  %v255 = vmul.f32 0.5, %v254
  %v256 = vsub.f32 1.5, %v255
  %v257 = vmul.f32 %v252, %v256
  %vm258 = vweird.f32 %v184
  %vm259 = vweird.f32 %v252
  %vm260 = vmor %vm258, %vm259
  %v261 = vsel %vm260, %v252, %v257
  %v262 = vrsqrt.pop %v185
  %v263 = vmul.f32 %v262, %v185
  %v264 = vmul.f32 %v263, %v262
  %v265 = vmul.f32 0.5, %v264
  %v266 = vsub.f32 1.5, %v265
  %v267 = vmul.f32 %v262, %v266
  %vm268 = vweird.f32 %v185
  %vm269 = vweird.f32 %v262
  %vm270 = vmor %vm268, %vm269
  %v271 = vsel %vm270, %v262, %v267
  %v272 = vrsqrt.pop %v186
  %v273 = vmul.f32 %v272, %v186
  %v274 = vmul.f32 %v273, %v272
  %v275 = vmul.f32 0.5, %v274
  %v276 = vsub.f32 1.5, %v275
  %v277 = vmul.f32 %v272, %v276
  %vm278 = vweird.f32 %v186
  %vm279 = vweird.f32 %v272
  %vm280 = vmor %vm278, %vm279
  %v281 = vsel %vm280, %v272, %v277
  %v282 = vrsqrt.pop %v187
  %v283 = vmul.f32 %v282, %v187
  %v284 = vmul.f32 %v283, %v282
  %v285 = vmul.f32 0.5, %v284
  %v286 = vsub.f32 1.5, %v285
  %v287 = vmul.f32 %v282, %v286
  %vm288 = vweird.f32 %v187
  %vm289 = vweird.f32 %v282
  %vm290 = vmor %vm288, %vm289
  %v291 = vsel %vm290, %v282, %v287
  %v292 = vrsqrt.pop %v188
  %v293 = vmul.f32 %v292, %v188
  %v294 = vmul.f32 %v293, %v292
  %v295 = vmul.f32 0.5, %v294
  %v296 = vsub.f32 1.5, %v295
  %v297 = vmul.f32 %v292, %v296
  %vm298 = vweird.f32 %v188
  %vm299 = vweird.f32 %v292
  %vm300 = vmor %vm298, %vm299
  %v301 = vsel %vm300, %v292, %v297
  %v302 = vrsqrt.pop %v189
  %v303 = vmul.f32 %v302, %v189
  %v304 = vmul.f32 %v303, %v302
  %v305 = vmul.f32 0.5, %v304
  %v306 = vsub.f32 1.5, %v305
  %v307 = vmul.f32 %v302, %v306
  %vm308 = vweird.f32 %v189
  %vm309 = vweird.f32 %v302
  %vm310 = vmor %vm308, %vm309
  %v311 = vsel %vm310, %v302, %v307
  %v312 = vrsqrt.pop %v190
  %v313 = vmul.f32 %v312, %v190
  %v314 = vmul.f32 %v313, %v312
  %v315 = vmul.f32 0.5, %v314
  %v316 = vsub.f32 1.5, %v315
  %v317 = vmul.f32 %v312, %v316
  %vm318 = vweird.f32 %v190
  %vm319 = vweird.f32 %v312
  %vm320 = vmor %vm318, %vm319
  %v321 = vsel %vm320, %v312, %v317
  %v322 = vrsqrt.pop %v191
  %v323 = vmul.f32 %v322, %v191
  %v324 = vmul.f32 %v323, %v322
  %v325 = vmul.f32 0.5, %v324
  %v326 = vsub.f32 1.5, %v325
  %v327 = vmul.f32 %v322, %v326
  %vm328 = vweird.f32 %v191
  %vm329 = vweird.f32 %v322
  %vm330 = vmor %vm328, %vm329
  %v331 = vsel %vm330, %v322, %v327
  %v332 = vrsqrt.pop %v192
  %v333 = vmul.f32 %v332, %v192
  %v334 = vmul.f32 %v333, %v332
  %v335 = vmul.f32 0.5, %v334
  %v336 = vsub.f32 1.5, %v335
  %v337 = vmul.f32 %v332, %v336
  %vm338 = vweird.f32 %v192
  %vm339 = vweird.f32 %v332
  %vm340 = vmor %vm338, %vm339
  %v341 = vsel %vm340, %v332, %v337
  %v342 = vrsqrt.pop %v193
  %v343 = vmul.f32 %v342, %v193
  %v344 = vmul.f32 %v343, %v342
  %v345 = vmul.f32 0.5, %v344
  %v346 = vsub.f32 1.5, %v345
  %v347 = vmul.f32 %v342, %v346
  %vm348 = vweird.f32 %v193
  %vm349 = vweird.f32 %v342
  %vm350 = vmor %vm348, %vm349
  %v351 = vsel %vm350, %v342, %v347
  %v352 = vrsqrt.pop %v194
  %v353 = vmul.f32 %v352, %v194
  %v354 = vmul.f32 %v353, %v352
  %v355 = vmul.f32 0.5, %v354
  %v356 = vsub.f32 1.5, %v355
  %v357 = vmul.f32 %v352, %v356
  %vm358 = vweird.f32 %v194
  %vm359 = vweird.f32 %v352
  %vm360 = vmor %vm358, %vm359
  %v361 = vsel %vm360, %v352, %v357
  %v362 = vrsqrt.pop %v195
  %v363 = vmul.f32 %v362, %v195
  %v364 = vmul.f32 %v363, %v362
  %v365 = vmul.f32 0.5, %v364
  %v366 = vsub.f32 1.5, %v365
  %v367 = vmul.f32 %v362, %v366
  %vm368 = vweird.f32 %v195
  %vm369 = vweird.f32 %v362
  %vm370 = vmor %vm368, %vm369
  %v371 = vsel %vm370, %v362, %v367
  %v372 = vrsqrt.pop %v196
  %v373 = vmul.f32 %v372, %v196
  %v374 = vmul.f32 %v373, %v372
  %v375 = vmul.f32 0.5, %v374
  %v376 = vsub.f32 1.5, %v375
  %v377 = vmul.f32 %v372, %v376
  %vm378 = vweird.f32 %v196
  %vm379 = vweird.f32 %v372
  %vm380 = vmor %vm378, %vm379
  %v381 = vsel %vm380, %v372, %v377
  %v382 = vrsqrt.pop %v197
  %v383 = vmul.f32 %v382, %v197
  %v384 = vmul.f32 %v383, %v382
  %v385 = vmul.f32 0.5, %v384
  %v386 = vsub.f32 1.5, %v385
  %v387 = vmul.f32 %v382, %v386
  %vm388 = vweird.f32 %v197
  %vm389 = vweird.f32 %v382
  %vm390 = vmor %vm388, %vm389
  %v391 = vsel %vm390, %v382, %v387
  %v392 = vrsqrt.pop %v198
  %v393 = vmul.f32 %v392, %v198
  %v394 = vmul.f32 %v393, %v392
  %v395 = vmul.f32 0.5, %v394
  %v396 = vsub.f32 1.5, %v395
  %v397 = vmul.f32 %v392, %v396
  %vm398 = vweird.f32 %v198
  %vm399 = vweird.f32 %v392
  %vm400 = vmor %vm398, %vm399
  %v401 = vsel %vm400, %v392, %v397
  %v402 = vrsqrt.pop %v199
  %v403 = vmul.f32 %v402, %v199
  %v404 = vmul.f32 %v403, %v402
  %v405 = vmul.f32 0.5, %v404
  %v406 = vsub.f32 1.5, %v405
  %v407 = vmul.f32 %v402, %v406
  %vm408 = vweird.f32 %v199
  %vm409 = vweird.f32 %v402
  %vm410 = vmor %vm408, %vm409
  %v411 = vsel %vm410, %v402, %v407
  %v412 = vrsqrt.pop %v200
  %v413 = vmul.f32 %v412, %v200
  %v414 = vmul.f32 %v413, %v412
  %v415 = vmul.f32 0.5, %v414
  %v416 = vsub.f32 1.5, %v415
  %v417 = vmul.f32 %v412, %v416
  %vm418 = vweird.f32 %v200
  %vm419 = vweird.f32 %v412
  %vm420 = vmor %vm418, %vm419
  %v421 = vsel %vm420, %v412, %v417
  %v422 = vrsqrt.pop %v201
  %v423 = vmul.f32 %v422, %v201
  %v424 = vmul.f32 %v423, %v422
  %v425 = vmul.f32 0.5, %v424
  %v426 = vsub.f32 1.5, %v425
  %v427 = vmul.f32 %v422, %v426
  %vm428 = vweird.f32 %v201
  %vm429 = vweird.f32 %v422
  %vm430 = vmor %vm428, %vm429
  %v431 = vsel %vm430, %v422, %v427
  %v432 = vrsqrt.pop %v202
  %v433 = vmul.f32 %v432, %v202
  %v434 = vmul.f32 %v433, %v432
  %v435 = vmul.f32 0.5, %v434
  %v436 = vsub.f32 1.5, %v435
  %v437 = vmul.f32 %v432, %v436
  %vm438 = vweird.f32 %v202
  %vm439 = vweird.f32 %v432
  %vm440 = vmor %vm438, %vm439
  %v441 = vsel %vm440, %v432, %v437
  %v442 = vrsqrt.pop %v203
  %v443 = vmul.f32 %v442, %v203
  %v444 = vmul.f32 %v443, %v442
  %v445 = vmul.f32 0.5, %v444
  %v446 = vsub.f32 1.5, %v445
  %v447 = vmul.f32 %v442, %v446
  %vm448 = vweird.f32 %v203
  %vm449 = vweird.f32 %v442
  %vm450 = vmor %vm448, %vm449
  %v451 = vsel %vm450, %v442, %v447
  %v452 = vrsqrt.pop %v204
  %v453 = vmul.f32 %v452, %v204
  %v454 = vmul.f32 %v453, %v452
  %v455 = vmul.f32 0.5, %v454
  %v456 = vsub.f32 1.5, %v455
  %v457 = vmul.f32 %v452, %v456
  %vm458 = vweird.f32 %v204
  %vm459 = vweird.f32 %v452
  %vm460 = vmor %vm458, %vm459
  %v461 = vsel %vm460, %v452, %v457
  %v462 = vrsqrt.pop %v205
  %v463 = vmul.f32 %v462, %v205
  %v464 = vmul.f32 %v463, %v462
  %v465 = vmul.f32 0.5, %v464
  %v466 = vsub.f32 1.5, %v465
  %v467 = vmul.f32 %v462, %v466
  %vm468 = vweird.f32 %v205
  %vm469 = vweird.f32 %v462
  %vm470 = vmor %vm468, %vm469
  %v471 = vsel %vm470, %v462, %v467
  %v472 = vrsqrt.pop %v206
  %v473 = vmul.f32 %v472, %v206
  %v474 = vmul.f32 %v473, %v472
  %v475 = vmul.f32 0.5, %v474
  %v476 = vsub.f32 1.5, %v475
  %v477 = vmul.f32 %v472, %v476
  %vm478 = vweird.f32 %v206
  %vm479 = vweird.f32 %v472
  %vm480 = vmor %vm478, %vm479
  %v481 = vsel %vm480, %v472, %v477
  %v482 = vrsqrt.pop %v207
  %v483 = vmul.f32 %v482, %v207
  %v484 = vmul.f32 %v483, %v482
  %v485 = vmul.f32 0.5, %v484
  %v486 = vsub.f32 1.5, %v485
  %v487 = vmul.f32 %v482, %v486
  %vm488 = vweird.f32 %v207
  %vm489 = vweird.f32 %v482
  %vm490 = vmor %vm488, %vm489
  %v491 = vsel %vm490, %v482, %v487
  %v492 = vrsqrt.pop %v208
  %v493 = vmul.f32 %v492, %v208
  %v494 = vmul.f32 %v493, %v492
  %v495 = vmul.f32 0.5, %v494
  %v496 = vsub.f32 1.5, %v495
  %v497 = vmul.f32 %v492, %v496
  %vm498 = vweird.f32 %v208
  %vm499 = vweird.f32 %v492
  %vm500 = vmor %vm498, %vm499
  %v501 = vsel %vm500, %v492, %v497
  %v502 = vrsqrt.pop %v209
  %v503 = vmul.f32 %v502, %v209
  %v504 = vmul.f32 %v503, %v502
  %v505 = vmul.f32 0.5, %v504
  %v506 = vsub.f32 1.5, %v505
  %v507 = vmul.f32 %v502, %v506
  %vm508 = vweird.f32 %v209
  %vm509 = vweird.f32 %v502
  %vm510 = vmor %vm508, %vm509
  %v511 = vsel %vm510, %v502, %v507
  %v512 = vrsqrt.pop %v210
  %v513 = vmul.f32 %v512, %v210
  %v514 = vmul.f32 %v513, %v512
  %v515 = vmul.f32 0.5, %v514
  %v516 = vsub.f32 1.5, %v515
  %v517 = vmul.f32 %v512, %v516
  %vm518 = vweird.f32 %v210
  %vm519 = vweird.f32 %v512
  %vm520 = vmor %vm518, %vm519
  %v521 = vsel %vm520, %v512, %v517
  %v522 = vrsqrt.pop %v211
  %v523 = vmul.f32 %v522, %v211
  %v524 = vmul.f32 %v523, %v522
  %v525 = vmul.f32 0.5, %v524
  %v526 = vsub.f32 1.5, %v525
  %v527 = vmul.f32 %v522, %v526
  %vm528 = vweird.f32 %v211
  %vm529 = vweird.f32 %v522
  %vm530 = vmor %vm528, %vm529
  %v531 = vsel %vm530, %v522, %v527
  %v532 = vmul.f32 %v19, %v221
  %v533 = vmul.f32 %v20, %v231
  %v534 = vmul.f32 %v21, %v241
  %v535 = vmul.f32 %v22, %v251
  %v536 = vmul.f32 %v23, %v261
  %v537 = vmul.f32 %v24, %v271
  %v538 = vmul.f32 %v25, %v281
  %v539 = vmul.f32 %v26, %v291
  %v540 = vmul.f32 %v27, %v301
  %v541 = vmul.f32 %v28, %v311
  %v542 = vmul.f32 %v29, %v321
  %v543 = vmul.f32 %v30, %v331
  %v544 = vmul.f32 %v31, %v341
  %v545 = vmul.f32 %v32, %v351
  %v546 = vmul.f32 %v33, %v361
  %v547 = vmul.f32 %v34, %v371
  %v548 = vmul.f32 %v35, %v381
  %v549 = vmul.f32 %v36, %v391
  %v550 = vmul.f32 %v37, %v401
  %v551 = vmul.f32 %v38, %v411
  %v552 = vmul.f32 %v39, %v421
  %v553 = vmul.f32 %v40, %v431
  %v554 = vmul.f32 %v41, %v441
  %v555 = vmul.f32 %v42, %v451
  %v556 = vmul.f32 %v43, %v461
  %v557 = vmul.f32 %v44, %v471
  %v558 = vmul.f32 %v45, %v481
  %v559 = vmul.f32 %v46, %v491
  %v560 = vmul.f32 %v47, %v501
  %v561 = vmul.f32 %v48, %v511
  %v562 = vmul.f32 %v49, %v521
  %v563 = vmul.f32 %v50, %v531
  %v564 = vld [vmem:[%s1] sm:$0xff]
  %v565 = vld [vmem:[%s1 + $0x8] sm:$0xff]
  %v566 = vld [vmem:[%s1 + $0x10] sm:$0xff]
  %v567 = vld [vmem:[%s1 + $0x18] sm:$0xff]
  %v568 = vld [vmem:[%s1 + $0x20] sm:$0xff]
  %v569 = vld [vmem:[%s1 + $0x28] sm:$0xff]
  %v570 = vld [vmem:[%s1 + $0x30] sm:$0xff]
  %v571 = vld [vmem:[%s1 + $0x38] sm:$0xff]
  %v572 = vld [vmem:[%s1 + $0x40] sm:$0xff]
  %v573 = vld [vmem:[%s1 + $0x48] sm:$0xff]
  %v574 = vld [vmem:[%s1 + $0x50] sm:$0xff]
  %v575 = vld [vmem:[%s1 + $0x58] sm:$0xff]
  %v576 = vld [vmem:[%s1 + $0x60] sm:$0xff]
  %v577 = vld [vmem:[%s1 + $0x68] sm:$0xff]
  %v578 = vld [vmem:[%s1 + $0x70] sm:$0xff]
  %v579 = vld [vmem:[%s1 + $0x78] sm:$0xff]
  %v581 = vsel %vm83, %v532, 0
  %v584 = vsel %vm83, %v533, 0
  %v587 = vsel %vm83, %v534, 0
  %v590 = vsel %vm83, %v535, 0
  %v593 = vsel %vm83, %v536, 0
  %v596 = vsel %vm83, %v537, 0
  %v599 = vsel %vm83, %v538, 0
  %v602 = vsel %vm83, %v539, 0
  %v605 = vsel %vm83, %v540, 0
  %v608 = vsel %vm83, %v541, 0
  %v611 = vsel %vm83, %v542, 0
  %v614 = vsel %vm83, %v543, 0
  %v617 = vsel %vm83, %v544, 0
  %v620 = vsel %vm83, %v545, 0
  %v623 = vsel %vm83, %v546, 0
  %v626 = vsel %vm83, %v547, 0
  %v629 = vsel %vm83, %v548, 0
  %v632 = vsel %vm83, %v549, 0
  %v635 = vsel %vm83, %v550, 0
  %v638 = vsel %vm83, %v551, 0
  %v641 = vsel %vm83, %v552, 0
  %v644 = vsel %vm83, %v553, 0
  %v647 = vsel %vm83, %v554, 0
  %v650 = vsel %vm83, %v555, 0
  %v653 = vsel %vm83, %v556, 0
  %v656 = vsel %vm83, %v557, 0
  %v659 = vsel %vm83, %v558, 0
  %v662 = vsel %vm83, %v559, 0
  %v665 = vsel %vm83, %v560, 0
  %v668 = vsel %vm83, %v561, 0
  %v671 = vsel %vm83, %v562, 0
  %v674 = vsel %vm83, %v563, 0
  %v677 = vsel %vm83, %v564, 0
  %v680 = vsel %vm83, %v565, 0
  %v683 = vsel %vm83, %v566, 0
  %v686 = vsel %vm83, %v567, 0
  %v689 = vsel %vm83, %v568, 0
  %v692 = vsel %vm83, %v569, 0
  %v695 = vsel %vm83, %v570, 0
  %v698 = vsel %vm83, %v571, 0
  %v701 = vsel %vm83, %v572, 0
  %v704 = vsel %vm83, %v573, 0
  %v707 = vsel %vm83, %v574, 0
  %v710 = vsel %vm83, %v575, 0
  %v713 = vsel %vm83, %v576, 0
  %v716 = vsel %vm83, %v577, 0
  %v719 = vsel %vm83, %v578, 0
  %v722 = vsel %vm83, %v579, 0
  %724 = vmatpush.xpose.msra.mxu0 %v722
  %725 = vmatpush.xpose.msra.mxu0 %v719
  %726 = vmatpush.xpose.msra.mxu0 %v716
  %727 = vmatpush.xpose.msra.mxu0 %v713
  %728 = vmatpush.xpose.msra.mxu0 %v710
  %729 = vmatpush.xpose.msra.mxu0 %v707
  %730 = vmatpush.xpose.msra.mxu0 %v704
  %731 = vmatpush.xpose.msra.mxu0 %v701
  %732 = vmatpush.xpose.msra.mxu0 %v698
  %733 = vmatpush.xpose.msra.mxu0 %v695
  %734 = vmatpush.xpose.msra.mxu0 %v692
  %735 = vmatpush.xpose.msra.mxu0 %v689
  %736 = vmatpush.xpose.msra.mxu0 %v686
  %737 = vmatpush.xpose.msra.mxu0 %v683
  %738 = vmatpush.xpose.msra.mxu0 %v680
  %739 = vmatpush.xpose.msra.mxu0 %v677
  %740 = vmatmul.f32.gmra.mxu0 %v581
  %v741 = vpop.f32.mrf.mxu0
  %v742 = vadd.f32 0.0, %v741
  %743 = vmatmul.f32.gmra.mxu0 %v584
  %v744 = vpop.f32.mrf.mxu0
  %v745 = vadd.f32 0.0, %v744
  %746 = vmatmul.f32.gmra.mxu0 %v587
  %v747 = vpop.f32.mrf.mxu0
  %v748 = vadd.f32 0.0, %v747
  %749 = vmatmul.f32.gmra.mxu0 %v590
  %v750 = vpop.f32.mrf.mxu0
  %v751 = vadd.f32 0.0, %v750
  %752 = vmatmul.f32.gmra.mxu0 %v593
  %v753 = vpop.f32.mrf.mxu0
  %v754 = vadd.f32 0.0, %v753
  %755 = vmatmul.f32.gmra.mxu0 %v596
  %v756 = vpop.f32.mrf.mxu0
  %v757 = vadd.f32 0.0, %v756
  %758 = vmatmul.f32.gmra.mxu0 %v599
  %v759 = vpop.f32.mrf.mxu0
  %v760 = vadd.f32 0.0, %v759
  %761 = vmatmul.f32.gmra.mxu0 %v602
  %v762 = vpop.f32.mrf.mxu0
  %v763 = vadd.f32 0.0, %v762
  %764 = vmatmul.f32.gmra.mxu0 %v605
  %v765 = vpop.f32.mrf.mxu0
  %v766 = vadd.f32 0.0, %v765
  %767 = vmatmul.f32.gmra.mxu0 %v608
  %v768 = vpop.f32.mrf.mxu0
  %v769 = vadd.f32 0.0, %v768
  %770 = vmatmul.f32.gmra.mxu0 %v611
  %v771 = vpop.f32.mrf.mxu0
  %v772 = vadd.f32 0.0, %v771
  %773 = vmatmul.f32.gmra.mxu0 %v614
  %v774 = vpop.f32.mrf.mxu0
  %v775 = vadd.f32 0.0, %v774
  %776 = vmatmul.f32.gmra.mxu0 %v617
  %v777 = vpop.f32.mrf.mxu0
  %v778 = vadd.f32 0.0, %v777
  %779 = vmatmul.f32.gmra.mxu0 %v620
  %v780 = vpop.f32.mrf.mxu0
  %v781 = vadd.f32 0.0, %v780
  %782 = vmatmul.f32.gmra.mxu0 %v623
  %v783 = vpop.f32.mrf.mxu0
  %v784 = vadd.f32 0.0, %v783
  %785 = vmatmul.f32.gmra.mxu0 %v626
  %v786 = vpop.f32.mrf.mxu0
  %v787 = vadd.f32 0.0, %v786
  %788 = vmatmul.f32.gmra.mxu0 %v629
  %v789 = vpop.f32.mrf.mxu0
  %v790 = vadd.f32 0.0, %v789
  %791 = vmatmul.f32.gmra.mxu0 %v632
  %v792 = vpop.f32.mrf.mxu0
  %v793 = vadd.f32 0.0, %v792
  %794 = vmatmul.f32.gmra.mxu0 %v635
  %v795 = vpop.f32.mrf.mxu0
  %v796 = vadd.f32 0.0, %v795
  %797 = vmatmul.f32.gmra.mxu0 %v638
  %v798 = vpop.f32.mrf.mxu0
  %v799 = vadd.f32 0.0, %v798
  %800 = vmatmul.f32.gmra.mxu0 %v641
  %v801 = vpop.f32.mrf.mxu0
  %v802 = vadd.f32 0.0, %v801
  %803 = vmatmul.f32.gmra.mxu0 %v644
  %v804 = vpop.f32.mrf.mxu0
  %v805 = vadd.f32 0.0, %v804
  %806 = vmatmul.f32.gmra.mxu0 %v647
  %v807 = vpop.f32.mrf.mxu0
  %v808 = vadd.f32 0.0, %v807
  %809 = vmatmul.f32.gmra.mxu0 %v650
  %v810 = vpop.f32.mrf.mxu0
  %v811 = vadd.f32 0.0, %v810
  %812 = vmatmul.f32.gmra.mxu0 %v653
  %v813 = vpop.f32.mrf.mxu0
  %v814 = vadd.f32 0.0, %v813
  %815 = vmatmul.f32.gmra.mxu0 %v656
  %v816 = vpop.f32.mrf.mxu0
  %v817 = vadd.f32 0.0, %v816
  %818 = vmatmul.f32.gmra.mxu0 %v659
  %v819 = vpop.f32.mrf.mxu0
  %v820 = vadd.f32 0.0, %v819
  %821 = vmatmul.f32.gmra.mxu0 %v662
  %v822 = vpop.f32.mrf.mxu0
  %v823 = vadd.f32 0.0, %v822
  %824 = vmatmul.f32.gmra.mxu0 %v665
  %v825 = vpop.f32.mrf.mxu0
  %v826 = vadd.f32 0.0, %v825
  %827 = vmatmul.f32.gmra.mxu0 %v668
  %v828 = vpop.f32.mrf.mxu0
  %v829 = vadd.f32 0.0, %v828
  %830 = vmatmul.f32.gmra.mxu0 %v671
  %v831 = vpop.f32.mrf.mxu0
  %v832 = vadd.f32 0.0, %v831
  %833 = vmatmul.f32.gmra.mxu0 %v674
  %v834 = vpop.f32.mrf.mxu0
  %v835 = vadd.f32 0.0, %v834
  %836 = vdwg.mxu0
  %837 = vmax.xlane.f32.xlu0 %v742
  %v838 = vpop.xlane.xlu0 %837
  %839 = vmax.xlane.f32.xlu0 %v745
  %v840 = vpop.xlane.xlu0 %839
  %841 = vmax.xlane.f32.xlu0 %v748
  %v842 = vpop.xlane.xlu0 %841
  %843 = vmax.xlane.f32.xlu0 %v751
  %v844 = vpop.xlane.xlu0 %843
  %845 = vmax.xlane.f32.xlu0 %v754
  %v846 = vpop.xlane.xlu0 %845
  %847 = vmax.xlane.f32.xlu0 %v757
  %v848 = vpop.xlane.xlu0 %847
  %849 = vmax.xlane.f32.xlu0 %v760
  %v850 = vpop.xlane.xlu0 %849
  %851 = vmax.xlane.f32.xlu0 %v763
  %v852 = vpop.xlane.xlu0 %851
  %853 = vmax.xlane.f32.xlu0 %v766
  %v854 = vpop.xlane.xlu0 %853
  %855 = vmax.xlane.f32.xlu0 %v769
  %v856 = vpop.xlane.xlu0 %855
  %857 = vmax.xlane.f32.xlu0 %v772
  %v858 = vpop.xlane.xlu0 %857
  %859 = vmax.xlane.f32.xlu0 %v775
  %v860 = vpop.xlane.xlu0 %859
  %861 = vmax.xlane.f32.xlu0 %v778
  %v862 = vpop.xlane.xlu0 %861
  %863 = vmax.xlane.f32.xlu0 %v781
  %v864 = vpop.xlane.xlu0 %863
  %865 = vmax.xlane.f32.xlu0 %v784
  %v866 = vpop.xlane.xlu0 %865
  %867 = vmax.xlane.f32.xlu0 %v787
  %v868 = vpop.xlane.xlu0 %867
  %869 = vmax.xlane.f32.xlu0 %v790
  %v870 = vpop.xlane.xlu0 %869
  %871 = vmax.xlane.f32.xlu0 %v793
  %v872 = vpop.xlane.xlu0 %871
  %873 = vmax.xlane.f32.xlu0 %v796
  %v874 = vpop.xlane.xlu0 %873
  %875 = vmax.xlane.f32.xlu0 %v799
  %v876 = vpop.xlane.xlu0 %875
  %877 = vmax.xlane.f32.xlu0 %v802
  %v878 = vpop.xlane.xlu0 %877
  %879 = vmax.xlane.f32.xlu0 %v805
  %v880 = vpop.xlane.xlu0 %879
  %881 = vmax.xlane.f32.xlu0 %v808
  %v882 = vpop.xlane.xlu0 %881
  %883 = vmax.xlane.f32.xlu0 %v811
  %v884 = vpop.xlane.xlu0 %883
  %885 = vmax.xlane.f32.xlu0 %v814
  %v886 = vpop.xlane.xlu0 %885
  %887 = vmax.xlane.f32.xlu0 %v817
  %v888 = vpop.xlane.xlu0 %887
  %889 = vmax.xlane.f32.xlu0 %v820
  %v890 = vpop.xlane.xlu0 %889
  %891 = vmax.xlane.f32.xlu0 %v823
  %v892 = vpop.xlane.xlu0 %891
  %893 = vmax.xlane.f32.xlu0 %v826
  %v894 = vpop.xlane.xlu0 %893
  %895 = vmax.xlane.f32.xlu0 %v829
  %v896 = vpop.xlane.xlu0 %895
  %897 = vmax.xlane.f32.xlu0 %v832
  %v898 = vpop.xlane.xlu0 %897
  %899 = vmax.xlane.f32.xlu0 %v835
  %v900 = vpop.xlane.xlu0 %899
  %v901 = vsub.f32 1.0, %v838
  %v902 = vsub.f32 1.0, %v840
  %v903 = vsub.f32 1.0, %v842
  %v904 = vsub.f32 1.0, %v844
  %v905 = vsub.f32 1.0, %v846
  %v906 = vsub.f32 1.0, %v848
  %v907 = vsub.f32 1.0, %v850
  %v908 = vsub.f32 1.0, %v852
  %v909 = vsub.f32 1.0, %v854
  %v910 = vsub.f32 1.0, %v856
  %v911 = vsub.f32 1.0, %v858
  %v912 = vsub.f32 1.0, %v860
  %v913 = vsub.f32 1.0, %v862
  %v914 = vsub.f32 1.0, %v864
  %v915 = vsub.f32 1.0, %v866
  %v916 = vsub.f32 1.0, %v868
  %v917 = vsub.f32 1.0, %v870
  %v918 = vsub.f32 1.0, %v872
  %v919 = vsub.f32 1.0, %v874
  %v920 = vsub.f32 1.0, %v876
  %v921 = vsub.f32 1.0, %v878
  %v922 = vsub.f32 1.0, %v880
  %v923 = vsub.f32 1.0, %v882
  %v924 = vsub.f32 1.0, %v884
  %v925 = vsub.f32 1.0, %v886
  %v926 = vsub.f32 1.0, %v888
  %v927 = vsub.f32 1.0, %v890
  %v928 = vsub.f32 1.0, %v892
  %v929 = vsub.f32 1.0, %v894
  %v930 = vsub.f32 1.0, %v896
  %v931 = vsub.f32 1.0, %v898
  %v932 = vsub.f32 1.0, %v900
  %v933 = vmul.f32 %v901, 0.16666667
  %v934 = vmul.f32 %v902, 0.16666667
  %v935 = vmul.f32 %v903, 0.16666667
  %v936 = vmul.f32 %v904, 0.16666667
  %v937 = vmul.f32 %v905, 0.16666667
  %v938 = vmul.f32 %v906, 0.16666667
  %v939 = vmul.f32 %v907, 0.16666667
  %v940 = vmul.f32 %v908, 0.16666667
  %v941 = vmul.f32 %v909, 0.16666667
  %v942 = vmul.f32 %v910, 0.16666667
  %v943 = vmul.f32 %v911, 0.16666667
  %v944 = vmul.f32 %v912, 0.16666667
  %v945 = vmul.f32 %v913, 0.16666667
  %v946 = vmul.f32 %v914, 0.16666667
  %v947 = vmul.f32 %v915, 0.16666667
  %v948 = vmul.f32 %v916, 0.16666667
  %v949 = vmul.f32 %v917, 0.16666667
  %v950 = vmul.f32 %v918, 0.16666667
  %v951 = vmul.f32 %v919, 0.16666667
  %v952 = vmul.f32 %v920, 0.16666667
  %v953 = vmul.f32 %v921, 0.16666667
  %v954 = vmul.f32 %v922, 0.16666667
  %v955 = vmul.f32 %v923, 0.16666667
  %v956 = vmul.f32 %v924, 0.16666667
  %v957 = vmul.f32 %v925, 0.16666667
  %v958 = vmul.f32 %v926, 0.16666667
  %v959 = vmul.f32 %v927, 0.16666667
  %v960 = vmul.f32 %v928, 0.16666667
  %v961 = vmul.f32 %v929, 0.16666667
  %v962 = vmul.f32 %v930, 0.16666667
  %v963 = vmul.f32 %v931, 0.16666667
  %v964 = vmul.f32 %v932, 0.16666667
  %v965 = vadd.f32 %v933, 0.0
  %v966 = vadd.f32 %v934, 0.0
  %v967 = vadd.f32 %v935, 0.0
  %v968 = vadd.f32 %v936, 0.0
  %v969 = vadd.f32 %v937, 0.0
  %v970 = vadd.f32 %v938, 0.0
  %v971 = vadd.f32 %v939, 0.0
  %v972 = vadd.f32 %v940, 0.0
  %v973 = vadd.f32 %v941, 0.0
  %v974 = vadd.f32 %v942, 0.0
  %v975 = vadd.f32 %v943, 0.0
  %v976 = vadd.f32 %v944, 0.0
  %v977 = vadd.f32 %v945, 0.0
  %v978 = vadd.f32 %v946, 0.0
  %v979 = vadd.f32 %v947, 0.0
  %v980 = vadd.f32 %v948, 0.0
  %v981 = vadd.f32 %v949, 0.0
  %v982 = vadd.f32 %v950, 0.0
  %v983 = vadd.f32 %v951, 0.0
  %v984 = vadd.f32 %v952, 0.0
  %v985 = vadd.f32 %v953, 0.0
  %v986 = vadd.f32 %v954, 0.0
  %v987 = vadd.f32 %v955, 0.0
  %v988 = vadd.f32 %v956, 0.0
  %v989 = vadd.f32 %v957, 0.0
  %v990 = vadd.f32 %v958, 0.0
  %v991 = vadd.f32 %v959, 0.0
  %v992 = vadd.f32 %v960, 0.0
  %v993 = vadd.f32 %v961, 0.0
  %v994 = vadd.f32 %v962, 0.0
  %v995 = vadd.f32 %v963, 0.0
  %v996 = vadd.f32 %v964, 0.0
  %s997 = scalar_lea.vmem %s0, 256
  %v998 = vld [vmem:[%s997] sm:$0xff]
  %v999 = vld [vmem:[%s997 + $0x8] sm:$0xff]
  %v1000 = vld [vmem:[%s997 + $0x10] sm:$0xff]
  %v1001 = vld [vmem:[%s997 + $0x18] sm:$0xff]
  %v1002 = vld [vmem:[%s997 + $0x20] sm:$0xff]
  %v1003 = vld [vmem:[%s997 + $0x28] sm:$0xff]
  %v1004 = vld [vmem:[%s997 + $0x30] sm:$0xff]
  %v1005 = vld [vmem:[%s997 + $0x38] sm:$0xff]
  %v1006 = vld [vmem:[%s997 + $0x40] sm:$0xff]
  %v1007 = vld [vmem:[%s997 + $0x48] sm:$0xff]
  %v1008 = vld [vmem:[%s997 + $0x50] sm:$0xff]
  %v1009 = vld [vmem:[%s997 + $0x58] sm:$0xff]
  %v1010 = vld [vmem:[%s997 + $0x60] sm:$0xff]
  %v1011 = vld [vmem:[%s997 + $0x68] sm:$0xff]
  %v1012 = vld [vmem:[%s997 + $0x70] sm:$0xff]
  %v1013 = vld [vmem:[%s997 + $0x78] sm:$0xff]
  %v1014 = vld [vmem:[%s997 + $0x80] sm:$0xff]
  %v1015 = vld [vmem:[%s997 + $0x88] sm:$0xff]
  %v1016 = vld [vmem:[%s997 + $0x90] sm:$0xff]
  %v1017 = vld [vmem:[%s997 + $0x98] sm:$0xff]
  %v1018 = vld [vmem:[%s997 + $0xa0] sm:$0xff]
  %v1019 = vld [vmem:[%s997 + $0xa8] sm:$0xff]
  %v1020 = vld [vmem:[%s997 + $0xb0] sm:$0xff]
  %v1021 = vld [vmem:[%s997 + $0xb8] sm:$0xff]
  %v1022 = vld [vmem:[%s997 + $0xc0] sm:$0xff]
  %v1023 = vld [vmem:[%s997 + $0xc8] sm:$0xff]
  %v1024 = vld [vmem:[%s997 + $0xd0] sm:$0xff]
  %v1025 = vld [vmem:[%s997 + $0xd8] sm:$0xff]
  %v1026 = vld [vmem:[%s997 + $0xe0] sm:$0xff]
  %v1027 = vld [vmem:[%s997 + $0xe8] sm:$0xff]
  %v1028 = vld [vmem:[%s997 + $0xf0] sm:$0xff]
  %v1029 = vld [vmem:[%s997 + $0xf8] sm:$0xff]
  %v1030 = vmul.f32 %v998, %v998
  %v1031 = vmul.f32 %v999, %v999
  %v1032 = vmul.f32 %v1000, %v1000
  %v1033 = vmul.f32 %v1001, %v1001
  %v1034 = vmul.f32 %v1002, %v1002
  %v1035 = vmul.f32 %v1003, %v1003
  %v1036 = vmul.f32 %v1004, %v1004
  %v1037 = vmul.f32 %v1005, %v1005
  %v1038 = vmul.f32 %v1006, %v1006
  %v1039 = vmul.f32 %v1007, %v1007
  %v1040 = vmul.f32 %v1008, %v1008
  %v1041 = vmul.f32 %v1009, %v1009
  %v1042 = vmul.f32 %v1010, %v1010
  %v1043 = vmul.f32 %v1011, %v1011
  %v1044 = vmul.f32 %v1012, %v1012
  %v1045 = vmul.f32 %v1013, %v1013
  %v1046 = vmul.f32 %v1014, %v1014
  %v1047 = vmul.f32 %v1015, %v1015
  %v1048 = vmul.f32 %v1016, %v1016
  %v1049 = vmul.f32 %v1017, %v1017
  %v1050 = vmul.f32 %v1018, %v1018
  %v1051 = vmul.f32 %v1019, %v1019
  %v1052 = vmul.f32 %v1020, %v1020
  %v1053 = vmul.f32 %v1021, %v1021
  %v1054 = vmul.f32 %v1022, %v1022
  %v1055 = vmul.f32 %v1023, %v1023
  %v1056 = vmul.f32 %v1024, %v1024
  %v1057 = vmul.f32 %v1025, %v1025
  %v1058 = vmul.f32 %v1026, %v1026
  %v1059 = vmul.f32 %v1027, %v1027
  %v1060 = vmul.f32 %v1028, %v1028
  %v1061 = vmul.f32 %v1029, %v1029
  %v1062 = vsel %vm83, %v1030, 0.0
  %1063 = vadd.xlane.f32.xlu0 %v1062
  %v1064 = vpop.xlane.xlu0 %1063
  %v1065 = vsel %vm83, %v1031, 0.0
  %1066 = vadd.xlane.f32.xlu0 %v1065
  %v1067 = vpop.xlane.xlu0 %1066
  %v1068 = vsel %vm83, %v1032, 0.0
  %1069 = vadd.xlane.f32.xlu0 %v1068
  %v1070 = vpop.xlane.xlu0 %1069
  %v1071 = vsel %vm83, %v1033, 0.0
  %1072 = vadd.xlane.f32.xlu0 %v1071
  %v1073 = vpop.xlane.xlu0 %1072
  %v1074 = vsel %vm83, %v1034, 0.0
  %1075 = vadd.xlane.f32.xlu0 %v1074
  %v1076 = vpop.xlane.xlu0 %1075
  %v1077 = vsel %vm83, %v1035, 0.0
  %1078 = vadd.xlane.f32.xlu0 %v1077
  %v1079 = vpop.xlane.xlu0 %1078
  %v1080 = vsel %vm83, %v1036, 0.0
  %1081 = vadd.xlane.f32.xlu0 %v1080
  %v1082 = vpop.xlane.xlu0 %1081
  %v1083 = vsel %vm83, %v1037, 0.0
  %1084 = vadd.xlane.f32.xlu0 %v1083
  %v1085 = vpop.xlane.xlu0 %1084
  %v1086 = vsel %vm83, %v1038, 0.0
  %1087 = vadd.xlane.f32.xlu0 %v1086
  %v1088 = vpop.xlane.xlu0 %1087
  %v1089 = vsel %vm83, %v1039, 0.0
  %1090 = vadd.xlane.f32.xlu0 %v1089
  %v1091 = vpop.xlane.xlu0 %1090
  %v1092 = vsel %vm83, %v1040, 0.0
  %1093 = vadd.xlane.f32.xlu0 %v1092
  %v1094 = vpop.xlane.xlu0 %1093
  %v1095 = vsel %vm83, %v1041, 0.0
  %1096 = vadd.xlane.f32.xlu0 %v1095
  %v1097 = vpop.xlane.xlu0 %1096
  %v1098 = vsel %vm83, %v1042, 0.0
  %1099 = vadd.xlane.f32.xlu0 %v1098
  %v1100 = vpop.xlane.xlu0 %1099
  %v1101 = vsel %vm83, %v1043, 0.0
  %1102 = vadd.xlane.f32.xlu0 %v1101
  %v1103 = vpop.xlane.xlu0 %1102
  %v1104 = vsel %vm83, %v1044, 0.0
  %1105 = vadd.xlane.f32.xlu0 %v1104
  %v1106 = vpop.xlane.xlu0 %1105
  %v1107 = vsel %vm83, %v1045, 0.0
  %1108 = vadd.xlane.f32.xlu0 %v1107
  %v1109 = vpop.xlane.xlu0 %1108
  %v1110 = vsel %vm83, %v1046, 0.0
  %1111 = vadd.xlane.f32.xlu0 %v1110
  %v1112 = vpop.xlane.xlu0 %1111
  %v1113 = vsel %vm83, %v1047, 0.0
  %1114 = vadd.xlane.f32.xlu0 %v1113
  %v1115 = vpop.xlane.xlu0 %1114
  %v1116 = vsel %vm83, %v1048, 0.0
  %1117 = vadd.xlane.f32.xlu0 %v1116
  %v1118 = vpop.xlane.xlu0 %1117
  %v1119 = vsel %vm83, %v1049, 0.0
  %1120 = vadd.xlane.f32.xlu0 %v1119
  %v1121 = vpop.xlane.xlu0 %1120
  %v1122 = vsel %vm83, %v1050, 0.0
  %1123 = vadd.xlane.f32.xlu0 %v1122
  %v1124 = vpop.xlane.xlu0 %1123
  %v1125 = vsel %vm83, %v1051, 0.0
  %1126 = vadd.xlane.f32.xlu0 %v1125
  %v1127 = vpop.xlane.xlu0 %1126
  %v1128 = vsel %vm83, %v1052, 0.0
  %1129 = vadd.xlane.f32.xlu0 %v1128
  %v1130 = vpop.xlane.xlu0 %1129
  %v1131 = vsel %vm83, %v1053, 0.0
  %1132 = vadd.xlane.f32.xlu0 %v1131
  %v1133 = vpop.xlane.xlu0 %1132
  %v1134 = vsel %vm83, %v1054, 0.0
  %1135 = vadd.xlane.f32.xlu0 %v1134
  %v1136 = vpop.xlane.xlu0 %1135
  %v1137 = vsel %vm83, %v1055, 0.0
  %1138 = vadd.xlane.f32.xlu0 %v1137
  %v1139 = vpop.xlane.xlu0 %1138
  %v1140 = vsel %vm83, %v1056, 0.0
  %1141 = vadd.xlane.f32.xlu0 %v1140
  %v1142 = vpop.xlane.xlu0 %1141
  %v1143 = vsel %vm83, %v1057, 0.0
  %1144 = vadd.xlane.f32.xlu0 %v1143
  %v1145 = vpop.xlane.xlu0 %1144
  %v1146 = vsel %vm83, %v1058, 0.0
  %1147 = vadd.xlane.f32.xlu0 %v1146
  %v1148 = vpop.xlane.xlu0 %1147
  %v1149 = vsel %vm83, %v1059, 0.0
  %1150 = vadd.xlane.f32.xlu0 %v1149
  %v1151 = vpop.xlane.xlu0 %1150
  %v1152 = vsel %vm83, %v1060, 0.0
  %1153 = vadd.xlane.f32.xlu0 %v1152
  %v1154 = vpop.xlane.xlu0 %1153
  %v1155 = vsel %vm83, %v1061, 0.0
  %1156 = vadd.xlane.f32.xlu0 %v1155
  %v1157 = vpop.xlane.xlu0 %1156
  %v1158 = vadd.f32 %v1064, 1e-12
  %v1159 = vadd.f32 %v1067, 1e-12
  %v1160 = vadd.f32 %v1070, 1e-12
  %v1161 = vadd.f32 %v1073, 1e-12
  %v1162 = vadd.f32 %v1076, 1e-12
  %v1163 = vadd.f32 %v1079, 1e-12
  %v1164 = vadd.f32 %v1082, 1e-12
  %v1165 = vadd.f32 %v1085, 1e-12
  %v1166 = vadd.f32 %v1088, 1e-12
  %v1167 = vadd.f32 %v1091, 1e-12
  %v1168 = vadd.f32 %v1094, 1e-12
  %v1169 = vadd.f32 %v1097, 1e-12
  %v1170 = vadd.f32 %v1100, 1e-12
  %v1171 = vadd.f32 %v1103, 1e-12
  %v1172 = vadd.f32 %v1106, 1e-12
  %v1173 = vadd.f32 %v1109, 1e-12
  %v1174 = vadd.f32 %v1112, 1e-12
  %v1175 = vadd.f32 %v1115, 1e-12
  %v1176 = vadd.f32 %v1118, 1e-12
  %v1177 = vadd.f32 %v1121, 1e-12
  %v1178 = vadd.f32 %v1124, 1e-12
  %v1179 = vadd.f32 %v1127, 1e-12
  %v1180 = vadd.f32 %v1130, 1e-12
  %v1181 = vadd.f32 %v1133, 1e-12
  %v1182 = vadd.f32 %v1136, 1e-12
  %v1183 = vadd.f32 %v1139, 1e-12
  %v1184 = vadd.f32 %v1142, 1e-12
  %v1185 = vadd.f32 %v1145, 1e-12
  %v1186 = vadd.f32 %v1148, 1e-12
  %v1187 = vadd.f32 %v1151, 1e-12
  %v1188 = vadd.f32 %v1154, 1e-12
  %v1189 = vadd.f32 %v1157, 1e-12
  %v1190 = vrsqrt.pop %v1158
  %v1191 = vmul.f32 %v1190, %v1158
  %v1192 = vmul.f32 %v1191, %v1190
  %v1193 = vmul.f32 0.5, %v1192
  %v1194 = vsub.f32 1.5, %v1193
  %v1195 = vmul.f32 %v1190, %v1194
  %vm1196 = vweird.f32 %v1158
  %vm1197 = vweird.f32 %v1190
  %vm1198 = vmor %vm1196, %vm1197
  %v1199 = vsel %vm1198, %v1190, %v1195
  %v1200 = vrsqrt.pop %v1159
  %v1201 = vmul.f32 %v1200, %v1159
  %v1202 = vmul.f32 %v1201, %v1200
  %v1203 = vmul.f32 0.5, %v1202
  %v1204 = vsub.f32 1.5, %v1203
  %v1205 = vmul.f32 %v1200, %v1204
  %vm1206 = vweird.f32 %v1159
  %vm1207 = vweird.f32 %v1200
  %vm1208 = vmor %vm1206, %vm1207
  %v1209 = vsel %vm1208, %v1200, %v1205
  %v1210 = vrsqrt.pop %v1160
  %v1211 = vmul.f32 %v1210, %v1160
  %v1212 = vmul.f32 %v1211, %v1210
  %v1213 = vmul.f32 0.5, %v1212
  %v1214 = vsub.f32 1.5, %v1213
  %v1215 = vmul.f32 %v1210, %v1214
  %vm1216 = vweird.f32 %v1160
  %vm1217 = vweird.f32 %v1210
  %vm1218 = vmor %vm1216, %vm1217
  %v1219 = vsel %vm1218, %v1210, %v1215
  %v1220 = vrsqrt.pop %v1161
  %v1221 = vmul.f32 %v1220, %v1161
  %v1222 = vmul.f32 %v1221, %v1220
  %v1223 = vmul.f32 0.5, %v1222
  %v1224 = vsub.f32 1.5, %v1223
  %v1225 = vmul.f32 %v1220, %v1224
  %vm1226 = vweird.f32 %v1161
  %vm1227 = vweird.f32 %v1220
  %vm1228 = vmor %vm1226, %vm1227
  %v1229 = vsel %vm1228, %v1220, %v1225
  %v1230 = vrsqrt.pop %v1162
  %v1231 = vmul.f32 %v1230, %v1162
  %v1232 = vmul.f32 %v1231, %v1230
  %v1233 = vmul.f32 0.5, %v1232
  %v1234 = vsub.f32 1.5, %v1233
  %v1235 = vmul.f32 %v1230, %v1234
  %vm1236 = vweird.f32 %v1162
  %vm1237 = vweird.f32 %v1230
  %vm1238 = vmor %vm1236, %vm1237
  %v1239 = vsel %vm1238, %v1230, %v1235
  %v1240 = vrsqrt.pop %v1163
  %v1241 = vmul.f32 %v1240, %v1163
  %v1242 = vmul.f32 %v1241, %v1240
  %v1243 = vmul.f32 0.5, %v1242
  %v1244 = vsub.f32 1.5, %v1243
  %v1245 = vmul.f32 %v1240, %v1244
  %vm1246 = vweird.f32 %v1163
  %vm1247 = vweird.f32 %v1240
  %vm1248 = vmor %vm1246, %vm1247
  %v1249 = vsel %vm1248, %v1240, %v1245
  %v1250 = vrsqrt.pop %v1164
  %v1251 = vmul.f32 %v1250, %v1164
  %v1252 = vmul.f32 %v1251, %v1250
  %v1253 = vmul.f32 0.5, %v1252
  %v1254 = vsub.f32 1.5, %v1253
  %v1255 = vmul.f32 %v1250, %v1254
  %vm1256 = vweird.f32 %v1164
  %vm1257 = vweird.f32 %v1250
  %vm1258 = vmor %vm1256, %vm1257
  %v1259 = vsel %vm1258, %v1250, %v1255
  %v1260 = vrsqrt.pop %v1165
  %v1261 = vmul.f32 %v1260, %v1165
  %v1262 = vmul.f32 %v1261, %v1260
  %v1263 = vmul.f32 0.5, %v1262
  %v1264 = vsub.f32 1.5, %v1263
  %v1265 = vmul.f32 %v1260, %v1264
  %vm1266 = vweird.f32 %v1165
  %vm1267 = vweird.f32 %v1260
  %vm1268 = vmor %vm1266, %vm1267
  %v1269 = vsel %vm1268, %v1260, %v1265
  %v1270 = vrsqrt.pop %v1166
  %v1271 = vmul.f32 %v1270, %v1166
  %v1272 = vmul.f32 %v1271, %v1270
  %v1273 = vmul.f32 0.5, %v1272
  %v1274 = vsub.f32 1.5, %v1273
  %v1275 = vmul.f32 %v1270, %v1274
  %vm1276 = vweird.f32 %v1166
  %vm1277 = vweird.f32 %v1270
  %vm1278 = vmor %vm1276, %vm1277
  %v1279 = vsel %vm1278, %v1270, %v1275
  %v1280 = vrsqrt.pop %v1167
  %v1281 = vmul.f32 %v1280, %v1167
  %v1282 = vmul.f32 %v1281, %v1280
  %v1283 = vmul.f32 0.5, %v1282
  %v1284 = vsub.f32 1.5, %v1283
  %v1285 = vmul.f32 %v1280, %v1284
  %vm1286 = vweird.f32 %v1167
  %vm1287 = vweird.f32 %v1280
  %vm1288 = vmor %vm1286, %vm1287
  %v1289 = vsel %vm1288, %v1280, %v1285
  %v1290 = vrsqrt.pop %v1168
  %v1291 = vmul.f32 %v1290, %v1168
  %v1292 = vmul.f32 %v1291, %v1290
  %v1293 = vmul.f32 0.5, %v1292
  %v1294 = vsub.f32 1.5, %v1293
  %v1295 = vmul.f32 %v1290, %v1294
  %vm1296 = vweird.f32 %v1168
  %vm1297 = vweird.f32 %v1290
  %vm1298 = vmor %vm1296, %vm1297
  %v1299 = vsel %vm1298, %v1290, %v1295
  %v1300 = vrsqrt.pop %v1169
  %v1301 = vmul.f32 %v1300, %v1169
  %v1302 = vmul.f32 %v1301, %v1300
  %v1303 = vmul.f32 0.5, %v1302
  %v1304 = vsub.f32 1.5, %v1303
  %v1305 = vmul.f32 %v1300, %v1304
  %vm1306 = vweird.f32 %v1169
  %vm1307 = vweird.f32 %v1300
  %vm1308 = vmor %vm1306, %vm1307
  %v1309 = vsel %vm1308, %v1300, %v1305
  %v1310 = vrsqrt.pop %v1170
  %v1311 = vmul.f32 %v1310, %v1170
  %v1312 = vmul.f32 %v1311, %v1310
  %v1313 = vmul.f32 0.5, %v1312
  %v1314 = vsub.f32 1.5, %v1313
  %v1315 = vmul.f32 %v1310, %v1314
  %vm1316 = vweird.f32 %v1170
  %vm1317 = vweird.f32 %v1310
  %vm1318 = vmor %vm1316, %vm1317
  %v1319 = vsel %vm1318, %v1310, %v1315
  %v1320 = vrsqrt.pop %v1171
  %v1321 = vmul.f32 %v1320, %v1171
  %v1322 = vmul.f32 %v1321, %v1320
  %v1323 = vmul.f32 0.5, %v1322
  %v1324 = vsub.f32 1.5, %v1323
  %v1325 = vmul.f32 %v1320, %v1324
  %vm1326 = vweird.f32 %v1171
  %vm1327 = vweird.f32 %v1320
  %vm1328 = vmor %vm1326, %vm1327
  %v1329 = vsel %vm1328, %v1320, %v1325
  %v1330 = vrsqrt.pop %v1172
  %v1331 = vmul.f32 %v1330, %v1172
  %v1332 = vmul.f32 %v1331, %v1330
  %v1333 = vmul.f32 0.5, %v1332
  %v1334 = vsub.f32 1.5, %v1333
  %v1335 = vmul.f32 %v1330, %v1334
  %vm1336 = vweird.f32 %v1172
  %vm1337 = vweird.f32 %v1330
  %vm1338 = vmor %vm1336, %vm1337
  %v1339 = vsel %vm1338, %v1330, %v1335
  %v1340 = vrsqrt.pop %v1173
  %v1341 = vmul.f32 %v1340, %v1173
  %v1342 = vmul.f32 %v1341, %v1340
  %v1343 = vmul.f32 0.5, %v1342
  %v1344 = vsub.f32 1.5, %v1343
  %v1345 = vmul.f32 %v1340, %v1344
  %vm1346 = vweird.f32 %v1173
  %vm1347 = vweird.f32 %v1340
  %vm1348 = vmor %vm1346, %vm1347
  %v1349 = vsel %vm1348, %v1340, %v1345
  %v1350 = vrsqrt.pop %v1174
  %v1351 = vmul.f32 %v1350, %v1174
  %v1352 = vmul.f32 %v1351, %v1350
  %v1353 = vmul.f32 0.5, %v1352
  %v1354 = vsub.f32 1.5, %v1353
  %v1355 = vmul.f32 %v1350, %v1354
  %vm1356 = vweird.f32 %v1174
  %vm1357 = vweird.f32 %v1350
  %vm1358 = vmor %vm1356, %vm1357
  %v1359 = vsel %vm1358, %v1350, %v1355
  %v1360 = vrsqrt.pop %v1175
  %v1361 = vmul.f32 %v1360, %v1175
  %v1362 = vmul.f32 %v1361, %v1360
  %v1363 = vmul.f32 0.5, %v1362
  %v1364 = vsub.f32 1.5, %v1363
  %v1365 = vmul.f32 %v1360, %v1364
  %vm1366 = vweird.f32 %v1175
  %vm1367 = vweird.f32 %v1360
  %vm1368 = vmor %vm1366, %vm1367
  %v1369 = vsel %vm1368, %v1360, %v1365
  %v1370 = vrsqrt.pop %v1176
  %v1371 = vmul.f32 %v1370, %v1176
  %v1372 = vmul.f32 %v1371, %v1370
  %v1373 = vmul.f32 0.5, %v1372
  %v1374 = vsub.f32 1.5, %v1373
  %v1375 = vmul.f32 %v1370, %v1374
  %vm1376 = vweird.f32 %v1176
  %vm1377 = vweird.f32 %v1370
  %vm1378 = vmor %vm1376, %vm1377
  %v1379 = vsel %vm1378, %v1370, %v1375
  %v1380 = vrsqrt.pop %v1177
  %v1381 = vmul.f32 %v1380, %v1177
  %v1382 = vmul.f32 %v1381, %v1380
  %v1383 = vmul.f32 0.5, %v1382
  %v1384 = vsub.f32 1.5, %v1383
  %v1385 = vmul.f32 %v1380, %v1384
  %vm1386 = vweird.f32 %v1177
  %vm1387 = vweird.f32 %v1380
  %vm1388 = vmor %vm1386, %vm1387
  %v1389 = vsel %vm1388, %v1380, %v1385
  %v1390 = vrsqrt.pop %v1178
  %v1391 = vmul.f32 %v1390, %v1178
  %v1392 = vmul.f32 %v1391, %v1390
  %v1393 = vmul.f32 0.5, %v1392
  %v1394 = vsub.f32 1.5, %v1393
  %v1395 = vmul.f32 %v1390, %v1394
  %vm1396 = vweird.f32 %v1178
  %vm1397 = vweird.f32 %v1390
  %vm1398 = vmor %vm1396, %vm1397
  %v1399 = vsel %vm1398, %v1390, %v1395
  %v1400 = vrsqrt.pop %v1179
  %v1401 = vmul.f32 %v1400, %v1179
  %v1402 = vmul.f32 %v1401, %v1400
  %v1403 = vmul.f32 0.5, %v1402
  %v1404 = vsub.f32 1.5, %v1403
  %v1405 = vmul.f32 %v1400, %v1404
  %vm1406 = vweird.f32 %v1179
  %vm1407 = vweird.f32 %v1400
  %vm1408 = vmor %vm1406, %vm1407
  %v1409 = vsel %vm1408, %v1400, %v1405
  %v1410 = vrsqrt.pop %v1180
  %v1411 = vmul.f32 %v1410, %v1180
  %v1412 = vmul.f32 %v1411, %v1410
  %v1413 = vmul.f32 0.5, %v1412
  %v1414 = vsub.f32 1.5, %v1413
  %v1415 = vmul.f32 %v1410, %v1414
  %vm1416 = vweird.f32 %v1180
  %vm1417 = vweird.f32 %v1410
  %vm1418 = vmor %vm1416, %vm1417
  %v1419 = vsel %vm1418, %v1410, %v1415
  %v1420 = vrsqrt.pop %v1181
  %v1421 = vmul.f32 %v1420, %v1181
  %v1422 = vmul.f32 %v1421, %v1420
  %v1423 = vmul.f32 0.5, %v1422
  %v1424 = vsub.f32 1.5, %v1423
  %v1425 = vmul.f32 %v1420, %v1424
  %vm1426 = vweird.f32 %v1181
  %vm1427 = vweird.f32 %v1420
  %vm1428 = vmor %vm1426, %vm1427
  %v1429 = vsel %vm1428, %v1420, %v1425
  %v1430 = vrsqrt.pop %v1182
  %v1431 = vmul.f32 %v1430, %v1182
  %v1432 = vmul.f32 %v1431, %v1430
  %v1433 = vmul.f32 0.5, %v1432
  %v1434 = vsub.f32 1.5, %v1433
  %v1435 = vmul.f32 %v1430, %v1434
  %vm1436 = vweird.f32 %v1182
  %vm1437 = vweird.f32 %v1430
  %vm1438 = vmor %vm1436, %vm1437
  %v1439 = vsel %vm1438, %v1430, %v1435
  %v1440 = vrsqrt.pop %v1183
  %v1441 = vmul.f32 %v1440, %v1183
  %v1442 = vmul.f32 %v1441, %v1440
  %v1443 = vmul.f32 0.5, %v1442
  %v1444 = vsub.f32 1.5, %v1443
  %v1445 = vmul.f32 %v1440, %v1444
  %vm1446 = vweird.f32 %v1183
  %vm1447 = vweird.f32 %v1440
  %vm1448 = vmor %vm1446, %vm1447
  %v1449 = vsel %vm1448, %v1440, %v1445
  %v1450 = vrsqrt.pop %v1184
  %v1451 = vmul.f32 %v1450, %v1184
  %v1452 = vmul.f32 %v1451, %v1450
  %v1453 = vmul.f32 0.5, %v1452
  %v1454 = vsub.f32 1.5, %v1453
  %v1455 = vmul.f32 %v1450, %v1454
  %vm1456 = vweird.f32 %v1184
  %vm1457 = vweird.f32 %v1450
  %vm1458 = vmor %vm1456, %vm1457
  %v1459 = vsel %vm1458, %v1450, %v1455
  %v1460 = vrsqrt.pop %v1185
  %v1461 = vmul.f32 %v1460, %v1185
  %v1462 = vmul.f32 %v1461, %v1460
  %v1463 = vmul.f32 0.5, %v1462
  %v1464 = vsub.f32 1.5, %v1463
  %v1465 = vmul.f32 %v1460, %v1464
  %vm1466 = vweird.f32 %v1185
  %vm1467 = vweird.f32 %v1460
  %vm1468 = vmor %vm1466, %vm1467
  %v1469 = vsel %vm1468, %v1460, %v1465
  %v1470 = vrsqrt.pop %v1186
  %v1471 = vmul.f32 %v1470, %v1186
  %v1472 = vmul.f32 %v1471, %v1470
  %v1473 = vmul.f32 0.5, %v1472
  %v1474 = vsub.f32 1.5, %v1473
  %v1475 = vmul.f32 %v1470, %v1474
  %vm1476 = vweird.f32 %v1186
  %vm1477 = vweird.f32 %v1470
  %vm1478 = vmor %vm1476, %vm1477
  %v1479 = vsel %vm1478, %v1470, %v1475
  %v1480 = vrsqrt.pop %v1187
  %v1481 = vmul.f32 %v1480, %v1187
  %v1482 = vmul.f32 %v1481, %v1480
  %v1483 = vmul.f32 0.5, %v1482
  %v1484 = vsub.f32 1.5, %v1483
  %v1485 = vmul.f32 %v1480, %v1484
  %vm1486 = vweird.f32 %v1187
  %vm1487 = vweird.f32 %v1480
  %vm1488 = vmor %vm1486, %vm1487
  %v1489 = vsel %vm1488, %v1480, %v1485
  %v1490 = vrsqrt.pop %v1188
  %v1491 = vmul.f32 %v1490, %v1188
  %v1492 = vmul.f32 %v1491, %v1490
  %v1493 = vmul.f32 0.5, %v1492
  %v1494 = vsub.f32 1.5, %v1493
  %v1495 = vmul.f32 %v1490, %v1494
  %vm1496 = vweird.f32 %v1188
  %vm1497 = vweird.f32 %v1490
  %vm1498 = vmor %vm1496, %vm1497
  %v1499 = vsel %vm1498, %v1490, %v1495
  %v1500 = vrsqrt.pop %v1189
  %v1501 = vmul.f32 %v1500, %v1189
  %v1502 = vmul.f32 %v1501, %v1500
  %v1503 = vmul.f32 0.5, %v1502
  %v1504 = vsub.f32 1.5, %v1503
  %v1505 = vmul.f32 %v1500, %v1504
  %vm1506 = vweird.f32 %v1189
  %vm1507 = vweird.f32 %v1500
  %vm1508 = vmor %vm1506, %vm1507
  %v1509 = vsel %vm1508, %v1500, %v1505
  %v1510 = vmul.f32 %v998, %v1199
  %v1511 = vmul.f32 %v999, %v1209
  %v1512 = vmul.f32 %v1000, %v1219
  %v1513 = vmul.f32 %v1001, %v1229
  %v1514 = vmul.f32 %v1002, %v1239
  %v1515 = vmul.f32 %v1003, %v1249
  %v1516 = vmul.f32 %v1004, %v1259
  %v1517 = vmul.f32 %v1005, %v1269
  %v1518 = vmul.f32 %v1006, %v1279
  %v1519 = vmul.f32 %v1007, %v1289
  %v1520 = vmul.f32 %v1008, %v1299
  %v1521 = vmul.f32 %v1009, %v1309
  %v1522 = vmul.f32 %v1010, %v1319
  %v1523 = vmul.f32 %v1011, %v1329
  %v1524 = vmul.f32 %v1012, %v1339
  %v1525 = vmul.f32 %v1013, %v1349
  %v1526 = vmul.f32 %v1014, %v1359
  %v1527 = vmul.f32 %v1015, %v1369
  %v1528 = vmul.f32 %v1016, %v1379
  %v1529 = vmul.f32 %v1017, %v1389
  %v1530 = vmul.f32 %v1018, %v1399
  %v1531 = vmul.f32 %v1019, %v1409
  %v1532 = vmul.f32 %v1020, %v1419
  %v1533 = vmul.f32 %v1021, %v1429
  %v1534 = vmul.f32 %v1022, %v1439
  %v1535 = vmul.f32 %v1023, %v1449
  %v1536 = vmul.f32 %v1024, %v1459
  %v1537 = vmul.f32 %v1025, %v1469
  %v1538 = vmul.f32 %v1026, %v1479
  %v1539 = vmul.f32 %v1027, %v1489
  %v1540 = vmul.f32 %v1028, %v1499
  %v1541 = vmul.f32 %v1029, %v1509
  %s1542 = scalar_lea.vmem %s1, 128
  %v1543 = vld [vmem:[%s1542] sm:$0xff]
  %v1544 = vld [vmem:[%s1542 + $0x8] sm:$0xff]
  %v1545 = vld [vmem:[%s1542 + $0x10] sm:$0xff]
  %v1546 = vld [vmem:[%s1542 + $0x18] sm:$0xff]
  %v1547 = vld [vmem:[%s1542 + $0x20] sm:$0xff]
  %v1548 = vld [vmem:[%s1542 + $0x28] sm:$0xff]
  %v1549 = vld [vmem:[%s1542 + $0x30] sm:$0xff]
  %v1550 = vld [vmem:[%s1542 + $0x38] sm:$0xff]
  %v1551 = vld [vmem:[%s1542 + $0x40] sm:$0xff]
  %v1552 = vld [vmem:[%s1542 + $0x48] sm:$0xff]
  %v1553 = vld [vmem:[%s1542 + $0x50] sm:$0xff]
  %v1554 = vld [vmem:[%s1542 + $0x58] sm:$0xff]
  %v1555 = vld [vmem:[%s1542 + $0x60] sm:$0xff]
  %v1556 = vld [vmem:[%s1542 + $0x68] sm:$0xff]
  %v1557 = vld [vmem:[%s1542 + $0x70] sm:$0xff]
  %v1558 = vld [vmem:[%s1542 + $0x78] sm:$0xff]
  %v1560 = vsel %vm83, %v1510, 0
  %v1563 = vsel %vm83, %v1511, 0
  %v1566 = vsel %vm83, %v1512, 0
  %v1569 = vsel %vm83, %v1513, 0
  %v1572 = vsel %vm83, %v1514, 0
  %v1575 = vsel %vm83, %v1515, 0
  %v1578 = vsel %vm83, %v1516, 0
  %v1581 = vsel %vm83, %v1517, 0
  %v1584 = vsel %vm83, %v1518, 0
  %v1587 = vsel %vm83, %v1519, 0
  %v1590 = vsel %vm83, %v1520, 0
  %v1593 = vsel %vm83, %v1521, 0
  %v1596 = vsel %vm83, %v1522, 0
  %v1599 = vsel %vm83, %v1523, 0
  %v1602 = vsel %vm83, %v1524, 0
  %v1605 = vsel %vm83, %v1525, 0
  %v1608 = vsel %vm83, %v1526, 0
  %v1611 = vsel %vm83, %v1527, 0
  %v1614 = vsel %vm83, %v1528, 0
  %v1617 = vsel %vm83, %v1529, 0
  %v1620 = vsel %vm83, %v1530, 0
  %v1623 = vsel %vm83, %v1531, 0
  %v1626 = vsel %vm83, %v1532, 0
  %v1629 = vsel %vm83, %v1533, 0
  %v1632 = vsel %vm83, %v1534, 0
  %v1635 = vsel %vm83, %v1535, 0
  %v1638 = vsel %vm83, %v1536, 0
  %v1641 = vsel %vm83, %v1537, 0
  %v1644 = vsel %vm83, %v1538, 0
  %v1647 = vsel %vm83, %v1539, 0
  %v1650 = vsel %vm83, %v1540, 0
  %v1653 = vsel %vm83, %v1541, 0
  %v1656 = vsel %vm83, %v1543, 0
  %v1659 = vsel %vm83, %v1544, 0
  %v1662 = vsel %vm83, %v1545, 0
  %v1665 = vsel %vm83, %v1546, 0
  %v1668 = vsel %vm83, %v1547, 0
  %v1671 = vsel %vm83, %v1548, 0
  %v1674 = vsel %vm83, %v1549, 0
  %v1677 = vsel %vm83, %v1550, 0
  %v1680 = vsel %vm83, %v1551, 0
  %v1683 = vsel %vm83, %v1552, 0
  %v1686 = vsel %vm83, %v1553, 0
  %v1689 = vsel %vm83, %v1554, 0
  %v1692 = vsel %vm83, %v1555, 0
  %v1695 = vsel %vm83, %v1556, 0
  %v1698 = vsel %vm83, %v1557, 0
  %v1701 = vsel %vm83, %v1558, 0
  %1703 = vmatpush.xpose.msra.mxu0 %v1701
  %1704 = vmatpush.xpose.msra.mxu0 %v1698
  %1705 = vmatpush.xpose.msra.mxu0 %v1695
  %1706 = vmatpush.xpose.msra.mxu0 %v1692
  %1707 = vmatpush.xpose.msra.mxu0 %v1689
  %1708 = vmatpush.xpose.msra.mxu0 %v1686
  %1709 = vmatpush.xpose.msra.mxu0 %v1683
  %1710 = vmatpush.xpose.msra.mxu0 %v1680
  %1711 = vmatpush.xpose.msra.mxu0 %v1677
  %1712 = vmatpush.xpose.msra.mxu0 %v1674
  %1713 = vmatpush.xpose.msra.mxu0 %v1671
  %1714 = vmatpush.xpose.msra.mxu0 %v1668
  %1715 = vmatpush.xpose.msra.mxu0 %v1665
  %1716 = vmatpush.xpose.msra.mxu0 %v1662
  %1717 = vmatpush.xpose.msra.mxu0 %v1659
  %1718 = vmatpush.xpose.msra.mxu0 %v1656
  %1719 = vmatmul.f32.gmra.mxu0 %v1560
  %v1720 = vpop.f32.mrf.mxu0
  %v1721 = vadd.f32 0.0, %v1720
  %1722 = vmatmul.f32.gmra.mxu0 %v1563
  %v1723 = vpop.f32.mrf.mxu0
  %v1724 = vadd.f32 0.0, %v1723
  %1725 = vmatmul.f32.gmra.mxu0 %v1566
  %v1726 = vpop.f32.mrf.mxu0
  %v1727 = vadd.f32 0.0, %v1726
  %1728 = vmatmul.f32.gmra.mxu0 %v1569
  %v1729 = vpop.f32.mrf.mxu0
  %v1730 = vadd.f32 0.0, %v1729
  %1731 = vmatmul.f32.gmra.mxu0 %v1572
  %v1732 = vpop.f32.mrf.mxu0
  %v1733 = vadd.f32 0.0, %v1732
  %1734 = vmatmul.f32.gmra.mxu0 %v1575
  %v1735 = vpop.f32.mrf.mxu0
  %v1736 = vadd.f32 0.0, %v1735
  %1737 = vmatmul.f32.gmra.mxu0 %v1578
  %v1738 = vpop.f32.mrf.mxu0
  %v1739 = vadd.f32 0.0, %v1738
  %1740 = vmatmul.f32.gmra.mxu0 %v1581
  %v1741 = vpop.f32.mrf.mxu0
  %v1742 = vadd.f32 0.0, %v1741
  %1743 = vmatmul.f32.gmra.mxu0 %v1584
  %v1744 = vpop.f32.mrf.mxu0
  %v1745 = vadd.f32 0.0, %v1744
  %1746 = vmatmul.f32.gmra.mxu0 %v1587
  %v1747 = vpop.f32.mrf.mxu0
  %v1748 = vadd.f32 0.0, %v1747
  %1749 = vmatmul.f32.gmra.mxu0 %v1590
  %v1750 = vpop.f32.mrf.mxu0
  %v1751 = vadd.f32 0.0, %v1750
  %1752 = vmatmul.f32.gmra.mxu0 %v1593
  %v1753 = vpop.f32.mrf.mxu0
  %v1754 = vadd.f32 0.0, %v1753
  %1755 = vmatmul.f32.gmra.mxu0 %v1596
  %v1756 = vpop.f32.mrf.mxu0
  %v1757 = vadd.f32 0.0, %v1756
  %1758 = vmatmul.f32.gmra.mxu0 %v1599
  %v1759 = vpop.f32.mrf.mxu0
  %v1760 = vadd.f32 0.0, %v1759
  %1761 = vmatmul.f32.gmra.mxu0 %v1602
  %v1762 = vpop.f32.mrf.mxu0
  %v1763 = vadd.f32 0.0, %v1762
  %1764 = vmatmul.f32.gmra.mxu0 %v1605
  %v1765 = vpop.f32.mrf.mxu0
  %v1766 = vadd.f32 0.0, %v1765
  %1767 = vmatmul.f32.gmra.mxu0 %v1608
  %v1768 = vpop.f32.mrf.mxu0
  %v1769 = vadd.f32 0.0, %v1768
  %1770 = vmatmul.f32.gmra.mxu0 %v1611
  %v1771 = vpop.f32.mrf.mxu0
  %v1772 = vadd.f32 0.0, %v1771
  %1773 = vmatmul.f32.gmra.mxu0 %v1614
  %v1774 = vpop.f32.mrf.mxu0
  %v1775 = vadd.f32 0.0, %v1774
  %1776 = vmatmul.f32.gmra.mxu0 %v1617
  %v1777 = vpop.f32.mrf.mxu0
  %v1778 = vadd.f32 0.0, %v1777
  %1779 = vmatmul.f32.gmra.mxu0 %v1620
  %v1780 = vpop.f32.mrf.mxu0
  %v1781 = vadd.f32 0.0, %v1780
  %1782 = vmatmul.f32.gmra.mxu0 %v1623
  %v1783 = vpop.f32.mrf.mxu0
  %v1784 = vadd.f32 0.0, %v1783
  %1785 = vmatmul.f32.gmra.mxu0 %v1626
  %v1786 = vpop.f32.mrf.mxu0
  %v1787 = vadd.f32 0.0, %v1786
  %1788 = vmatmul.f32.gmra.mxu0 %v1629
  %v1789 = vpop.f32.mrf.mxu0
  %v1790 = vadd.f32 0.0, %v1789
  %1791 = vmatmul.f32.gmra.mxu0 %v1632
  %v1792 = vpop.f32.mrf.mxu0
  %v1793 = vadd.f32 0.0, %v1792
  %1794 = vmatmul.f32.gmra.mxu0 %v1635
  %v1795 = vpop.f32.mrf.mxu0
  %v1796 = vadd.f32 0.0, %v1795
  %1797 = vmatmul.f32.gmra.mxu0 %v1638
  %v1798 = vpop.f32.mrf.mxu0
  %v1799 = vadd.f32 0.0, %v1798
  %1800 = vmatmul.f32.gmra.mxu0 %v1641
  %v1801 = vpop.f32.mrf.mxu0
  %v1802 = vadd.f32 0.0, %v1801
  %1803 = vmatmul.f32.gmra.mxu0 %v1644
  %v1804 = vpop.f32.mrf.mxu0
  %v1805 = vadd.f32 0.0, %v1804
  %1806 = vmatmul.f32.gmra.mxu0 %v1647
  %v1807 = vpop.f32.mrf.mxu0
  %v1808 = vadd.f32 0.0, %v1807
  %1809 = vmatmul.f32.gmra.mxu0 %v1650
  %v1810 = vpop.f32.mrf.mxu0
  %v1811 = vadd.f32 0.0, %v1810
  %1812 = vmatmul.f32.gmra.mxu0 %v1653
  %v1813 = vpop.f32.mrf.mxu0
  %v1814 = vadd.f32 0.0, %v1813
  %1815 = vdwg.mxu0
  %1816 = vmax.xlane.f32.xlu0 %v1721
  %v1817 = vpop.xlane.xlu0 %1816
  %1818 = vmax.xlane.f32.xlu0 %v1724
  %v1819 = vpop.xlane.xlu0 %1818
  %1820 = vmax.xlane.f32.xlu0 %v1727
  %v1821 = vpop.xlane.xlu0 %1820
  %1822 = vmax.xlane.f32.xlu0 %v1730
  %v1823 = vpop.xlane.xlu0 %1822
  %1824 = vmax.xlane.f32.xlu0 %v1733
  %v1825 = vpop.xlane.xlu0 %1824
  %1826 = vmax.xlane.f32.xlu0 %v1736
  %v1827 = vpop.xlane.xlu0 %1826
  %1828 = vmax.xlane.f32.xlu0 %v1739
  %v1829 = vpop.xlane.xlu0 %1828
  %1830 = vmax.xlane.f32.xlu0 %v1742
  %v1831 = vpop.xlane.xlu0 %1830
  %1832 = vmax.xlane.f32.xlu0 %v1745
  %v1833 = vpop.xlane.xlu0 %1832
  %1834 = vmax.xlane.f32.xlu0 %v1748
  %v1835 = vpop.xlane.xlu0 %1834
  %1836 = vmax.xlane.f32.xlu0 %v1751
  %v1837 = vpop.xlane.xlu0 %1836
  %1838 = vmax.xlane.f32.xlu0 %v1754
  %v1839 = vpop.xlane.xlu0 %1838
  %1840 = vmax.xlane.f32.xlu0 %v1757
  %v1841 = vpop.xlane.xlu0 %1840
  %1842 = vmax.xlane.f32.xlu0 %v1760
  %v1843 = vpop.xlane.xlu0 %1842
  %1844 = vmax.xlane.f32.xlu0 %v1763
  %v1845 = vpop.xlane.xlu0 %1844
  %1846 = vmax.xlane.f32.xlu0 %v1766
  %v1847 = vpop.xlane.xlu0 %1846
  %1848 = vmax.xlane.f32.xlu0 %v1769
  %v1849 = vpop.xlane.xlu0 %1848
  %1850 = vmax.xlane.f32.xlu0 %v1772
  %v1851 = vpop.xlane.xlu0 %1850
  %1852 = vmax.xlane.f32.xlu0 %v1775
  %v1853 = vpop.xlane.xlu0 %1852
  %1854 = vmax.xlane.f32.xlu0 %v1778
  %v1855 = vpop.xlane.xlu0 %1854
  %1856 = vmax.xlane.f32.xlu0 %v1781
  %v1857 = vpop.xlane.xlu0 %1856
  %1858 = vmax.xlane.f32.xlu0 %v1784
  %v1859 = vpop.xlane.xlu0 %1858
  %1860 = vmax.xlane.f32.xlu0 %v1787
  %v1861 = vpop.xlane.xlu0 %1860
  %1862 = vmax.xlane.f32.xlu0 %v1790
  %v1863 = vpop.xlane.xlu0 %1862
  %1864 = vmax.xlane.f32.xlu0 %v1793
  %v1865 = vpop.xlane.xlu0 %1864
  %1866 = vmax.xlane.f32.xlu0 %v1796
  %v1867 = vpop.xlane.xlu0 %1866
  %1868 = vmax.xlane.f32.xlu0 %v1799
  %v1869 = vpop.xlane.xlu0 %1868
  %1870 = vmax.xlane.f32.xlu0 %v1802
  %v1871 = vpop.xlane.xlu0 %1870
  %1872 = vmax.xlane.f32.xlu0 %v1805
  %v1873 = vpop.xlane.xlu0 %1872
  %1874 = vmax.xlane.f32.xlu0 %v1808
  %v1875 = vpop.xlane.xlu0 %1874
  %1876 = vmax.xlane.f32.xlu0 %v1811
  %v1877 = vpop.xlane.xlu0 %1876
  %1878 = vmax.xlane.f32.xlu0 %v1814
  %v1879 = vpop.xlane.xlu0 %1878
  %v1880 = vsub.f32 1.0, %v1817
  %v1881 = vsub.f32 1.0, %v1819
  %v1882 = vsub.f32 1.0, %v1821
  %v1883 = vsub.f32 1.0, %v1823
  %v1884 = vsub.f32 1.0, %v1825
  %v1885 = vsub.f32 1.0, %v1827
  %v1886 = vsub.f32 1.0, %v1829
  %v1887 = vsub.f32 1.0, %v1831
  %v1888 = vsub.f32 1.0, %v1833
  %v1889 = vsub.f32 1.0, %v1835
  %v1890 = vsub.f32 1.0, %v1837
  %v1891 = vsub.f32 1.0, %v1839
  %v1892 = vsub.f32 1.0, %v1841
  %v1893 = vsub.f32 1.0, %v1843
  %v1894 = vsub.f32 1.0, %v1845
  %v1895 = vsub.f32 1.0, %v1847
  %v1896 = vsub.f32 1.0, %v1849
  %v1897 = vsub.f32 1.0, %v1851
  %v1898 = vsub.f32 1.0, %v1853
  %v1899 = vsub.f32 1.0, %v1855
  %v1900 = vsub.f32 1.0, %v1857
  %v1901 = vsub.f32 1.0, %v1859
  %v1902 = vsub.f32 1.0, %v1861
  %v1903 = vsub.f32 1.0, %v1863
  %v1904 = vsub.f32 1.0, %v1865
  %v1905 = vsub.f32 1.0, %v1867
  %v1906 = vsub.f32 1.0, %v1869
  %v1907 = vsub.f32 1.0, %v1871
  %v1908 = vsub.f32 1.0, %v1873
  %v1909 = vsub.f32 1.0, %v1875
  %v1910 = vsub.f32 1.0, %v1877
  %v1911 = vsub.f32 1.0, %v1879
  %v1912 = vmul.f32 %v1880, 0.16666667
  %v1913 = vmul.f32 %v1881, 0.16666667
  %v1914 = vmul.f32 %v1882, 0.16666667
  %v1915 = vmul.f32 %v1883, 0.16666667
  %v1916 = vmul.f32 %v1884, 0.16666667
  %v1917 = vmul.f32 %v1885, 0.16666667
  %v1918 = vmul.f32 %v1886, 0.16666667
  %v1919 = vmul.f32 %v1887, 0.16666667
  %v1920 = vmul.f32 %v1888, 0.16666667
  %v1921 = vmul.f32 %v1889, 0.16666667
  %v1922 = vmul.f32 %v1890, 0.16666667
  %v1923 = vmul.f32 %v1891, 0.16666667
  %v1924 = vmul.f32 %v1892, 0.16666667
  %v1925 = vmul.f32 %v1893, 0.16666667
  %v1926 = vmul.f32 %v1894, 0.16666667
  %v1927 = vmul.f32 %v1895, 0.16666667
  %v1928 = vmul.f32 %v1896, 0.16666667
  %v1929 = vmul.f32 %v1897, 0.16666667
  %v1930 = vmul.f32 %v1898, 0.16666667
  %v1931 = vmul.f32 %v1899, 0.16666667
  %v1932 = vmul.f32 %v1900, 0.16666667
  %v1933 = vmul.f32 %v1901, 0.16666667
  %v1934 = vmul.f32 %v1902, 0.16666667
  %v1935 = vmul.f32 %v1903, 0.16666667
  %v1936 = vmul.f32 %v1904, 0.16666667
  %v1937 = vmul.f32 %v1905, 0.16666667
  %v1938 = vmul.f32 %v1906, 0.16666667
  %v1939 = vmul.f32 %v1907, 0.16666667
  %v1940 = vmul.f32 %v1908, 0.16666667
  %v1941 = vmul.f32 %v1909, 0.16666667
  %v1942 = vmul.f32 %v1910, 0.16666667
  %v1943 = vmul.f32 %v1911, 0.16666667
  %v1944 = vadd.f32 %v965, %v1912
  %v1945 = vadd.f32 %v966, %v1913
  %v1946 = vadd.f32 %v967, %v1914
  %v1947 = vadd.f32 %v968, %v1915
  %v1948 = vadd.f32 %v969, %v1916
  %v1949 = vadd.f32 %v970, %v1917
  %v1950 = vadd.f32 %v971, %v1918
  %v1951 = vadd.f32 %v972, %v1919
  %v1952 = vadd.f32 %v973, %v1920
  %v1953 = vadd.f32 %v974, %v1921
  %v1954 = vadd.f32 %v975, %v1922
  %v1955 = vadd.f32 %v976, %v1923
  %v1956 = vadd.f32 %v977, %v1924
  %v1957 = vadd.f32 %v978, %v1925
  %v1958 = vadd.f32 %v979, %v1926
  %v1959 = vadd.f32 %v980, %v1927
  %v1960 = vadd.f32 %v981, %v1928
  %v1961 = vadd.f32 %v982, %v1929
  %v1962 = vadd.f32 %v983, %v1930
  %v1963 = vadd.f32 %v984, %v1931
  %v1964 = vadd.f32 %v985, %v1932
  %v1965 = vadd.f32 %v986, %v1933
  %v1966 = vadd.f32 %v987, %v1934
  %v1967 = vadd.f32 %v988, %v1935
  %v1968 = vadd.f32 %v989, %v1936
  %v1969 = vadd.f32 %v990, %v1937
  %v1970 = vadd.f32 %v991, %v1938
  %v1971 = vadd.f32 %v992, %v1939
  %v1972 = vadd.f32 %v993, %v1940
  %v1973 = vadd.f32 %v994, %v1941
  %v1974 = vadd.f32 %v995, %v1942
  %v1975 = vadd.f32 %v996, %v1943
  %s1976 = scalar_lea.vmem %s0, 512
  %v1977 = vld [vmem:[%s1976] sm:$0xff]
  %v1978 = vld [vmem:[%s1976 + $0x8] sm:$0xff]
  %v1979 = vld [vmem:[%s1976 + $0x10] sm:$0xff]
  %v1980 = vld [vmem:[%s1976 + $0x18] sm:$0xff]
  %v1981 = vld [vmem:[%s1976 + $0x20] sm:$0xff]
  %v1982 = vld [vmem:[%s1976 + $0x28] sm:$0xff]
  %v1983 = vld [vmem:[%s1976 + $0x30] sm:$0xff]
  %v1984 = vld [vmem:[%s1976 + $0x38] sm:$0xff]
  %v1985 = vld [vmem:[%s1976 + $0x40] sm:$0xff]
  %v1986 = vld [vmem:[%s1976 + $0x48] sm:$0xff]
  %v1987 = vld [vmem:[%s1976 + $0x50] sm:$0xff]
  %v1988 = vld [vmem:[%s1976 + $0x58] sm:$0xff]
  %v1989 = vld [vmem:[%s1976 + $0x60] sm:$0xff]
  %v1990 = vld [vmem:[%s1976 + $0x68] sm:$0xff]
  %v1991 = vld [vmem:[%s1976 + $0x70] sm:$0xff]
  %v1992 = vld [vmem:[%s1976 + $0x78] sm:$0xff]
  %v1993 = vld [vmem:[%s1976 + $0x80] sm:$0xff]
  %v1994 = vld [vmem:[%s1976 + $0x88] sm:$0xff]
  %v1995 = vld [vmem:[%s1976 + $0x90] sm:$0xff]
  %v1996 = vld [vmem:[%s1976 + $0x98] sm:$0xff]
  %v1997 = vld [vmem:[%s1976 + $0xa0] sm:$0xff]
  %v1998 = vld [vmem:[%s1976 + $0xa8] sm:$0xff]
  %v1999 = vld [vmem:[%s1976 + $0xb0] sm:$0xff]
  %v2000 = vld [vmem:[%s1976 + $0xb8] sm:$0xff]
  %v2001 = vld [vmem:[%s1976 + $0xc0] sm:$0xff]
  %v2002 = vld [vmem:[%s1976 + $0xc8] sm:$0xff]
  %v2003 = vld [vmem:[%s1976 + $0xd0] sm:$0xff]
  %v2004 = vld [vmem:[%s1976 + $0xd8] sm:$0xff]
  %v2005 = vld [vmem:[%s1976 + $0xe0] sm:$0xff]
  %v2006 = vld [vmem:[%s1976 + $0xe8] sm:$0xff]
  %v2007 = vld [vmem:[%s1976 + $0xf0] sm:$0xff]
  %v2008 = vld [vmem:[%s1976 + $0xf8] sm:$0xff]
  %v2009 = vmul.f32 %v1977, %v1977
  %v2010 = vmul.f32 %v1978, %v1978
  %v2011 = vmul.f32 %v1979, %v1979
  %v2012 = vmul.f32 %v1980, %v1980
  %v2013 = vmul.f32 %v1981, %v1981
  %v2014 = vmul.f32 %v1982, %v1982
  %v2015 = vmul.f32 %v1983, %v1983
  %v2016 = vmul.f32 %v1984, %v1984
  %v2017 = vmul.f32 %v1985, %v1985
  %v2018 = vmul.f32 %v1986, %v1986
  %v2019 = vmul.f32 %v1987, %v1987
  %v2020 = vmul.f32 %v1988, %v1988
  %v2021 = vmul.f32 %v1989, %v1989
  %v2022 = vmul.f32 %v1990, %v1990
  %v2023 = vmul.f32 %v1991, %v1991
  %v2024 = vmul.f32 %v1992, %v1992
  %v2025 = vmul.f32 %v1993, %v1993
  %v2026 = vmul.f32 %v1994, %v1994
  %v2027 = vmul.f32 %v1995, %v1995
  %v2028 = vmul.f32 %v1996, %v1996
  %v2029 = vmul.f32 %v1997, %v1997
  %v2030 = vmul.f32 %v1998, %v1998
  %v2031 = vmul.f32 %v1999, %v1999
  %v2032 = vmul.f32 %v2000, %v2000
  %v2033 = vmul.f32 %v2001, %v2001
  %v2034 = vmul.f32 %v2002, %v2002
  %v2035 = vmul.f32 %v2003, %v2003
  %v2036 = vmul.f32 %v2004, %v2004
  %v2037 = vmul.f32 %v2005, %v2005
  %v2038 = vmul.f32 %v2006, %v2006
  %v2039 = vmul.f32 %v2007, %v2007
  %v2040 = vmul.f32 %v2008, %v2008
  %v2041 = vsel %vm83, %v2009, 0.0
  %2042 = vadd.xlane.f32.xlu0 %v2041
  %v2043 = vpop.xlane.xlu0 %2042
  %v2044 = vsel %vm83, %v2010, 0.0
  %2045 = vadd.xlane.f32.xlu0 %v2044
  %v2046 = vpop.xlane.xlu0 %2045
  %v2047 = vsel %vm83, %v2011, 0.0
  %2048 = vadd.xlane.f32.xlu0 %v2047
  %v2049 = vpop.xlane.xlu0 %2048
  %v2050 = vsel %vm83, %v2012, 0.0
  %2051 = vadd.xlane.f32.xlu0 %v2050
  %v2052 = vpop.xlane.xlu0 %2051
  %v2053 = vsel %vm83, %v2013, 0.0
  %2054 = vadd.xlane.f32.xlu0 %v2053
  %v2055 = vpop.xlane.xlu0 %2054
  %v2056 = vsel %vm83, %v2014, 0.0
  %2057 = vadd.xlane.f32.xlu0 %v2056
  %v2058 = vpop.xlane.xlu0 %2057
  %v2059 = vsel %vm83, %v2015, 0.0
  %2060 = vadd.xlane.f32.xlu0 %v2059
  %v2061 = vpop.xlane.xlu0 %2060
  %v2062 = vsel %vm83, %v2016, 0.0
  %2063 = vadd.xlane.f32.xlu0 %v2062
  %v2064 = vpop.xlane.xlu0 %2063
  %v2065 = vsel %vm83, %v2017, 0.0
  %2066 = vadd.xlane.f32.xlu0 %v2065
  %v2067 = vpop.xlane.xlu0 %2066
  %v2068 = vsel %vm83, %v2018, 0.0
  %2069 = vadd.xlane.f32.xlu0 %v2068
  %v2070 = vpop.xlane.xlu0 %2069
  %v2071 = vsel %vm83, %v2019, 0.0
  %2072 = vadd.xlane.f32.xlu0 %v2071
  %v2073 = vpop.xlane.xlu0 %2072
  %v2074 = vsel %vm83, %v2020, 0.0
  %2075 = vadd.xlane.f32.xlu0 %v2074
  %v2076 = vpop.xlane.xlu0 %2075
  %v2077 = vsel %vm83, %v2021, 0.0
  %2078 = vadd.xlane.f32.xlu0 %v2077
  %v2079 = vpop.xlane.xlu0 %2078
  %v2080 = vsel %vm83, %v2022, 0.0
  %2081 = vadd.xlane.f32.xlu0 %v2080
  %v2082 = vpop.xlane.xlu0 %2081
  %v2083 = vsel %vm83, %v2023, 0.0
  %2084 = vadd.xlane.f32.xlu0 %v2083
  %v2085 = vpop.xlane.xlu0 %2084
  %v2086 = vsel %vm83, %v2024, 0.0
  %2087 = vadd.xlane.f32.xlu0 %v2086
  %v2088 = vpop.xlane.xlu0 %2087
  %v2089 = vsel %vm83, %v2025, 0.0
  %2090 = vadd.xlane.f32.xlu0 %v2089
  %v2091 = vpop.xlane.xlu0 %2090
  %v2092 = vsel %vm83, %v2026, 0.0
  %2093 = vadd.xlane.f32.xlu0 %v2092
  %v2094 = vpop.xlane.xlu0 %2093
  %v2095 = vsel %vm83, %v2027, 0.0
  %2096 = vadd.xlane.f32.xlu0 %v2095
  %v2097 = vpop.xlane.xlu0 %2096
  %v2098 = vsel %vm83, %v2028, 0.0
  %2099 = vadd.xlane.f32.xlu0 %v2098
  %v2100 = vpop.xlane.xlu0 %2099
  %v2101 = vsel %vm83, %v2029, 0.0
  %2102 = vadd.xlane.f32.xlu0 %v2101
  %v2103 = vpop.xlane.xlu0 %2102
  %v2104 = vsel %vm83, %v2030, 0.0
  %2105 = vadd.xlane.f32.xlu0 %v2104
  %v2106 = vpop.xlane.xlu0 %2105
  %v2107 = vsel %vm83, %v2031, 0.0
  %2108 = vadd.xlane.f32.xlu0 %v2107
  %v2109 = vpop.xlane.xlu0 %2108
  %v2110 = vsel %vm83, %v2032, 0.0
  %2111 = vadd.xlane.f32.xlu0 %v2110
  %v2112 = vpop.xlane.xlu0 %2111
  %v2113 = vsel %vm83, %v2033, 0.0
  %2114 = vadd.xlane.f32.xlu0 %v2113
  %v2115 = vpop.xlane.xlu0 %2114
  %v2116 = vsel %vm83, %v2034, 0.0
  %2117 = vadd.xlane.f32.xlu0 %v2116
  %v2118 = vpop.xlane.xlu0 %2117
  %v2119 = vsel %vm83, %v2035, 0.0
  %2120 = vadd.xlane.f32.xlu0 %v2119
  %v2121 = vpop.xlane.xlu0 %2120
  %v2122 = vsel %vm83, %v2036, 0.0
  %2123 = vadd.xlane.f32.xlu0 %v2122
  %v2124 = vpop.xlane.xlu0 %2123
  %v2125 = vsel %vm83, %v2037, 0.0
  %2126 = vadd.xlane.f32.xlu0 %v2125
  %v2127 = vpop.xlane.xlu0 %2126
  %v2128 = vsel %vm83, %v2038, 0.0
  %2129 = vadd.xlane.f32.xlu0 %v2128
  %v2130 = vpop.xlane.xlu0 %2129
  %v2131 = vsel %vm83, %v2039, 0.0
  %2132 = vadd.xlane.f32.xlu0 %v2131
  %v2133 = vpop.xlane.xlu0 %2132
  %v2134 = vsel %vm83, %v2040, 0.0
  %2135 = vadd.xlane.f32.xlu0 %v2134
  %v2136 = vpop.xlane.xlu0 %2135
  %v2137 = vadd.f32 %v2043, 1e-12
  %v2138 = vadd.f32 %v2046, 1e-12
  %v2139 = vadd.f32 %v2049, 1e-12
  %v2140 = vadd.f32 %v2052, 1e-12
  %v2141 = vadd.f32 %v2055, 1e-12
  %v2142 = vadd.f32 %v2058, 1e-12
  %v2143 = vadd.f32 %v2061, 1e-12
  %v2144 = vadd.f32 %v2064, 1e-12
  %v2145 = vadd.f32 %v2067, 1e-12
  %v2146 = vadd.f32 %v2070, 1e-12
  %v2147 = vadd.f32 %v2073, 1e-12
  %v2148 = vadd.f32 %v2076, 1e-12
  %v2149 = vadd.f32 %v2079, 1e-12
  %v2150 = vadd.f32 %v2082, 1e-12
  %v2151 = vadd.f32 %v2085, 1e-12
  %v2152 = vadd.f32 %v2088, 1e-12
  %v2153 = vadd.f32 %v2091, 1e-12
  %v2154 = vadd.f32 %v2094, 1e-12
  %v2155 = vadd.f32 %v2097, 1e-12
  %v2156 = vadd.f32 %v2100, 1e-12
  %v2157 = vadd.f32 %v2103, 1e-12
  %v2158 = vadd.f32 %v2106, 1e-12
  %v2159 = vadd.f32 %v2109, 1e-12
  %v2160 = vadd.f32 %v2112, 1e-12
  %v2161 = vadd.f32 %v2115, 1e-12
  %v2162 = vadd.f32 %v2118, 1e-12
  %v2163 = vadd.f32 %v2121, 1e-12
  %v2164 = vadd.f32 %v2124, 1e-12
  %v2165 = vadd.f32 %v2127, 1e-12
  %v2166 = vadd.f32 %v2130, 1e-12
  %v2167 = vadd.f32 %v2133, 1e-12
  %v2168 = vadd.f32 %v2136, 1e-12
  %v2169 = vrsqrt.pop %v2137
  %v2170 = vmul.f32 %v2169, %v2137
  %v2171 = vmul.f32 %v2170, %v2169
  %v2172 = vmul.f32 0.5, %v2171
  %v2173 = vsub.f32 1.5, %v2172
  %v2174 = vmul.f32 %v2169, %v2173
  %vm2175 = vweird.f32 %v2137
  %vm2176 = vweird.f32 %v2169
  %vm2177 = vmor %vm2175, %vm2176
  %v2178 = vsel %vm2177, %v2169, %v2174
  %v2179 = vrsqrt.pop %v2138
  %v2180 = vmul.f32 %v2179, %v2138
  %v2181 = vmul.f32 %v2180, %v2179
  %v2182 = vmul.f32 0.5, %v2181
  %v2183 = vsub.f32 1.5, %v2182
  %v2184 = vmul.f32 %v2179, %v2183
  %vm2185 = vweird.f32 %v2138
  %vm2186 = vweird.f32 %v2179
  %vm2187 = vmor %vm2185, %vm2186
  %v2188 = vsel %vm2187, %v2179, %v2184
  %v2189 = vrsqrt.pop %v2139
  %v2190 = vmul.f32 %v2189, %v2139
  %v2191 = vmul.f32 %v2190, %v2189
  %v2192 = vmul.f32 0.5, %v2191
  %v2193 = vsub.f32 1.5, %v2192
  %v2194 = vmul.f32 %v2189, %v2193
  %vm2195 = vweird.f32 %v2139
  %vm2196 = vweird.f32 %v2189
  %vm2197 = vmor %vm2195, %vm2196
  %v2198 = vsel %vm2197, %v2189, %v2194
  %v2199 = vrsqrt.pop %v2140
  %v2200 = vmul.f32 %v2199, %v2140
  %v2201 = vmul.f32 %v2200, %v2199
  %v2202 = vmul.f32 0.5, %v2201
  %v2203 = vsub.f32 1.5, %v2202
  %v2204 = vmul.f32 %v2199, %v2203
  %vm2205 = vweird.f32 %v2140
  %vm2206 = vweird.f32 %v2199
  %vm2207 = vmor %vm2205, %vm2206
  %v2208 = vsel %vm2207, %v2199, %v2204
  %v2209 = vrsqrt.pop %v2141
  %v2210 = vmul.f32 %v2209, %v2141
  %v2211 = vmul.f32 %v2210, %v2209
  %v2212 = vmul.f32 0.5, %v2211
  %v2213 = vsub.f32 1.5, %v2212
  %v2214 = vmul.f32 %v2209, %v2213
  %vm2215 = vweird.f32 %v2141
  %vm2216 = vweird.f32 %v2209
  %vm2217 = vmor %vm2215, %vm2216
  %v2218 = vsel %vm2217, %v2209, %v2214
  %v2219 = vrsqrt.pop %v2142
  %v2220 = vmul.f32 %v2219, %v2142
  %v2221 = vmul.f32 %v2220, %v2219
  %v2222 = vmul.f32 0.5, %v2221
  %v2223 = vsub.f32 1.5, %v2222
  %v2224 = vmul.f32 %v2219, %v2223
  %vm2225 = vweird.f32 %v2142
  %vm2226 = vweird.f32 %v2219
  %vm2227 = vmor %vm2225, %vm2226
  %v2228 = vsel %vm2227, %v2219, %v2224
  %v2229 = vrsqrt.pop %v2143
  %v2230 = vmul.f32 %v2229, %v2143
  %v2231 = vmul.f32 %v2230, %v2229
  %v2232 = vmul.f32 0.5, %v2231
  %v2233 = vsub.f32 1.5, %v2232
  %v2234 = vmul.f32 %v2229, %v2233
  %vm2235 = vweird.f32 %v2143
  %vm2236 = vweird.f32 %v2229
  %vm2237 = vmor %vm2235, %vm2236
  %v2238 = vsel %vm2237, %v2229, %v2234
  %v2239 = vrsqrt.pop %v2144
  %v2240 = vmul.f32 %v2239, %v2144
  %v2241 = vmul.f32 %v2240, %v2239
  %v2242 = vmul.f32 0.5, %v2241
  %v2243 = vsub.f32 1.5, %v2242
  %v2244 = vmul.f32 %v2239, %v2243
  %vm2245 = vweird.f32 %v2144
  %vm2246 = vweird.f32 %v2239
  %vm2247 = vmor %vm2245, %vm2246
  %v2248 = vsel %vm2247, %v2239, %v2244
  %v2249 = vrsqrt.pop %v2145
  %v2250 = vmul.f32 %v2249, %v2145
  %v2251 = vmul.f32 %v2250, %v2249
  %v2252 = vmul.f32 0.5, %v2251
  %v2253 = vsub.f32 1.5, %v2252
  %v2254 = vmul.f32 %v2249, %v2253
  %vm2255 = vweird.f32 %v2145
  %vm2256 = vweird.f32 %v2249
  %vm2257 = vmor %vm2255, %vm2256
  %v2258 = vsel %vm2257, %v2249, %v2254
  %v2259 = vrsqrt.pop %v2146
  %v2260 = vmul.f32 %v2259, %v2146
  %v2261 = vmul.f32 %v2260, %v2259
  %v2262 = vmul.f32 0.5, %v2261
  %v2263 = vsub.f32 1.5, %v2262
  %v2264 = vmul.f32 %v2259, %v2263
  %vm2265 = vweird.f32 %v2146
  %vm2266 = vweird.f32 %v2259
  %vm2267 = vmor %vm2265, %vm2266
  %v2268 = vsel %vm2267, %v2259, %v2264
  %v2269 = vrsqrt.pop %v2147
  %v2270 = vmul.f32 %v2269, %v2147
  %v2271 = vmul.f32 %v2270, %v2269
  %v2272 = vmul.f32 0.5, %v2271
  %v2273 = vsub.f32 1.5, %v2272
  %v2274 = vmul.f32 %v2269, %v2273
  %vm2275 = vweird.f32 %v2147
  %vm2276 = vweird.f32 %v2269
  %vm2277 = vmor %vm2275, %vm2276
  %v2278 = vsel %vm2277, %v2269, %v2274
  %v2279 = vrsqrt.pop %v2148
  %v2280 = vmul.f32 %v2279, %v2148
  %v2281 = vmul.f32 %v2280, %v2279
  %v2282 = vmul.f32 0.5, %v2281
  %v2283 = vsub.f32 1.5, %v2282
  %v2284 = vmul.f32 %v2279, %v2283
  %vm2285 = vweird.f32 %v2148
  %vm2286 = vweird.f32 %v2279
  %vm2287 = vmor %vm2285, %vm2286
  %v2288 = vsel %vm2287, %v2279, %v2284
  %v2289 = vrsqrt.pop %v2149
  %v2290 = vmul.f32 %v2289, %v2149
  %v2291 = vmul.f32 %v2290, %v2289
  %v2292 = vmul.f32 0.5, %v2291
  %v2293 = vsub.f32 1.5, %v2292
  %v2294 = vmul.f32 %v2289, %v2293
  %vm2295 = vweird.f32 %v2149
  %vm2296 = vweird.f32 %v2289
  %vm2297 = vmor %vm2295, %vm2296
  %v2298 = vsel %vm2297, %v2289, %v2294
  %v2299 = vrsqrt.pop %v2150
  %v2300 = vmul.f32 %v2299, %v2150
  %v2301 = vmul.f32 %v2300, %v2299
  %v2302 = vmul.f32 0.5, %v2301
  %v2303 = vsub.f32 1.5, %v2302
  %v2304 = vmul.f32 %v2299, %v2303
  %vm2305 = vweird.f32 %v2150
  %vm2306 = vweird.f32 %v2299
  %vm2307 = vmor %vm2305, %vm2306
  %v2308 = vsel %vm2307, %v2299, %v2304
  %v2309 = vrsqrt.pop %v2151
  %v2310 = vmul.f32 %v2309, %v2151
  %v2311 = vmul.f32 %v2310, %v2309
  %v2312 = vmul.f32 0.5, %v2311
  %v2313 = vsub.f32 1.5, %v2312
  %v2314 = vmul.f32 %v2309, %v2313
  %vm2315 = vweird.f32 %v2151
  %vm2316 = vweird.f32 %v2309
  %vm2317 = vmor %vm2315, %vm2316
  %v2318 = vsel %vm2317, %v2309, %v2314
  %v2319 = vrsqrt.pop %v2152
  %v2320 = vmul.f32 %v2319, %v2152
  %v2321 = vmul.f32 %v2320, %v2319
  %v2322 = vmul.f32 0.5, %v2321
  %v2323 = vsub.f32 1.5, %v2322
  %v2324 = vmul.f32 %v2319, %v2323
  %vm2325 = vweird.f32 %v2152
  %vm2326 = vweird.f32 %v2319
  %vm2327 = vmor %vm2325, %vm2326
  %v2328 = vsel %vm2327, %v2319, %v2324
  %v2329 = vrsqrt.pop %v2153
  %v2330 = vmul.f32 %v2329, %v2153
  %v2331 = vmul.f32 %v2330, %v2329
  %v2332 = vmul.f32 0.5, %v2331
  %v2333 = vsub.f32 1.5, %v2332
  %v2334 = vmul.f32 %v2329, %v2333
  %vm2335 = vweird.f32 %v2153
  %vm2336 = vweird.f32 %v2329
  %vm2337 = vmor %vm2335, %vm2336
  %v2338 = vsel %vm2337, %v2329, %v2334
  %v2339 = vrsqrt.pop %v2154
  %v2340 = vmul.f32 %v2339, %v2154
  %v2341 = vmul.f32 %v2340, %v2339
  %v2342 = vmul.f32 0.5, %v2341
  %v2343 = vsub.f32 1.5, %v2342
  %v2344 = vmul.f32 %v2339, %v2343
  %vm2345 = vweird.f32 %v2154
  %vm2346 = vweird.f32 %v2339
  %vm2347 = vmor %vm2345, %vm2346
  %v2348 = vsel %vm2347, %v2339, %v2344
  %v2349 = vrsqrt.pop %v2155
  %v2350 = vmul.f32 %v2349, %v2155
  %v2351 = vmul.f32 %v2350, %v2349
  %v2352 = vmul.f32 0.5, %v2351
  %v2353 = vsub.f32 1.5, %v2352
  %v2354 = vmul.f32 %v2349, %v2353
  %vm2355 = vweird.f32 %v2155
  %vm2356 = vweird.f32 %v2349
  %vm2357 = vmor %vm2355, %vm2356
  %v2358 = vsel %vm2357, %v2349, %v2354
  %v2359 = vrsqrt.pop %v2156
  %v2360 = vmul.f32 %v2359, %v2156
  %v2361 = vmul.f32 %v2360, %v2359
  %v2362 = vmul.f32 0.5, %v2361
  %v2363 = vsub.f32 1.5, %v2362
  %v2364 = vmul.f32 %v2359, %v2363
  %vm2365 = vweird.f32 %v2156
  %vm2366 = vweird.f32 %v2359
  %vm2367 = vmor %vm2365, %vm2366
  %v2368 = vsel %vm2367, %v2359, %v2364
  %v2369 = vrsqrt.pop %v2157
  %v2370 = vmul.f32 %v2369, %v2157
  %v2371 = vmul.f32 %v2370, %v2369
  %v2372 = vmul.f32 0.5, %v2371
  %v2373 = vsub.f32 1.5, %v2372
  %v2374 = vmul.f32 %v2369, %v2373
  %vm2375 = vweird.f32 %v2157
  %vm2376 = vweird.f32 %v2369
  %vm2377 = vmor %vm2375, %vm2376
  %v2378 = vsel %vm2377, %v2369, %v2374
  %v2379 = vrsqrt.pop %v2158
  %v2380 = vmul.f32 %v2379, %v2158
  %v2381 = vmul.f32 %v2380, %v2379
  %v2382 = vmul.f32 0.5, %v2381
  %v2383 = vsub.f32 1.5, %v2382
  %v2384 = vmul.f32 %v2379, %v2383
  %vm2385 = vweird.f32 %v2158
  %vm2386 = vweird.f32 %v2379
  %vm2387 = vmor %vm2385, %vm2386
  %v2388 = vsel %vm2387, %v2379, %v2384
  %v2389 = vrsqrt.pop %v2159
  %v2390 = vmul.f32 %v2389, %v2159
  %v2391 = vmul.f32 %v2390, %v2389
  %v2392 = vmul.f32 0.5, %v2391
  %v2393 = vsub.f32 1.5, %v2392
  %v2394 = vmul.f32 %v2389, %v2393
  %vm2395 = vweird.f32 %v2159
  %vm2396 = vweird.f32 %v2389
  %vm2397 = vmor %vm2395, %vm2396
  %v2398 = vsel %vm2397, %v2389, %v2394
  %v2399 = vrsqrt.pop %v2160
  %v2400 = vmul.f32 %v2399, %v2160
  %v2401 = vmul.f32 %v2400, %v2399
  %v2402 = vmul.f32 0.5, %v2401
  %v2403 = vsub.f32 1.5, %v2402
  %v2404 = vmul.f32 %v2399, %v2403
  %vm2405 = vweird.f32 %v2160
  %vm2406 = vweird.f32 %v2399
  %vm2407 = vmor %vm2405, %vm2406
  %v2408 = vsel %vm2407, %v2399, %v2404
  %v2409 = vrsqrt.pop %v2161
  %v2410 = vmul.f32 %v2409, %v2161
  %v2411 = vmul.f32 %v2410, %v2409
  %v2412 = vmul.f32 0.5, %v2411
  %v2413 = vsub.f32 1.5, %v2412
  %v2414 = vmul.f32 %v2409, %v2413
  %vm2415 = vweird.f32 %v2161
  %vm2416 = vweird.f32 %v2409
  %vm2417 = vmor %vm2415, %vm2416
  %v2418 = vsel %vm2417, %v2409, %v2414
  %v2419 = vrsqrt.pop %v2162
  %v2420 = vmul.f32 %v2419, %v2162
  %v2421 = vmul.f32 %v2420, %v2419
  %v2422 = vmul.f32 0.5, %v2421
  %v2423 = vsub.f32 1.5, %v2422
  %v2424 = vmul.f32 %v2419, %v2423
  %vm2425 = vweird.f32 %v2162
  %vm2426 = vweird.f32 %v2419
  %vm2427 = vmor %vm2425, %vm2426
  %v2428 = vsel %vm2427, %v2419, %v2424
  %v2429 = vrsqrt.pop %v2163
  %v2430 = vmul.f32 %v2429, %v2163
  %v2431 = vmul.f32 %v2430, %v2429
  %v2432 = vmul.f32 0.5, %v2431
  %v2433 = vsub.f32 1.5, %v2432
  %v2434 = vmul.f32 %v2429, %v2433
  %vm2435 = vweird.f32 %v2163
  %vm2436 = vweird.f32 %v2429
  %vm2437 = vmor %vm2435, %vm2436
  %v2438 = vsel %vm2437, %v2429, %v2434
  %v2439 = vrsqrt.pop %v2164
  %v2440 = vmul.f32 %v2439, %v2164
  %v2441 = vmul.f32 %v2440, %v2439
  %v2442 = vmul.f32 0.5, %v2441
  %v2443 = vsub.f32 1.5, %v2442
  %v2444 = vmul.f32 %v2439, %v2443
  %vm2445 = vweird.f32 %v2164
  %vm2446 = vweird.f32 %v2439
  %vm2447 = vmor %vm2445, %vm2446
  %v2448 = vsel %vm2447, %v2439, %v2444
  %v2449 = vrsqrt.pop %v2165
  %v2450 = vmul.f32 %v2449, %v2165
  %v2451 = vmul.f32 %v2450, %v2449
  %v2452 = vmul.f32 0.5, %v2451
  %v2453 = vsub.f32 1.5, %v2452
  %v2454 = vmul.f32 %v2449, %v2453
  %vm2455 = vweird.f32 %v2165
  %vm2456 = vweird.f32 %v2449
  %vm2457 = vmor %vm2455, %vm2456
  %v2458 = vsel %vm2457, %v2449, %v2454
  %v2459 = vrsqrt.pop %v2166
  %v2460 = vmul.f32 %v2459, %v2166
  %v2461 = vmul.f32 %v2460, %v2459
  %v2462 = vmul.f32 0.5, %v2461
  %v2463 = vsub.f32 1.5, %v2462
  %v2464 = vmul.f32 %v2459, %v2463
  %vm2465 = vweird.f32 %v2166
  %vm2466 = vweird.f32 %v2459
  %vm2467 = vmor %vm2465, %vm2466
  %v2468 = vsel %vm2467, %v2459, %v2464
  %v2469 = vrsqrt.pop %v2167
  %v2470 = vmul.f32 %v2469, %v2167
  %v2471 = vmul.f32 %v2470, %v2469
  %v2472 = vmul.f32 0.5, %v2471
  %v2473 = vsub.f32 1.5, %v2472
  %v2474 = vmul.f32 %v2469, %v2473
  %vm2475 = vweird.f32 %v2167
  %vm2476 = vweird.f32 %v2469
  %vm2477 = vmor %vm2475, %vm2476
  %v2478 = vsel %vm2477, %v2469, %v2474
  %v2479 = vrsqrt.pop %v2168
  %v2480 = vmul.f32 %v2479, %v2168
  %v2481 = vmul.f32 %v2480, %v2479
  %v2482 = vmul.f32 0.5, %v2481
  %v2483 = vsub.f32 1.5, %v2482
  %v2484 = vmul.f32 %v2479, %v2483
  %vm2485 = vweird.f32 %v2168
  %vm2486 = vweird.f32 %v2479
  %vm2487 = vmor %vm2485, %vm2486
  %v2488 = vsel %vm2487, %v2479, %v2484
  %v2489 = vmul.f32 %v1977, %v2178
  %v2490 = vmul.f32 %v1978, %v2188
  %v2491 = vmul.f32 %v1979, %v2198
  %v2492 = vmul.f32 %v1980, %v2208
  %v2493 = vmul.f32 %v1981, %v2218
  %v2494 = vmul.f32 %v1982, %v2228
  %v2495 = vmul.f32 %v1983, %v2238
  %v2496 = vmul.f32 %v1984, %v2248
  %v2497 = vmul.f32 %v1985, %v2258
  %v2498 = vmul.f32 %v1986, %v2268
  %v2499 = vmul.f32 %v1987, %v2278
  %v2500 = vmul.f32 %v1988, %v2288
  %v2501 = vmul.f32 %v1989, %v2298
  %v2502 = vmul.f32 %v1990, %v2308
  %v2503 = vmul.f32 %v1991, %v2318
  %v2504 = vmul.f32 %v1992, %v2328
  %v2505 = vmul.f32 %v1993, %v2338
  %v2506 = vmul.f32 %v1994, %v2348
  %v2507 = vmul.f32 %v1995, %v2358
  %v2508 = vmul.f32 %v1996, %v2368
  %v2509 = vmul.f32 %v1997, %v2378
  %v2510 = vmul.f32 %v1998, %v2388
  %v2511 = vmul.f32 %v1999, %v2398
  %v2512 = vmul.f32 %v2000, %v2408
  %v2513 = vmul.f32 %v2001, %v2418
  %v2514 = vmul.f32 %v2002, %v2428
  %v2515 = vmul.f32 %v2003, %v2438
  %v2516 = vmul.f32 %v2004, %v2448
  %v2517 = vmul.f32 %v2005, %v2458
  %v2518 = vmul.f32 %v2006, %v2468
  %v2519 = vmul.f32 %v2007, %v2478
  %v2520 = vmul.f32 %v2008, %v2488
  %s2521 = scalar_lea.vmem %s1, 256
  %v2522 = vld [vmem:[%s2521] sm:$0xff]
  %v2523 = vld [vmem:[%s2521 + $0x8] sm:$0xff]
  %v2524 = vld [vmem:[%s2521 + $0x10] sm:$0xff]
  %v2525 = vld [vmem:[%s2521 + $0x18] sm:$0xff]
  %v2526 = vld [vmem:[%s2521 + $0x20] sm:$0xff]
  %v2527 = vld [vmem:[%s2521 + $0x28] sm:$0xff]
  %v2528 = vld [vmem:[%s2521 + $0x30] sm:$0xff]
  %v2529 = vld [vmem:[%s2521 + $0x38] sm:$0xff]
  %v2530 = vld [vmem:[%s2521 + $0x40] sm:$0xff]
  %v2531 = vld [vmem:[%s2521 + $0x48] sm:$0xff]
  %v2532 = vld [vmem:[%s2521 + $0x50] sm:$0xff]
  %v2533 = vld [vmem:[%s2521 + $0x58] sm:$0xff]
  %v2534 = vld [vmem:[%s2521 + $0x60] sm:$0xff]
  %v2535 = vld [vmem:[%s2521 + $0x68] sm:$0xff]
  %v2536 = vld [vmem:[%s2521 + $0x70] sm:$0xff]
  %v2537 = vld [vmem:[%s2521 + $0x78] sm:$0xff]
  %v2539 = vsel %vm83, %v2489, 0
  %v2542 = vsel %vm83, %v2490, 0
  %v2545 = vsel %vm83, %v2491, 0
  %v2548 = vsel %vm83, %v2492, 0
  %v2551 = vsel %vm83, %v2493, 0
  %v2554 = vsel %vm83, %v2494, 0
  %v2557 = vsel %vm83, %v2495, 0
  %v2560 = vsel %vm83, %v2496, 0
  %v2563 = vsel %vm83, %v2497, 0
  %v2566 = vsel %vm83, %v2498, 0
  %v2569 = vsel %vm83, %v2499, 0
  %v2572 = vsel %vm83, %v2500, 0
  %v2575 = vsel %vm83, %v2501, 0
  %v2578 = vsel %vm83, %v2502, 0
  %v2581 = vsel %vm83, %v2503, 0
  %v2584 = vsel %vm83, %v2504, 0
  %v2587 = vsel %vm83, %v2505, 0
  %v2590 = vsel %vm83, %v2506, 0
  %v2593 = vsel %vm83, %v2507, 0
  %v2596 = vsel %vm83, %v2508, 0
  %v2599 = vsel %vm83, %v2509, 0
  %v2602 = vsel %vm83, %v2510, 0
  %v2605 = vsel %vm83, %v2511, 0
  %v2608 = vsel %vm83, %v2512, 0
  %v2611 = vsel %vm83, %v2513, 0
  %v2614 = vsel %vm83, %v2514, 0
  %v2617 = vsel %vm83, %v2515, 0
  %v2620 = vsel %vm83, %v2516, 0
  %v2623 = vsel %vm83, %v2517, 0
  %v2626 = vsel %vm83, %v2518, 0
  %v2629 = vsel %vm83, %v2519, 0
  %v2632 = vsel %vm83, %v2520, 0
  %v2635 = vsel %vm83, %v2522, 0
  %v2638 = vsel %vm83, %v2523, 0
  %v2641 = vsel %vm83, %v2524, 0
  %v2644 = vsel %vm83, %v2525, 0
  %v2647 = vsel %vm83, %v2526, 0
  %v2650 = vsel %vm83, %v2527, 0
  %v2653 = vsel %vm83, %v2528, 0
  %v2656 = vsel %vm83, %v2529, 0
  %v2659 = vsel %vm83, %v2530, 0
  %v2662 = vsel %vm83, %v2531, 0
  %v2665 = vsel %vm83, %v2532, 0
  %v2668 = vsel %vm83, %v2533, 0
  %v2671 = vsel %vm83, %v2534, 0
  %v2674 = vsel %vm83, %v2535, 0
  %v2677 = vsel %vm83, %v2536, 0
  %v2680 = vsel %vm83, %v2537, 0
  %2682 = vmatpush.xpose.msra.mxu0 %v2680
  %2683 = vmatpush.xpose.msra.mxu0 %v2677
  %2684 = vmatpush.xpose.msra.mxu0 %v2674
  %2685 = vmatpush.xpose.msra.mxu0 %v2671
  %2686 = vmatpush.xpose.msra.mxu0 %v2668
  %2687 = vmatpush.xpose.msra.mxu0 %v2665
  %2688 = vmatpush.xpose.msra.mxu0 %v2662
  %2689 = vmatpush.xpose.msra.mxu0 %v2659
  %2690 = vmatpush.xpose.msra.mxu0 %v2656
  %2691 = vmatpush.xpose.msra.mxu0 %v2653
  %2692 = vmatpush.xpose.msra.mxu0 %v2650
  %2693 = vmatpush.xpose.msra.mxu0 %v2647
  %2694 = vmatpush.xpose.msra.mxu0 %v2644
  %2695 = vmatpush.xpose.msra.mxu0 %v2641
  %2696 = vmatpush.xpose.msra.mxu0 %v2638
  %2697 = vmatpush.xpose.msra.mxu0 %v2635
  %2698 = vmatmul.f32.gmra.mxu0 %v2539
  %v2699 = vpop.f32.mrf.mxu0
  %v2700 = vadd.f32 0.0, %v2699
  %2701 = vmatmul.f32.gmra.mxu0 %v2542
  %v2702 = vpop.f32.mrf.mxu0
  %v2703 = vadd.f32 0.0, %v2702
  %2704 = vmatmul.f32.gmra.mxu0 %v2545
  %v2705 = vpop.f32.mrf.mxu0
  %v2706 = vadd.f32 0.0, %v2705
  %2707 = vmatmul.f32.gmra.mxu0 %v2548
  %v2708 = vpop.f32.mrf.mxu0
  %v2709 = vadd.f32 0.0, %v2708
  %2710 = vmatmul.f32.gmra.mxu0 %v2551
  %v2711 = vpop.f32.mrf.mxu0
  %v2712 = vadd.f32 0.0, %v2711
  %2713 = vmatmul.f32.gmra.mxu0 %v2554
  %v2714 = vpop.f32.mrf.mxu0
  %v2715 = vadd.f32 0.0, %v2714
  %2716 = vmatmul.f32.gmra.mxu0 %v2557
  %v2717 = vpop.f32.mrf.mxu0
  %v2718 = vadd.f32 0.0, %v2717
  %2719 = vmatmul.f32.gmra.mxu0 %v2560
  %v2720 = vpop.f32.mrf.mxu0
  %v2721 = vadd.f32 0.0, %v2720
  %2722 = vmatmul.f32.gmra.mxu0 %v2563
  %v2723 = vpop.f32.mrf.mxu0
  %v2724 = vadd.f32 0.0, %v2723
  %2725 = vmatmul.f32.gmra.mxu0 %v2566
  %v2726 = vpop.f32.mrf.mxu0
  %v2727 = vadd.f32 0.0, %v2726
  %2728 = vmatmul.f32.gmra.mxu0 %v2569
  %v2729 = vpop.f32.mrf.mxu0
  %v2730 = vadd.f32 0.0, %v2729
  %2731 = vmatmul.f32.gmra.mxu0 %v2572
  %v2732 = vpop.f32.mrf.mxu0
  %v2733 = vadd.f32 0.0, %v2732
  %2734 = vmatmul.f32.gmra.mxu0 %v2575
  %v2735 = vpop.f32.mrf.mxu0
  %v2736 = vadd.f32 0.0, %v2735
  %2737 = vmatmul.f32.gmra.mxu0 %v2578
  %v2738 = vpop.f32.mrf.mxu0
  %v2739 = vadd.f32 0.0, %v2738
  %2740 = vmatmul.f32.gmra.mxu0 %v2581
  %v2741 = vpop.f32.mrf.mxu0
  %v2742 = vadd.f32 0.0, %v2741
  %2743 = vmatmul.f32.gmra.mxu0 %v2584
  %v2744 = vpop.f32.mrf.mxu0
  %v2745 = vadd.f32 0.0, %v2744
  %2746 = vmatmul.f32.gmra.mxu0 %v2587
  %v2747 = vpop.f32.mrf.mxu0
  %v2748 = vadd.f32 0.0, %v2747
  %2749 = vmatmul.f32.gmra.mxu0 %v2590
  %v2750 = vpop.f32.mrf.mxu0
  %v2751 = vadd.f32 0.0, %v2750
  %2752 = vmatmul.f32.gmra.mxu0 %v2593
  %v2753 = vpop.f32.mrf.mxu0
  %v2754 = vadd.f32 0.0, %v2753
  %2755 = vmatmul.f32.gmra.mxu0 %v2596
  %v2756 = vpop.f32.mrf.mxu0
  %v2757 = vadd.f32 0.0, %v2756
  %2758 = vmatmul.f32.gmra.mxu0 %v2599
  %v2759 = vpop.f32.mrf.mxu0
  %v2760 = vadd.f32 0.0, %v2759
  %2761 = vmatmul.f32.gmra.mxu0 %v2602
  %v2762 = vpop.f32.mrf.mxu0
  %v2763 = vadd.f32 0.0, %v2762
  %2764 = vmatmul.f32.gmra.mxu0 %v2605
  %v2765 = vpop.f32.mrf.mxu0
  %v2766 = vadd.f32 0.0, %v2765
  %2767 = vmatmul.f32.gmra.mxu0 %v2608
  %v2768 = vpop.f32.mrf.mxu0
  %v2769 = vadd.f32 0.0, %v2768
  %2770 = vmatmul.f32.gmra.mxu0 %v2611
  %v2771 = vpop.f32.mrf.mxu0
  %v2772 = vadd.f32 0.0, %v2771
  %2773 = vmatmul.f32.gmra.mxu0 %v2614
  %v2774 = vpop.f32.mrf.mxu0
  %v2775 = vadd.f32 0.0, %v2774
  %2776 = vmatmul.f32.gmra.mxu0 %v2617
  %v2777 = vpop.f32.mrf.mxu0
  %v2778 = vadd.f32 0.0, %v2777
  %2779 = vmatmul.f32.gmra.mxu0 %v2620
  %v2780 = vpop.f32.mrf.mxu0
  %v2781 = vadd.f32 0.0, %v2780
  %2782 = vmatmul.f32.gmra.mxu0 %v2623
  %v2783 = vpop.f32.mrf.mxu0
  %v2784 = vadd.f32 0.0, %v2783
  %2785 = vmatmul.f32.gmra.mxu0 %v2626
  %v2786 = vpop.f32.mrf.mxu0
  %v2787 = vadd.f32 0.0, %v2786
  %2788 = vmatmul.f32.gmra.mxu0 %v2629
  %v2789 = vpop.f32.mrf.mxu0
  %v2790 = vadd.f32 0.0, %v2789
  %2791 = vmatmul.f32.gmra.mxu0 %v2632
  %v2792 = vpop.f32.mrf.mxu0
  %v2793 = vadd.f32 0.0, %v2792
  %2794 = vdwg.mxu0
  %2795 = vmax.xlane.f32.xlu0 %v2700
  %v2796 = vpop.xlane.xlu0 %2795
  %2797 = vmax.xlane.f32.xlu0 %v2703
  %v2798 = vpop.xlane.xlu0 %2797
  %2799 = vmax.xlane.f32.xlu0 %v2706
  %v2800 = vpop.xlane.xlu0 %2799
  %2801 = vmax.xlane.f32.xlu0 %v2709
  %v2802 = vpop.xlane.xlu0 %2801
  %2803 = vmax.xlane.f32.xlu0 %v2712
  %v2804 = vpop.xlane.xlu0 %2803
  %2805 = vmax.xlane.f32.xlu0 %v2715
  %v2806 = vpop.xlane.xlu0 %2805
  %2807 = vmax.xlane.f32.xlu0 %v2718
  %v2808 = vpop.xlane.xlu0 %2807
  %2809 = vmax.xlane.f32.xlu0 %v2721
  %v2810 = vpop.xlane.xlu0 %2809
  %2811 = vmax.xlane.f32.xlu0 %v2724
  %v2812 = vpop.xlane.xlu0 %2811
  %2813 = vmax.xlane.f32.xlu0 %v2727
  %v2814 = vpop.xlane.xlu0 %2813
  %2815 = vmax.xlane.f32.xlu0 %v2730
  %v2816 = vpop.xlane.xlu0 %2815
  %2817 = vmax.xlane.f32.xlu0 %v2733
  %v2818 = vpop.xlane.xlu0 %2817
  %2819 = vmax.xlane.f32.xlu0 %v2736
  %v2820 = vpop.xlane.xlu0 %2819
  %2821 = vmax.xlane.f32.xlu0 %v2739
  %v2822 = vpop.xlane.xlu0 %2821
  %2823 = vmax.xlane.f32.xlu0 %v2742
  %v2824 = vpop.xlane.xlu0 %2823
  %2825 = vmax.xlane.f32.xlu0 %v2745
  %v2826 = vpop.xlane.xlu0 %2825
  %2827 = vmax.xlane.f32.xlu0 %v2748
  %v2828 = vpop.xlane.xlu0 %2827
  %2829 = vmax.xlane.f32.xlu0 %v2751
  %v2830 = vpop.xlane.xlu0 %2829
  %2831 = vmax.xlane.f32.xlu0 %v2754
  %v2832 = vpop.xlane.xlu0 %2831
  %2833 = vmax.xlane.f32.xlu0 %v2757
  %v2834 = vpop.xlane.xlu0 %2833
  %2835 = vmax.xlane.f32.xlu0 %v2760
  %v2836 = vpop.xlane.xlu0 %2835
  %2837 = vmax.xlane.f32.xlu0 %v2763
  %v2838 = vpop.xlane.xlu0 %2837
  %2839 = vmax.xlane.f32.xlu0 %v2766
  %v2840 = vpop.xlane.xlu0 %2839
  %2841 = vmax.xlane.f32.xlu0 %v2769
  %v2842 = vpop.xlane.xlu0 %2841
  %2843 = vmax.xlane.f32.xlu0 %v2772
  %v2844 = vpop.xlane.xlu0 %2843
  %2845 = vmax.xlane.f32.xlu0 %v2775
  %v2846 = vpop.xlane.xlu0 %2845
  %2847 = vmax.xlane.f32.xlu0 %v2778
  %v2848 = vpop.xlane.xlu0 %2847
  %2849 = vmax.xlane.f32.xlu0 %v2781
  %v2850 = vpop.xlane.xlu0 %2849
  %2851 = vmax.xlane.f32.xlu0 %v2784
  %v2852 = vpop.xlane.xlu0 %2851
  %2853 = vmax.xlane.f32.xlu0 %v2787
  %v2854 = vpop.xlane.xlu0 %2853
  %2855 = vmax.xlane.f32.xlu0 %v2790
  %v2856 = vpop.xlane.xlu0 %2855
  %2857 = vmax.xlane.f32.xlu0 %v2793
  %v2858 = vpop.xlane.xlu0 %2857
  %v2859 = vsub.f32 1.0, %v2796
  %v2860 = vsub.f32 1.0, %v2798
  %v2861 = vsub.f32 1.0, %v2800
  %v2862 = vsub.f32 1.0, %v2802
  %v2863 = vsub.f32 1.0, %v2804
  %v2864 = vsub.f32 1.0, %v2806
  %v2865 = vsub.f32 1.0, %v2808
  %v2866 = vsub.f32 1.0, %v2810
  %v2867 = vsub.f32 1.0, %v2812
  %v2868 = vsub.f32 1.0, %v2814
  %v2869 = vsub.f32 1.0, %v2816
  %v2870 = vsub.f32 1.0, %v2818
  %v2871 = vsub.f32 1.0, %v2820
  %v2872 = vsub.f32 1.0, %v2822
  %v2873 = vsub.f32 1.0, %v2824
  %v2874 = vsub.f32 1.0, %v2826
  %v2875 = vsub.f32 1.0, %v2828
  %v2876 = vsub.f32 1.0, %v2830
  %v2877 = vsub.f32 1.0, %v2832
  %v2878 = vsub.f32 1.0, %v2834
  %v2879 = vsub.f32 1.0, %v2836
  %v2880 = vsub.f32 1.0, %v2838
  %v2881 = vsub.f32 1.0, %v2840
  %v2882 = vsub.f32 1.0, %v2842
  %v2883 = vsub.f32 1.0, %v2844
  %v2884 = vsub.f32 1.0, %v2846
  %v2885 = vsub.f32 1.0, %v2848
  %v2886 = vsub.f32 1.0, %v2850
  %v2887 = vsub.f32 1.0, %v2852
  %v2888 = vsub.f32 1.0, %v2854
  %v2889 = vsub.f32 1.0, %v2856
  %v2890 = vsub.f32 1.0, %v2858
  %v2891 = vmul.f32 %v2859, 0.16666667
  %v2892 = vmul.f32 %v2860, 0.16666667
  %v2893 = vmul.f32 %v2861, 0.16666667
  %v2894 = vmul.f32 %v2862, 0.16666667
  %v2895 = vmul.f32 %v2863, 0.16666667
  %v2896 = vmul.f32 %v2864, 0.16666667
  %v2897 = vmul.f32 %v2865, 0.16666667
  %v2898 = vmul.f32 %v2866, 0.16666667
  %v2899 = vmul.f32 %v2867, 0.16666667
  %v2900 = vmul.f32 %v2868, 0.16666667
  %v2901 = vmul.f32 %v2869, 0.16666667
  %v2902 = vmul.f32 %v2870, 0.16666667
  %v2903 = vmul.f32 %v2871, 0.16666667
  %v2904 = vmul.f32 %v2872, 0.16666667
  %v2905 = vmul.f32 %v2873, 0.16666667
  %v2906 = vmul.f32 %v2874, 0.16666667
  %v2907 = vmul.f32 %v2875, 0.16666667
  %v2908 = vmul.f32 %v2876, 0.16666667
  %v2909 = vmul.f32 %v2877, 0.16666667
  %v2910 = vmul.f32 %v2878, 0.16666667
  %v2911 = vmul.f32 %v2879, 0.16666667
  %v2912 = vmul.f32 %v2880, 0.16666667
  %v2913 = vmul.f32 %v2881, 0.16666667
  %v2914 = vmul.f32 %v2882, 0.16666667
  %v2915 = vmul.f32 %v2883, 0.16666667
  %v2916 = vmul.f32 %v2884, 0.16666667
  %v2917 = vmul.f32 %v2885, 0.16666667
  %v2918 = vmul.f32 %v2886, 0.16666667
  %v2919 = vmul.f32 %v2887, 0.16666667
  %v2920 = vmul.f32 %v2888, 0.16666667
  %v2921 = vmul.f32 %v2889, 0.16666667
  %v2922 = vmul.f32 %v2890, 0.16666667
  %v2923 = vadd.f32 %v1944, %v2891
  %v2924 = vadd.f32 %v1945, %v2892
  %v2925 = vadd.f32 %v1946, %v2893
  %v2926 = vadd.f32 %v1947, %v2894
  %v2927 = vadd.f32 %v1948, %v2895
  %v2928 = vadd.f32 %v1949, %v2896
  %v2929 = vadd.f32 %v1950, %v2897
  %v2930 = vadd.f32 %v1951, %v2898
  %v2931 = vadd.f32 %v1952, %v2899
  %v2932 = vadd.f32 %v1953, %v2900
  %v2933 = vadd.f32 %v1954, %v2901
  %v2934 = vadd.f32 %v1955, %v2902
  %v2935 = vadd.f32 %v1956, %v2903
  %v2936 = vadd.f32 %v1957, %v2904
  %v2937 = vadd.f32 %v1958, %v2905
  %v2938 = vadd.f32 %v1959, %v2906
  %v2939 = vadd.f32 %v1960, %v2907
  %v2940 = vadd.f32 %v1961, %v2908
  %v2941 = vadd.f32 %v1962, %v2909
  %v2942 = vadd.f32 %v1963, %v2910
  %v2943 = vadd.f32 %v1964, %v2911
  %v2944 = vadd.f32 %v1965, %v2912
  %v2945 = vadd.f32 %v1966, %v2913
  %v2946 = vadd.f32 %v1967, %v2914
  %v2947 = vadd.f32 %v1968, %v2915
  %v2948 = vadd.f32 %v1969, %v2916
  %v2949 = vadd.f32 %v1970, %v2917
  %v2950 = vadd.f32 %v1971, %v2918
  %v2951 = vadd.f32 %v1972, %v2919
  %v2952 = vadd.f32 %v1973, %v2920
  %v2953 = vadd.f32 %v1974, %v2921
  %v2954 = vadd.f32 %v1975, %v2922
  %v2955 = vld [vmem:[%s2] sm:$0x3]
  %v2956 = vmul.f32 %v2955, %v2955
  %vm2957 = vcmask 1041408
  %v2958 = vsel %vm2957, %v2956, 0.0
  %2959 = vadd.xlane.f32.xlu0 %v2958
  %v2960 = vpop.xlane.xlu0 %2959
  %v2961 = vadd.f32 %v2960, 1e-12
  %v2962 = vrsqrt.pop %v2961
  %v2963 = vmul.f32 %v2962, %v2961
  %v2964 = vmul.f32 %v2963, %v2962
  %v2965 = vmul.f32 0.5, %v2964
  %v2966 = vsub.f32 1.5, %v2965
  %v2967 = vmul.f32 %v2962, %v2966
  %vm2968 = vweird.f32 %v2961
  %vm2969 = vweird.f32 %v2962
  %vm2970 = vmor %vm2968, %vm2969
  %v2971 = vsel %vm2970, %v2962, %v2967
  %v2972 = vmul.f32 %v2955, %v2971
  %v2973 = vld [vmem:[%s3] sm:$0x1]
  %v2974 = vperm.slane %v2973, 0
  %v2975 = vmul.f32 %v2972, %v2974
  %v2976 = vsel %vm2957, %v2975, 0.0
  %2977 = vadd.xlane.f32.xlu0 %v2976
  %v2978 = vpop.xlane.xlu0 %2977
  %v2979 = vmul.f32 %v2978, 100.0
  %v2980 = vxor.u32 %v2979, 2147483648
  %v2981 = vmul.f32 %v2980, 1.442695
  %v2982 = vpow.pop %v2981
  %v2983 = vadd.f32 %v2982, 1.0
  %v2984 = vrcp.pop %v2983
  %v2985 = vmul.f32 %v2983, %v2984
  %v2986 = vsub.f32 1.0, %v2985
  %v2987 = vmul.f32 %v2984, %v2986
  %v2988 = vadd.f32 %v2984, %v2987
  %vm2989 = vweird.f32 %v2983
  %vm2990 = vweird.f32 %v2984
  %vm2991 = vmor %vm2989, %vm2990
  %v2992 = vsel %vm2991, %v2984, %v2988
  %v2993 = vand.u32 2147483647, %v2983
  %vm2994 = vcmp.eq.f32.partialorder %v2993, 8.507059e+37
  %v2995 = vand.u32 %v2983, 2147483648
  %v2996 = vor.u32 1.1754944e-38, %v2995
  %v2997 = vsel %vm2994, %v2996, %v2992
  %v2998 = vmul.f32 1.0, %v2997
  %v2999 = vld [vmem:[%s3 + $0x2] sm:$0xff]
  %v3000 = vld [vmem:[%s3 + $0xa] sm:$0xff]
  %v3001 = vld [vmem:[%s3 + $0x12] sm:$0xff]
  %v3002 = vld [vmem:[%s3 + $0x1a] sm:$0xff]
  %v3003 = vld [vmem:[%s3 + $0x22] sm:$0xff]
  %v3004 = vld [vmem:[%s3 + $0x2a] sm:$0xff]
  %v3005 = vld [vmem:[%s3 + $0x32] sm:$0xff]
  %v3006 = vld [vmem:[%s3 + $0x3a] sm:$0xff]
  %v3007 = vld [vmem:[%s3 + $0x42] sm:$0xff]
  %v3008 = vld [vmem:[%s3 + $0x4a] sm:$0xff]
  %v3009 = vld [vmem:[%s3 + $0x52] sm:$0xff]
  %v3010 = vld [vmem:[%s3 + $0x5a] sm:$0xff]
  %v3011 = vld [vmem:[%s3 + $0x62] sm:$0xff]
  %v3012 = vld [vmem:[%s3 + $0x6a] sm:$0xff]
  %v3013 = vld [vmem:[%s3 + $0x72] sm:$0xff]
  %v3014 = vld [vmem:[%s3 + $0x7a] sm:$0xff]
  %v3015 = vld [vmem:[%s3 + $0x82] sm:$0xff]
  %v3016 = vld [vmem:[%s3 + $0x8a] sm:$0xff]
  %v3017 = vld [vmem:[%s3 + $0x92] sm:$0xff]
  %v3018 = vld [vmem:[%s3 + $0x9a] sm:$0xff]
  %v3019 = vld [vmem:[%s3 + $0xa2] sm:$0xff]
  %v3020 = vld [vmem:[%s3 + $0xaa] sm:$0xff]
  %v3021 = vld [vmem:[%s3 + $0xb2] sm:$0xff]
  %v3022 = vld [vmem:[%s3 + $0xba] sm:$0xff]
  %v3023 = vld [vmem:[%s3 + $0xc2] sm:$0xff]
  %v3024 = vld [vmem:[%s3 + $0xca] sm:$0xff]
  %v3025 = vld [vmem:[%s3 + $0xd2] sm:$0xff]
  %v3026 = vld [vmem:[%s3 + $0xda] sm:$0xff]
  %v3027 = vld [vmem:[%s3 + $0xe2] sm:$0xff]
  %v3028 = vld [vmem:[%s3 + $0xea] sm:$0xff]
  %v3029 = vld [vmem:[%s3 + $0xf2] sm:$0xff]
  %v3030 = vld [vmem:[%s3 + $0xfa] sm:$0xff]
  %3031 = vmatpush.msra.mxu0 %v3014
  %3032 = vmatpush.msra.mxu0 %v3013
  %3033 = vmatpush.msra.mxu0 %v3012
  %3034 = vmatpush.msra.mxu0 %v3011
  %3035 = vmatpush.msra.mxu0 %v3010
  %3036 = vmatpush.msra.mxu0 %v3009
  %3037 = vmatpush.msra.mxu0 %v3008
  %3038 = vmatpush.msra.mxu0 %v3007
  %3039 = vmatpush.msra.mxu0 %v3006
  %3040 = vmatpush.msra.mxu0 %v3005
  %3041 = vmatpush.msra.mxu0 %v3004
  %3042 = vmatpush.msra.mxu0 %v3003
  %3043 = vmatpush.msra.mxu0 %v3002
  %3044 = vmatpush.msra.mxu0 %v3001
  %3045 = vmatpush.msra.mxu0 %v3000
  %3046 = vmatpush.msra.mxu0 %v2999
  %3047 = vmatmul.f32.gmra.mxu0 %v2955
  %v3048 = vpop.f32.mrf.mxu0
  %v3049 = vadd.f32 0.0, %v3048
  %3050 = vdwg.mxu0
  %v3051 = vmax.f32 %v3049, 0.0
  %3052 = vmatpush.msra.mxu0 %v3030
  %3053 = vmatpush.msra.mxu0 %v3029
  %3054 = vmatpush.msra.mxu0 %v3028
  %3055 = vmatpush.msra.mxu0 %v3027
  %3056 = vmatpush.msra.mxu0 %v3026
  %3057 = vmatpush.msra.mxu0 %v3025
  %3058 = vmatpush.msra.mxu0 %v3024
  %3059 = vmatpush.msra.mxu0 %v3023
  %3060 = vmatpush.msra.mxu0 %v3022
  %3061 = vmatpush.msra.mxu0 %v3021
  %3062 = vmatpush.msra.mxu0 %v3020
  %3063 = vmatpush.msra.mxu0 %v3019
  %3064 = vmatpush.msra.mxu0 %v3018
  %3065 = vmatpush.msra.mxu0 %v3017
  %3066 = vmatpush.msra.mxu0 %v3016
  %3067 = vmatpush.msra.mxu0 %v3015
  %3068 = vmatmul.f32.gmra.mxu0 %v3051
  %v3069 = vpop.f32.mrf.mxu0
  %v3070 = vadd.f32 0.0, %v3069
  %3071 = vdwg.mxu0
  %v3072 = vmax.f32 %v3070, 0.0
  %v3073 = vld [vmem:[%s3 + $0x1] sm:$0x1]
  %v3074 = vperm.slane %v3073, 0
  %v3075 = vsub.f32 %v3074, %v3072
  %v3076 = vld [vmem:[%s3 + $0x102] sm:$0xff]
  %v3077 = vld [vmem:[%s3 + $0x10a] sm:$0xff]
  %v3078 = vld [vmem:[%s3 + $0x112] sm:$0xff]
  %v3079 = vld [vmem:[%s3 + $0x11a] sm:$0xff]
  %v3080 = vld [vmem:[%s3 + $0x122] sm:$0xff]
  %v3081 = vld [vmem:[%s3 + $0x12a] sm:$0xff]
  %v3082 = vld [vmem:[%s3 + $0x132] sm:$0xff]
  %v3083 = vld [vmem:[%s3 + $0x13a] sm:$0xff]
  %v3084 = vld [vmem:[%s3 + $0x142] sm:$0xff]
  %v3085 = vld [vmem:[%s3 + $0x14a] sm:$0xff]
  %v3086 = vld [vmem:[%s3 + $0x152] sm:$0xff]
  %v3087 = vld [vmem:[%s3 + $0x15a] sm:$0xff]
  %v3088 = vld [vmem:[%s3 + $0x162] sm:$0xff]
  %v3089 = vld [vmem:[%s3 + $0x16a] sm:$0xff]
  %v3090 = vld [vmem:[%s3 + $0x172] sm:$0xff]
  %v3091 = vld [vmem:[%s3 + $0x17a] sm:$0xff]
  %v3092 = vld [vmem:[%s3 + $0x182] sm:$0x1]
  %v3093 = vld [vmem:[%s3 + $0x183] sm:$0xff]
  %v3094 = vld [vmem:[%s3 + $0x18b] sm:$0xff]
  %v3095 = vld [vmem:[%s3 + $0x193] sm:$0xff]
  %v3096 = vld [vmem:[%s3 + $0x19b] sm:$0xff]
  %v3097 = vld [vmem:[%s3 + $0x1a3] sm:$0xff]
  %v3098 = vld [vmem:[%s3 + $0x1ab] sm:$0xff]
  %v3099 = vld [vmem:[%s3 + $0x1b3] sm:$0xff]
  %v3100 = vld [vmem:[%s3 + $0x1bb] sm:$0xff]
  %v3101 = vld [vmem:[%s3 + $0x1c3] sm:$0xff]
  %v3102 = vld [vmem:[%s3 + $0x1cb] sm:$0xff]
  %v3103 = vld [vmem:[%s3 + $0x1d3] sm:$0xff]
  %v3104 = vld [vmem:[%s3 + $0x1db] sm:$0xff]
  %v3105 = vld [vmem:[%s3 + $0x1e3] sm:$0xff]
  %v3106 = vld [vmem:[%s3 + $0x1eb] sm:$0xff]
  %v3107 = vld [vmem:[%s3 + $0x1f3] sm:$0xff]
  %v3108 = vld [vmem:[%s3 + $0x1fb] sm:$0xff]
  %v3109 = vld [vmem:[%s3 + $0x203] sm:$0x1]
  %v3110 = vld [vmem:[%s3 + $0x204] sm:$0xff]
  %v3111 = vld [vmem:[%s3 + $0x20c] sm:$0xff]
  %v3112 = vld [vmem:[%s3 + $0x214] sm:$0xff]
  %v3113 = vld [vmem:[%s3 + $0x21c] sm:$0xff]
  %v3114 = vld [vmem:[%s3 + $0x224] sm:$0xff]
  %v3115 = vld [vmem:[%s3 + $0x22c] sm:$0xff]
  %v3116 = vld [vmem:[%s3 + $0x234] sm:$0xff]
  %v3117 = vld [vmem:[%s3 + $0x23c] sm:$0xff]
  %v3118 = vld [vmem:[%s3 + $0x244] sm:$0xff]
  %v3119 = vld [vmem:[%s3 + $0x24c] sm:$0xff]
  %v3120 = vld [vmem:[%s3 + $0x254] sm:$0xff]
  %v3121 = vld [vmem:[%s3 + $0x25c] sm:$0xff]
  %v3122 = vld [vmem:[%s3 + $0x264] sm:$0xff]
  %v3123 = vld [vmem:[%s3 + $0x26c] sm:$0xff]
  %v3124 = vld [vmem:[%s3 + $0x274] sm:$0xff]
  %v3125 = vld [vmem:[%s3 + $0x27c] sm:$0xff]
  %v3126 = vld [vmem:[%s3 + $0x284] sm:$0x1]
  %v3127 = vperm.slane %v3092, 0
  %3128 = vmatpush.msra.mxu0 %v3091
  %3129 = vmatpush.msra.mxu0 %v3090
  %3130 = vmatpush.msra.mxu0 %v3089
  %3131 = vmatpush.msra.mxu0 %v3088
  %3132 = vmatpush.msra.mxu0 %v3087
  %3133 = vmatpush.msra.mxu0 %v3086
  %3134 = vmatpush.msra.mxu0 %v3085
  %3135 = vmatpush.msra.mxu0 %v3084
  %3136 = vmatpush.msra.mxu0 %v3083
  %3137 = vmatpush.msra.mxu0 %v3082
  %3138 = vmatpush.msra.mxu0 %v3081
  %3139 = vmatpush.msra.mxu0 %v3080
  %3140 = vmatpush.msra.mxu0 %v3079
  %3141 = vmatpush.msra.mxu0 %v3078
  %3142 = vmatpush.msra.mxu0 %v3077
  %3143 = vmatpush.msra.mxu0 %v3076
  %3144 = vmatmul.f32.gmra.mxu0 %v3075
  %v3145 = vpop.f32.mrf.mxu0
  %v3146 = vadd.f32 %v3127, %v3145
  %3147 = vdwg.mxu0
  %v3148 = vmax.f32 %v3146, 0.0
  %v3149 = vperm.slane %v3109, 0
  %3150 = vmatpush.msra.mxu0 %v3108
  %3151 = vmatpush.msra.mxu0 %v3107
  %3152 = vmatpush.msra.mxu0 %v3106
  %3153 = vmatpush.msra.mxu0 %v3105
  %3154 = vmatpush.msra.mxu0 %v3104
  %3155 = vmatpush.msra.mxu0 %v3103
  %3156 = vmatpush.msra.mxu0 %v3102
  %3157 = vmatpush.msra.mxu0 %v3101
  %3158 = vmatpush.msra.mxu0 %v3100
  %3159 = vmatpush.msra.mxu0 %v3099
  %3160 = vmatpush.msra.mxu0 %v3098
  %3161 = vmatpush.msra.mxu0 %v3097
  %3162 = vmatpush.msra.mxu0 %v3096
  %3163 = vmatpush.msra.mxu0 %v3095
  %3164 = vmatpush.msra.mxu0 %v3094
  %3165 = vmatpush.msra.mxu0 %v3093
  %3166 = vmatmul.f32.gmra.mxu0 %v3148
  %v3167 = vpop.f32.mrf.mxu0
  %v3168 = vadd.f32 %v3149, %v3167
  %3169 = vdwg.mxu0
  %v3170 = vmax.f32 %v3168, 0.0
  %v3171 = vperm.slane %v3126, 0
  %3172 = vmatpush.msra.mxu0 %v3125
  %3173 = vmatpush.msra.mxu0 %v3124
  %3174 = vmatpush.msra.mxu0 %v3123
  %3175 = vmatpush.msra.mxu0 %v3122
  %3176 = vmatpush.msra.mxu0 %v3121
  %3177 = vmatpush.msra.mxu0 %v3120
  %3178 = vmatpush.msra.mxu0 %v3119
  %3179 = vmatpush.msra.mxu0 %v3118
  %3180 = vmatpush.msra.mxu0 %v3117
  %3181 = vmatpush.msra.mxu0 %v3116
  %3182 = vmatpush.msra.mxu0 %v3115
  %3183 = vmatpush.msra.mxu0 %v3114
  %3184 = vmatpush.msra.mxu0 %v3113
  %3185 = vmatpush.msra.mxu0 %v3112
  %3186 = vmatpush.msra.mxu0 %v3111
  %3187 = vmatpush.msra.mxu0 %v3110
  %3188 = vmatmul.f32.gmra.mxu0 %v3170
  %v3189 = vpop.f32.mrf.mxu0
  %v3190 = vadd.f32 %v3171, %v3189
  %3191 = vdwg.mxu0
  %v3192 = vxor.u32 %v3190, 2147483648
  %v3193 = vmul.f32 %v3192, 1.442695
  %v3194 = vpow.pop %v3193
  %v3195 = vadd.f32 %v3194, 1.0
  %v3196 = vrcp.pop %v3195
  %v3197 = vmul.f32 %v3195, %v3196
  %v3198 = vsub.f32 1.0, %v3197
  %v3199 = vmul.f32 %v3196, %v3198
  %v3200 = vadd.f32 %v3196, %v3199
  %vm3201 = vweird.f32 %v3195
  %vm3202 = vweird.f32 %v3196
  %vm3203 = vmor %vm3201, %vm3202
  %v3204 = vsel %vm3203, %v3196, %v3200
  %v3205 = vand.u32 2147483647, %v3195
  %vm3206 = vcmp.eq.f32.partialorder %v3205, 8.507059e+37
  %v3207 = vand.u32 %v3195, 2147483648
  %v3208 = vor.u32 1.1754944e-38, %v3207
  %v3209 = vsel %vm3206, %v3208, %v3204
  %v3210 = vmul.f32 1.0, %v3209
  %v3211 = vadd.f32 %v2998, %v3210
  %3213 = vset.pattern.permute.xlu0 0
  %3214 = vperm.xlu0 %3213, %v3211
  %v3215 = vpop.permute.xlu0 %3214
  %v3249 = vlaneseq
  %v3250 = vand.u32 %v3249, 127
  %v3251 = vperm.slane %v2923, %v3250
  %v3252 = vadd.s32 %v3250, 4294967288
  %v3253 = vperm.slane %v2924, %v3252
  %vm3254 = vcmask 130112
  %v3255 = vsel %vm3254, %v3253, %v3251
  %v3256 = vadd.s32 %v3250, 4294967280
  %v3257 = vperm.slane %v2925, %v3256
  %vm3258 = vcmask 195712
  %v3259 = vsel %vm3258, %v3257, %v3255
  %v3260 = vadd.s32 %v3250, 4294967272
  %v3261 = vperm.slane %v2926, %v3260
  %vm3262 = vcmask 261312
  %v3263 = vsel %vm3262, %v3261, %v3259
  %v3264 = vadd.s32 %v3250, 4294967264
  %v3265 = vperm.slane %v2927, %v3264
  %vm3266 = vcmask 326912
  %v3267 = vsel %vm3266, %v3265, %v3263
  %v3268 = vadd.s32 %v3250, 4294967256
  %v3269 = vperm.slane %v2928, %v3268
  %vm3270 = vcmask 392512
  %v3271 = vsel %vm3270, %v3269, %v3267
  %v3272 = vadd.s32 %v3250, 4294967248
  %v3273 = vperm.slane %v2929, %v3272
  %vm3274 = vcmask 458112
  %v3275 = vsel %vm3274, %v3273, %v3271
  %v3276 = vadd.s32 %v3250, 4294967240
  %v3277 = vperm.slane %v2930, %v3276
  %vm3278 = vcmask 523712
  %v3279 = vsel %vm3278, %v3277, %v3275
  %v3280 = vadd.s32 %v3250, 4294967232
  %v3281 = vperm.slane %v2931, %v3280
  %vm3282 = vcmask 589312
  %v3283 = vsel %vm3282, %v3281, %v3279
  %v3284 = vadd.s32 %v3250, 4294967224
  %v3285 = vperm.slane %v2932, %v3284
  %vm3286 = vcmask 654912
  %v3287 = vsel %vm3286, %v3285, %v3283
  %v3288 = vadd.s32 %v3250, 4294967216
  %v3289 = vperm.slane %v2933, %v3288
  %vm3290 = vcmask 720512
  %v3291 = vsel %vm3290, %v3289, %v3287
  %v3292 = vadd.s32 %v3250, 4294967208
  %v3293 = vperm.slane %v2934, %v3292
  %vm3294 = vcmask 786112
  %v3295 = vsel %vm3294, %v3293, %v3291
  %v3296 = vadd.s32 %v3250, 4294967200
  %v3297 = vperm.slane %v2935, %v3296
  %vm3298 = vcmask 851712
  %v3299 = vsel %vm3298, %v3297, %v3295
  %v3300 = vadd.s32 %v3250, 4294967192
  %v3301 = vperm.slane %v2936, %v3300
  %vm3302 = vcmask 917312
  %v3303 = vsel %vm3302, %v3301, %v3299
  %v3304 = vadd.s32 %v3250, 4294967184
  %v3305 = vperm.slane %v2937, %v3304
  %vm3306 = vcmask 982912
  %v3307 = vsel %vm3306, %v3305, %v3303
  %v3308 = vadd.s32 %v3250, 4294967176
  %v3309 = vperm.slane %v2938, %v3308
  %vm3310 = vcmask 1048512
  %v3311 = vsel %vm3310, %v3309, %v3307
  %v3312 = vperm.slane %v2939, %v3250
  %v3313 = vperm.slane %v2940, %v3252
  %v3314 = vsel %vm3254, %v3313, %v3312
  %v3315 = vperm.slane %v2941, %v3256
  %v3316 = vsel %vm3258, %v3315, %v3314
  %v3317 = vperm.slane %v2942, %v3260
  %v3318 = vsel %vm3262, %v3317, %v3316
  %v3319 = vperm.slane %v2943, %v3264
  %v3320 = vsel %vm3266, %v3319, %v3318
  %v3321 = vperm.slane %v2944, %v3268
  %v3322 = vsel %vm3270, %v3321, %v3320
  %v3323 = vperm.slane %v2945, %v3272
  %v3324 = vsel %vm3274, %v3323, %v3322
  %v3325 = vperm.slane %v2946, %v3276
  %v3326 = vsel %vm3278, %v3325, %v3324
  %v3327 = vperm.slane %v2947, %v3280
  %v3328 = vsel %vm3282, %v3327, %v3326
  %v3329 = vperm.slane %v2948, %v3284
  %v3330 = vsel %vm3286, %v3329, %v3328
  %v3331 = vperm.slane %v2949, %v3288
  %v3332 = vsel %vm3290, %v3331, %v3330
  %v3333 = vperm.slane %v2950, %v3292
  %v3334 = vsel %vm3294, %v3333, %v3332
  %v3335 = vperm.slane %v2951, %v3296
  %v3336 = vsel %vm3298, %v3335, %v3334
  %v3337 = vperm.slane %v2952, %v3300
  %v3338 = vsel %vm3302, %v3337, %v3336
  %v3339 = vperm.slane %v2953, %v3304
  %v3340 = vsel %vm3306, %v3339, %v3338
  %v3341 = vperm.slane %v2954, %v3308
  %v3342 = vsel %vm3310, %v3341, %v3340
  %vm3343 = vcmask 1041409
  %v3344 = vsel %vm3343, %v3342, %v3311
  %v3346 = vadd.f32 %v3215, %v3344
  %3347 = vst [vmem:[%s5] sm:$0x3] %v3346
  %v3348 = vld [vmem:[%s3 + $0x285] sm:$0xff]
  %v3349 = vld [vmem:[%s3 + $0x28d] sm:$0xff]
  %v3350 = vld [vmem:[%s3 + $0x295] sm:$0xff]
  %v3351 = vld [vmem:[%s3 + $0x29d] sm:$0xff]
  %v3352 = vld [vmem:[%s3 + $0x2a5] sm:$0xff]
  %v3353 = vld [vmem:[%s3 + $0x2ad] sm:$0xff]
  %v3354 = vld [vmem:[%s3 + $0x2b5] sm:$0xff]
  %v3355 = vld [vmem:[%s3 + $0x2bd] sm:$0xff]
  %v3356 = vld [vmem:[%s3 + $0x2c5] sm:$0xff]
  %v3357 = vld [vmem:[%s3 + $0x2cd] sm:$0xff]
  %v3358 = vld [vmem:[%s3 + $0x2d5] sm:$0xff]
  %v3359 = vld [vmem:[%s3 + $0x2dd] sm:$0xff]
  %v3360 = vld [vmem:[%s3 + $0x2e5] sm:$0xff]
  %v3361 = vld [vmem:[%s3 + $0x2ed] sm:$0xff]
  %v3362 = vld [vmem:[%s3 + $0x2f5] sm:$0xff]
  %v3363 = vld [vmem:[%s3 + $0x2fd] sm:$0xff]
  %v3364 = vld [vmem:[%s3 + $0x305] sm:$0x1]
  %v3365 = vld [vmem:[%s3 + $0x306] sm:$0xff]
  %v3366 = vld [vmem:[%s3 + $0x30e] sm:$0xff]
  %v3367 = vld [vmem:[%s3 + $0x316] sm:$0xff]
  %v3368 = vld [vmem:[%s3 + $0x31e] sm:$0xff]
  %v3369 = vld [vmem:[%s3 + $0x326] sm:$0xff]
  %v3370 = vld [vmem:[%s3 + $0x32e] sm:$0xff]
  %v3371 = vld [vmem:[%s3 + $0x336] sm:$0xff]
  %v3372 = vld [vmem:[%s3 + $0x33e] sm:$0xff]
  %v3373 = vld [vmem:[%s3 + $0x346] sm:$0xff]
  %v3374 = vld [vmem:[%s3 + $0x34e] sm:$0xff]
  %v3375 = vld [vmem:[%s3 + $0x356] sm:$0xff]
  %v3376 = vld [vmem:[%s3 + $0x35e] sm:$0xff]
  %v3377 = vld [vmem:[%s3 + $0x366] sm:$0xff]
  %v3378 = vld [vmem:[%s3 + $0x36e] sm:$0xff]
  %v3379 = vld [vmem:[%s3 + $0x376] sm:$0xff]
  %v3380 = vld [vmem:[%s3 + $0x37e] sm:$0xff]
  %v3381 = vld [vmem:[%s3 + $0x386] sm:$0x1]
  %v3382 = vld [vmem:[%s3 + $0x387] sm:$0xff]
  %v3383 = vld [vmem:[%s3 + $0x38f] sm:$0xff]
  %v3384 = vld [vmem:[%s3 + $0x397] sm:$0xff]
  %v3385 = vld [vmem:[%s3 + $0x39f] sm:$0xff]
  %v3386 = vld [vmem:[%s3 + $0x3a7] sm:$0xff]
  %v3387 = vld [vmem:[%s3 + $0x3af] sm:$0xff]
  %v3388 = vld [vmem:[%s3 + $0x3b7] sm:$0xff]
  %v3389 = vld [vmem:[%s3 + $0x3bf] sm:$0xff]
  %v3390 = vld [vmem:[%s3 + $0x3c7] sm:$0xff]
  %v3391 = vld [vmem:[%s3 + $0x3cf] sm:$0xff]
  %v3392 = vld [vmem:[%s3 + $0x3d7] sm:$0xff]
  %v3393 = vld [vmem:[%s3 + $0x3df] sm:$0xff]
  %v3394 = vld [vmem:[%s3 + $0x3e7] sm:$0xff]
  %v3395 = vld [vmem:[%s3 + $0x3ef] sm:$0xff]
  %v3396 = vld [vmem:[%s3 + $0x3f7] sm:$0xff]
  %v3397 = vld [vmem:[%s3 + $0x3ff] sm:$0xff]
  %v3398 = vld [vmem:[%s3 + $0x407] sm:$0x1]
  %v3399 = vperm.slane %v3364, 0
  %3400 = vmatpush.msra.mxu0 %v3363
  %3401 = vmatpush.msra.mxu0 %v3362
  %3402 = vmatpush.msra.mxu0 %v3361
  %3403 = vmatpush.msra.mxu0 %v3360
  %3404 = vmatpush.msra.mxu0 %v3359
  %3405 = vmatpush.msra.mxu0 %v3358
  %3406 = vmatpush.msra.mxu0 %v3357
  %3407 = vmatpush.msra.mxu0 %v3356
  %3408 = vmatpush.msra.mxu0 %v3355
  %3409 = vmatpush.msra.mxu0 %v3354
  %3410 = vmatpush.msra.mxu0 %v3353
  %3411 = vmatpush.msra.mxu0 %v3352
  %3412 = vmatpush.msra.mxu0 %v3351
  %3413 = vmatpush.msra.mxu0 %v3350
  %3414 = vmatpush.msra.mxu0 %v3349
  %3415 = vmatpush.msra.mxu0 %v3348
  %3416 = vmatmul.f32.gmra.mxu0 %v3346
  %v3417 = vpop.f32.mrf.mxu0
  %v3418 = vadd.f32 %v3399, %v3417
  %3419 = vdwg.mxu0
  %v3420 = vmax.f32 %v3418, 0.0
  %v3421 = vperm.slane %v3381, 0
  %3422 = vmatpush.msra.mxu0 %v3380
  %3423 = vmatpush.msra.mxu0 %v3379
  %3424 = vmatpush.msra.mxu0 %v3378
  %3425 = vmatpush.msra.mxu0 %v3377
  %3426 = vmatpush.msra.mxu0 %v3376
  %3427 = vmatpush.msra.mxu0 %v3375
  %3428 = vmatpush.msra.mxu0 %v3374
  %3429 = vmatpush.msra.mxu0 %v3373
  %3430 = vmatpush.msra.mxu0 %v3372
  %3431 = vmatpush.msra.mxu0 %v3371
  %3432 = vmatpush.msra.mxu0 %v3370
  %3433 = vmatpush.msra.mxu0 %v3369
  %3434 = vmatpush.msra.mxu0 %v3368
  %3435 = vmatpush.msra.mxu0 %v3367
  %3436 = vmatpush.msra.mxu0 %v3366
  %3437 = vmatpush.msra.mxu0 %v3365
  %3438 = vmatmul.f32.gmra.mxu0 %v3420
  %v3439 = vpop.f32.mrf.mxu0
  %v3440 = vadd.f32 %v3421, %v3439
  %3441 = vdwg.mxu0
  %v3442 = vmax.f32 %v3440, 0.0
  %v3443 = vperm.slane %v3398, 0
  %3444 = vmatpush.msra.mxu0 %v3397
  %3445 = vmatpush.msra.mxu0 %v3396
  %3446 = vmatpush.msra.mxu0 %v3395
  %3447 = vmatpush.msra.mxu0 %v3394
  %3448 = vmatpush.msra.mxu0 %v3393
  %3449 = vmatpush.msra.mxu0 %v3392
  %3450 = vmatpush.msra.mxu0 %v3391
  %3451 = vmatpush.msra.mxu0 %v3390
  %3452 = vmatpush.msra.mxu0 %v3389
  %3453 = vmatpush.msra.mxu0 %v3388
  %3454 = vmatpush.msra.mxu0 %v3387
  %3455 = vmatpush.msra.mxu0 %v3386
  %3456 = vmatpush.msra.mxu0 %v3385
  %3457 = vmatpush.msra.mxu0 %v3384
  %3458 = vmatpush.msra.mxu0 %v3383
  %3459 = vmatpush.msra.mxu0 %v3382
  %3460 = vmatmul.f32.gmra.mxu0 %v3442
  %v3461 = vpop.f32.mrf.mxu0
  %v3462 = vadd.f32 %v3443, %v3461
  %3463 = vdwg.mxu0
  %v3464 = vxor.u32 %v3462, 2147483648
  %v3465 = vmul.f32 %v3464, 1.442695
  %v3466 = vpow.pop %v3465
  %v3467 = vadd.f32 %v3466, 1.0
  %v3468 = vrcp.pop %v3467
  %v3469 = vmul.f32 %v3467, %v3468
  %v3470 = vsub.f32 1.0, %v3469
  %v3471 = vmul.f32 %v3468, %v3470
  %v3472 = vadd.f32 %v3468, %v3471
  %vm3473 = vweird.f32 %v3467
  %vm3474 = vweird.f32 %v3468
  %vm3475 = vmor %vm3473, %vm3474
  %v3476 = vsel %vm3475, %v3468, %v3472
  %v3477 = vand.u32 2147483647, %v3467
  %vm3478 = vcmp.eq.f32.partialorder %v3477, 8.507059e+37
  %v3479 = vand.u32 %v3467, 2147483648
  %v3480 = vor.u32 1.1754944e-38, %v3479
  %v3481 = vsel %vm3478, %v3480, %v3476
  %v3482 = vmul.f32 1.0, %v3481
  %vm3483 = vcmp.lt.s32.totalorder %v3250, 9
  %v3484 = vsel %vm3483, %v3344, -1e+30
  %v3485 = vsel %vm2957, %v3484, -inf
  %3486 = vmax.xlane.f32.xlu0 %v3485
  %v3487 = vpop.xlane.xlu0 %3486
  %v3488 = vadd.f32 %v3482, %v3487
  %v3489 = vmul.f32 %v3488, 0.5
  %3491 = vset.pattern.permute.xlu0 0
  %3492 = vperm.xlu0 %3491, %v3489
  %v3493 = vpop.permute.xlu0 %3492
  %3495 = vst [vmem:[%s4] sm:$0x3] %v3493
  // Predicated region
  $region18: #{inctrl_forward.1} parent=0 // pred_check
    _
  $region19: #{inctrl_forward.1} parent=0 // pred_check_branch
    %3497 = sbr.rel (0) target = $region21
  $region20: #{inctrl_forward.1} parent=0 // pred_region
    _
  $region21: #{inctrl_forward.1} parent=0 // pred_fallthru
    _
  // Predicated region
  $region22: #{inctrl_forward.1} parent=0 // pred_check
    _
  $region23: #{inctrl_forward.1} parent=0 // pred_check_branch
    %3499 = sbr.rel (0) target = $region25
  $region24: #{inctrl_forward.1} parent=0 // pred_region
    _
  $region25: #{inctrl_forward.1} parent=0 // pred_fallthru
    _
  // Predicated region
  $region26: #{inctrl_forward.1} parent=0 // pred_check
    _
  $region27: #{inctrl_forward.1} parent=0 // pred_check_branch
    %3501 = sbr.rel (0) target = $region29
  $region28: #{inctrl_forward.1} parent=0 // pred_region
    _
  $region29: #{inctrl_forward.1} parent=0 // pred_fallthru
    _
  // Predicated region
  $region30: #{inctrl_forward.1} parent=0 // pred_check
    _
  $region31: #{inctrl_forward.1} parent=0 // pred_check_branch
    %3503 = sbr.rel (0) target = $region33
  $region32: #{inctrl_forward.1} parent=0 // pred_region
    _
  $region33: #{inctrl_forward.1} parent=0 // pred_fallthru
    _

</llo_original>
